<compile_context>
chip_gen: v7x
topology: tpu7x:2x2x1
jax: 0.10.0
libtpu: 0.0.40
codegen_flags: <defaults>
</compile_context>

<pallas_src>
import math

import jax
import jax.numpy as jnp
from jax.experimental import pallas as pl
from jax.experimental.pallas import tpu as pltpu  # noqa: F401  (TPU backend)

# ----------------------------- config ---------------------------------------
BATCH = 2          # must be even for the SimCSE y_true pairing
SEQ = 8
HIDDEN = 32
N_HEADS = 2
HEAD_DIM = HIDDEN // N_HEADS
INTERMEDIATE = 64
N_LAYERS = 2
VOCAB = 100
MAX_POS = 16
TYPE_VOCAB = 2
NUM_CLASSES = 2
LN_EPS = 1e-12
TAO = 0.05
ALPHA = 0.5

BS = BATCH * SEQ            # stacked token rows
NHBS = N_HEADS * BS         # head-stacked rows for attention

# ---- row layout of the packed f32 parameter buffer (PACK_ROWS, HIDDEN) ------
WORD_OFF = 0                               # word embedding rows   [0, 100)
POS_OFF = WORD_OFF + VOCAB                 # position rows         [100, 108)
TYPE_OFF = POS_OFF + SEQ                   # token-type rows       [108, 110)
EMB_G_ROW = TYPE_OFF + TYPE_VOCAB          # embedding LN gamma    110
EMB_B_ROW = EMB_G_ROW + 1                  # embedding LN beta     111
VEC_BASE = EMB_B_ROW + 1                   # per-layer vectors at  112 + 8*l
VEC_PER_LAYER = 8
R_BO, R_LN1G, R_LN1B, R_B1LO, R_B1HI, R_B2, R_LN2G, R_LN2B = range(VEC_PER_LAYER)
POOL_B_ROW = VEC_BASE + N_LAYERS * VEC_PER_LAYER   # pooler bias
FC_B_ROW = POOL_B_ROW + 1                          # classifier bias (lane-padded)
PACK_ROWS = FC_B_ROW + 1


# ----------------------------- fused Pallas kernel --------------------------
def _fused_model_kernel(ids_ref, mask_ref, f32p_ref, bqkv_ref, wqkv_ref, wo_ref,
                        w1_ref, w2_ref, headw_ref, logits_ref, loss_ref):
    scale = 1.0 / math.sqrt(HEAD_DIM)

    f32p = f32p_ref[...]                                 # (PACK_ROWS, H) f32

    def vrow(r):                                         # one packed (1, H) row
        return f32p[r:r + 1, :]

    def lrow(l, k):
        return VEC_BASE + l * VEC_PER_LAYER + k

    def layer_norm(x, g, b):
        mu = jnp.mean(x, axis=-1, keepdims=True)
        xc = x - mu
        var = jnp.mean(xc * xc, axis=-1, keepdims=True)
        return xc * jax.lax.rsqrt(var + LN_EPS) * g + b

    def gelu(x):                                         # tanh-approx GELU
        return 0.5 * x * (1.0 + jnp.tanh(0.7978845608028654 *
                                         (x + 0.044715 * x * x * x)))

    ids = ids_ref[...]                                   # (BS, 3) int32
    word_id = ids[:, 0:1]
    type_id = ids[:, 1:2]
    label_id = ids[:, 2:3]

    # --- embeddings: word/pos/type gathers + add as ONE selection matmul -----
    col = jax.lax.broadcasted_iota(jnp.int32, (BS, PACK_ROWS), 1)
    row = jax.lax.broadcasted_iota(jnp.int32, (BS, PACK_ROWS), 0)
    sel = ((col == WORD_OFF + word_id) |
           (col == POS_OFF + row % SEQ) |
           (col == TYPE_OFF + type_id)).astype(jnp.float32)       # (BS, PACK_ROWS)
    x = jnp.dot(sel, f32p, preferred_element_type=jnp.float32)    # (BS, H)
    x = layer_norm(x, vrow(EMB_G_ROW), vrow(EMB_B_ROW))

    add_mask = mask_ref[...]                             # (NHBS, NHBS) additive

    for l in range(N_LAYERS):
        xb = x.astype(jnp.bfloat16)

        # Q/K/V stacks with heads on the sublane axis: (NHBS, HEAD_DIM)
        def proj_stack(which):
            blocks = [jnp.dot(xb, wqkv_ref[(l * 3 + which) * N_HEADS + h],
                              preferred_element_type=jnp.float32)
                      for h in range(N_HEADS)]
            return jnp.concatenate(blocks, axis=0) + bqkv_ref[l * 3 + which]

        q_stack = proj_stack(0)
        k_stack = proj_stack(1)
        v_stack = proj_stack(2)

        # single score matrix; per-(head,batch) blocks enforced by add_mask
        scores = jnp.einsum('qd,kd->qk',
                            q_stack.astype(jnp.bfloat16),
                            k_stack.astype(jnp.bfloat16),
                            preferred_element_type=jnp.float32) * scale + add_mask
        scores = scores - jnp.max(scores, axis=-1, keepdims=True)
        p = jnp.exp(scores)
        p = p / jnp.sum(p, axis=-1, keepdims=True)
        ctx_stack = jnp.dot(p.astype(jnp.bfloat16),
                            v_stack.astype(jnp.bfloat16),
                            preferred_element_type=jnp.float32)   # (NHBS, d)

        # output projection: sum over per-head sublane slices (free at 8-mult.)
        attn_out = None
        for h in range(N_HEADS):
            part = jnp.dot(ctx_stack[h * BS:(h + 1) * BS, :].astype(jnp.bfloat16),
                           wo_ref[l * N_HEADS + h],
                           preferred_element_type=jnp.float32)    # (BS, H)
            attn_out = part if attn_out is None else attn_out + part
        attn_out = attn_out + vrow(lrow(l, R_BO))
        x = layer_norm(x + attn_out, vrow(lrow(l, R_LN1G)), vrow(lrow(l, R_LN1B)))

        # FFN (dropout = identity in eval)
        b1 = jnp.concatenate([vrow(lrow(l, R_B1LO)), vrow(lrow(l, R_B1HI))],
                             axis=1)                               # (1, I)
        hid = jnp.dot(x.astype(jnp.bfloat16), w1_ref[l],
                      preferred_element_type=jnp.float32) + b1     # (BS, I)
        hid = gelu(hid)
        ffn = jnp.dot(hid.astype(jnp.bfloat16), w2_ref[l],
                      preferred_element_type=jnp.float32) + vrow(lrow(l, R_B2))
        x = layer_norm(x + ffn, vrow(lrow(l, R_LN2G)), vrow(lrow(l, R_LN2B)))

    # --- CLS rows (token 0 of every sequence) via a selection matmul ----------
    rsel = jax.lax.broadcasted_iota(jnp.int32, (BATCH, BS), 0)
    csel = jax.lax.broadcasted_iota(jnp.int32, (BATCH, BS), 1)
    sel_cls = (csel == rsel * SEQ).astype(jnp.float32)             # (B, BS)
    cls_tok = jnp.dot(sel_cls, x, preferred_element_type=jnp.float32)  # (B, H)

    # --- pooler (dense + tanh) then classifier; dropout(0.1) = identity -------
    pool_w = headw_ref[0:HIDDEN, :]                                # (H, H) bf16
    fc_w_pad = headw_ref[HIDDEN:2 * HIDDEN, :]                     # (H, H) bf16
    cls_out = jnp.tanh(jnp.dot(cls_tok.astype(jnp.bfloat16), pool_w,
                               preferred_element_type=jnp.float32)
                       + vrow(POOL_B_ROW))
    logits_pad = (jnp.dot(cls_out.astype(jnp.bfloat16), fc_w_pad,
                          preferred_element_type=jnp.float32)
                  + vrow(FC_B_ROW))                                # (B, H)
    logits = logits_pad[:, :NUM_CLASSES]                           # (B, C)
    logits_ref[...] = logits

    # --- SimCSE contrastive loss on the raw CLS token (all f32) ---------------
    inv_norm = jax.lax.rsqrt(jnp.sum(cls_tok * cls_tok, axis=-1, keepdims=True)
                             + 1e-16)
    yn = cls_tok * inv_norm
    sim = jnp.einsum('id,jd->ij', yn, yn,
                     preferred_element_type=jnp.float32)           # (B, B)
    ri = jax.lax.broadcasted_iota(jnp.int32, (BATCH, BATCH), 0)
    ci = jax.lax.broadcasted_iota(jnp.int32, (BATCH, BATCH), 1)
    sim = jnp.where(ri == ci, sim - 1e12, sim) / TAO
    y_true = (ci == ri + 1 - 2 * (ri % 2)).astype(jnp.float32)     # SimCSE pairing
    m = jnp.max(sim, axis=-1, keepdims=True)
    lse = jnp.log(jnp.sum(jnp.exp(sim - m), axis=-1, keepdims=True)) + m
    con_rows = -jnp.sum(y_true * (sim - lse), axis=-1, keepdims=True)   # (B, 1)

    # --- classification NLL (labels one-hot built in-kernel) ------------------
    lab_cols = jax.lax.broadcasted_iota(jnp.int32, (BS, NUM_CLASSES), 1)
    lab_oh_tok = (lab_cols == label_id).astype(jnp.float32)        # (BS, C)
    labels_oh = jnp.dot(sel_cls, lab_oh_tok,
                        preferred_element_type=jnp.float32)        # (B, C)
    mz = jnp.max(logits, axis=-1, keepdims=True)
    lsez = jnp.log(jnp.sum(jnp.exp(logits - mz), axis=-1, keepdims=True)) + mz
    nll_rows = -jnp.sum(labels_oh * (logits - lsez), axis=-1, keepdims=True)

    loss = (jnp.sum(nll_rows, axis=0, keepdims=True)
            + ALPHA * jnp.sum(con_rows, axis=0, keepdims=True)) * (1.0 / BATCH)
    loss_ref[...] = loss                                           # (1, 1)


# ----------------------------- parameters (packed, kernel-ready) -------------
def init_params(key):
    def nrm(k, shape, scale=0.02):
        return scale * jax.random.normal(k, shape, dtype=jnp.float32)

    ks = iter(jax.random.split(key, 12))
    word_emb = nrm(next(ks), (VOCAB, HIDDEN))
    pos_emb = nrm(next(ks), (MAX_POS, HIDDEN))
    type_emb = nrm(next(ks), (TYPE_VOCAB, HIDDEN))
    emb_ln_g = jnp.ones((1, HIDDEN), jnp.float32)
    emb_ln_b = jnp.zeros((1, HIDDEN), jnp.float32)

    w_qkv_raw = nrm(next(ks), (N_LAYERS, 3, HIDDEN, HIDDEN))
    b_qkv_raw = jnp.zeros((N_LAYERS, 3, HIDDEN), jnp.float32)
    w_o_raw = nrm(next(ks), (N_LAYERS, HIDDEN, HIDDEN))
    b_o = jnp.zeros((N_LAYERS, 1, HIDDEN), jnp.float32)
    ln1_g = jnp.ones((N_LAYERS, 1, HIDDEN), jnp.float32)
    ln1_b = jnp.zeros((N_LAYERS, 1, HIDDEN), jnp.float32)
    w1 = nrm(next(ks), (N_LAYERS, HIDDEN, INTERMEDIATE))
    b1 = jnp.zeros((N_LAYERS, 1, INTERMEDIATE), jnp.float32)
    w2 = nrm(next(ks), (N_LAYERS, INTERMEDIATE, HIDDEN))
    b2 = jnp.zeros((N_LAYERS, 1, HIDDEN), jnp.float32)
    ln2_g = jnp.ones((N_LAYERS, 1, HIDDEN), jnp.float32)
    ln2_b = jnp.zeros((N_LAYERS, 1, HIDDEN), jnp.float32)
    pool_w = nrm(next(ks), (HIDDEN, HIDDEN))
    pool_b = jnp.zeros((1, HIDDEN), jnp.float32)
    fc_w = nrm(next(ks), (HIDDEN, NUM_CLASSES))
    fc_b = jnp.zeros((1, NUM_CLASSES), jnp.float32)

    assert INTERMEDIATE == 2 * HIDDEN  # b1 is stored as two H-wide rows

    # one f32 buffer: embedding tables + every bias / LN vector
    vec_rows = []
    for l in range(N_LAYERS):
        vec_rows += [b_o[l], ln1_g[l], ln1_b[l],
                     b1[l][:, :HIDDEN], b1[l][:, HIDDEN:],
                     b2[l], ln2_g[l], ln2_b[l]]
    vec_rows += [pool_b, jnp.pad(fc_b, ((0, 0), (0, HIDDEN - NUM_CLASSES)))]
    f32_pack = jnp.concatenate(
        [word_emb, pos_emb[:SEQ], type_emb, emb_ln_g, emb_ln_b] + vec_rows, axis=0)
    assert f32_pack.shape == (PACK_ROWS, HIDDEN)

    # per-head bf16 weight layouts (heads resolved on the sublane axis in-kernel)
    w_qkv = (w_qkv_raw.reshape(N_LAYERS, 3, HIDDEN, N_HEADS, HEAD_DIM)
             .transpose(0, 1, 3, 2, 4)
             .reshape(N_LAYERS * 3 * N_HEADS, HIDDEN, HEAD_DIM)
             .astype(jnp.bfloat16))
    b_qkv_stack = jnp.broadcast_to(
        b_qkv_raw.reshape(N_LAYERS, 3, N_HEADS, 1, HEAD_DIM),
        (N_LAYERS, 3, N_HEADS, BS, HEAD_DIM)
    ).reshape(N_LAYERS * 3, N_HEADS * BS, HEAD_DIM).astype(jnp.float32)
    w_o = (w_o_raw.reshape(N_LAYERS, N_HEADS, HEAD_DIM, HIDDEN)
           .reshape(N_LAYERS * N_HEADS, HEAD_DIM, HIDDEN).astype(jnp.bfloat16))
    head_w = jnp.concatenate(
        [pool_w, jnp.pad(fc_w, ((0, 0), (0, HIDDEN - NUM_CLASSES)))],
        axis=0).astype(jnp.bfloat16)

    return {
        "f32_pack": f32_pack,                      # (130, H)  f32
        "b_qkv_stack": b_qkv_stack,                # (L*3, nH*B*S, d) f32
        "w_qkv": w_qkv,                            # (L*3*nH, H, d)   bf16
        "w_o": w_o,                                # (L*nH, d, H)     bf16
        "w_ffn1": w1.astype(jnp.bfloat16),         # (L, H, I)        bf16
        "w_ffn2": w2.astype(jnp.bfloat16),         # (L, I, H)        bf16
        "head_w": head_w,                          # (2H, H)          bf16
    }


# ----------------------------- model forward --------------------------------
def model_forward(params, input_ids, attention_mask, token_type_ids,
                  labels=None, use_loss=True):
    b, s = input_ids.shape
    assert b == BATCH and s == SEQ, "kernel is specialized to (BATCH, SEQ)"
    assert b % 2 == 0, "SimCSE y_true pairing requires an even batch size"

    labels_arr = (labels if labels is not None
                  else jnp.zeros((b,), jnp.int32)).astype(jnp.int32)
    # all integer inputs packed into ONE (B*S, 3) buffer:
    #   col0 = word id, col1 = token-type id, col2 = label (broadcast over seq)
    int_inputs = jnp.stack(
        [input_ids.reshape(-1).astype(jnp.int32),
         token_type_ids.reshape(-1).astype(jnp.int32),
         jnp.repeat(labels_arr, s)], axis=1)

    # additive attention mask with (head, batch) block-diagonal structure,
    # matching the head-major row stacking used inside the kernel
    blk = jnp.arange(N_HEADS * b * s, dtype=jnp.int32) // s
    same_block = blk[:, None] == blk[None, :]
    pad = jnp.tile((1.0 - attention_mask.astype(jnp.float32)).reshape(-1),
                   (N_HEADS,))
    add_mask = jnp.where(same_block, pad[None, :] * -1e9, -1e9).astype(jnp.float32)

    logits, loss = pl.pallas_call(
        _fused_model_kernel,
        out_shape=(jax.ShapeDtypeStruct((b, NUM_CLASSES), jnp.float32),
                   jax.ShapeDtypeStruct((1, 1), jnp.float32)),
    )(int_inputs, add_mask, params["f32_pack"], params["b_qkv_stack"],
      params["w_qkv"], params["w_o"], params["w_ffn1"], params["w_ffn2"],
      params["head_w"])

    if not use_loss or labels is None:
        return logits
    return logits, loss[0, 0]


# ----------------------------- main ------------------------------------------
if __name__ == "__main__":
    key = jax.random.PRNGKey(0)
    pkey, ikey, tkey = jax.random.split(key, 3)

    params = init_params(pkey)
    input_ids = jax.random.randint(ikey, (BATCH, SEQ), 0, VOCAB, dtype=jnp.int32)
    token_type_ids = jnp.zeros((BATCH, SEQ), dtype=jnp.int32)
    attention_mask = jnp.ones((BATCH, SEQ), dtype=jnp.int32)
    labels = jax.random.randint(tkey, (BATCH,), 0, NUM_CLASSES, dtype=jnp.int32)

    logits, loss = model_forward(params, input_ids, attention_mask,
                                 token_type_ids, labels=labels, use_loss=True)
    jax.block_until_ready((logits, loss))
    assert logits.shape == (BATCH, NUM_CLASSES)
    assert loss.shape == ()
    print("KERNEL_OK")
</pallas_src>

<mosaic_0001>
module attributes {stable_mosaic.version = 11 : i64} {
  func.func @_fused_model_kernel(%arg0: memref<16x3xi32, #tpu.memory_space<vmem>>, %arg1: memref<32x32xf32, #tpu.memory_space<vmem>>, %arg2: memref<130x32xf32, #tpu.memory_space<vmem>>, %arg3: memref<6x32x16xf32, #tpu.memory_space<vmem>>, %arg4: memref<12x32x16xbf16, #tpu.memory_space<vmem>>, %arg5: memref<4x16x32xbf16, #tpu.memory_space<vmem>>, %arg6: memref<2x32x64xbf16, #tpu.memory_space<vmem>>, %arg7: memref<2x64x32xbf16, #tpu.memory_space<vmem>>, %arg8: memref<64x32xbf16, #tpu.memory_space<vmem>>, %arg9: memref<2x2xf32, #tpu.memory_space<vmem>>, %arg10: memref<1x1xf32, #tpu.memory_space<vmem>>) attributes {dimension_semantics = [], scalar_prefetch = 0 : i64, scratch_operands = 0 : i64, tpu.core_type = #tpu.core_type<tc>} {
    %c0 = arith.constant 0 : index
    %c0_0 = arith.constant 0 : index
    %0 = vector.load %arg2[%c0, %c0_0] : memref<130x32xf32, #tpu.memory_space<vmem>>, vector<130x32xf32>
    %c0_1 = arith.constant 0 : index
    %c0_2 = arith.constant 0 : index
    %1 = vector.load %arg0[%c0_1, %c0_2] : memref<16x3xi32, #tpu.memory_space<vmem>>, vector<16x3xi32>
    %2 = vector.extract_strided_slice %1 {offsets = [0, 0], sizes = [16, 1], strides = [1, 1]} : vector<16x3xi32> to vector<16x1xi32>
    %3 = vector.extract_strided_slice %1 {offsets = [0, 1], sizes = [16, 1], strides = [1, 1]} : vector<16x3xi32> to vector<16x1xi32>
    %4 = vector.extract_strided_slice %1 {offsets = [0, 2], sizes = [16, 1], strides = [1, 1]} : vector<16x3xi32> to vector<16x1xi32>
    %5 = tpu.iota {dimensions = array<i32: 1>} : vector<16x130xi32>
    %6 = tpu.iota {dimensions = array<i32: 0>} : vector<16x130xi32>
    %c0_i32 = arith.constant 0 : i32
    %7 = vector.broadcast %c0_i32 : i32 to vector<16x1xi32>
    %8 = arith.addi %7, %2 : vector<16x1xi32>
    %9 = vector.broadcast %8 : vector<16x1xi32> to vector<16x130xi32>
    %10 = arith.cmpi eq, %5, %9 : vector<16x130xi32>
    %c8_i32 = arith.constant 8 : i32
    %c0_i32_3 = arith.constant 0 : i32
    %11 = arith.cmpi eq, %c8_i32, %c0_i32_3 : i32
    %c1_i32 = arith.constant 1 : i32
    %12 = arith.select %11, %c1_i32, %c8_i32 : i32
    %13 = vector.broadcast %12 : i32 to vector<16x130xi32>
    %14 = arith.remsi %6, %13 : vector<16x130xi32>
    %c0_i32_4 = arith.constant 0 : i32
    %15 = vector.broadcast %c0_i32_4 : i32 to vector<16x130xi32>
    %16 = arith.cmpi ne, %14, %15 : vector<16x130xi32>
    %c0_i32_5 = arith.constant 0 : i32
    %17 = vector.broadcast %c0_i32_5 : i32 to vector<16x130xi32>
    %18 = arith.cmpi slt, %14, %17 : vector<16x130xi32>
    %c0_i32_6 = arith.constant 0 : i32
    %19 = arith.cmpi slt, %12, %c0_i32_6 : i32
    %20 = vector.broadcast %19 : i1 to vector<16x130xi1>
    %21 = vector.broadcast %20 : vector<16x130xi1> to vector<16x130xi1>
    %22 = arith.xori %18, %21 : vector<16x130xi1>
    %23 = arith.andi %22, %16 : vector<16x130xi1>
    %24 = vector.broadcast %12 : i32 to vector<16x130xi32>
    %25 = arith.addi %14, %24 : vector<16x130xi32>
    %26 = arith.select %23, %25, %14 : vector<16x130xi1>, vector<16x130xi32>
    %c100_i32 = arith.constant 100 : i32
    %27 = vector.broadcast %c100_i32 : i32 to vector<16x130xi32>
    %28 = arith.addi %27, %26 : vector<16x130xi32>
    %29 = arith.cmpi eq, %5, %28 : vector<16x130xi32>
    %30 = arith.ori %10, %29 : vector<16x130xi1>
    %c108_i32 = arith.constant 108 : i32
    %31 = vector.broadcast %c108_i32 : i32 to vector<16x1xi32>
    %32 = arith.addi %31, %3 : vector<16x1xi32>
    %33 = vector.broadcast %32 : vector<16x1xi32> to vector<16x130xi32>
    %34 = arith.cmpi eq, %5, %33 : vector<16x130xi32>
    %35 = arith.ori %30, %34 : vector<16x130xi1>
    %36 = arith.extui %35 : vector<16x130xi1> to vector<16x130xi32>
    %37 = arith.sitofp %36 : vector<16x130xi32> to vector<16x130xf32>
    %cst = arith.constant dense<0.000000e+00> : vector<16x32xf32>
    %38 = tpu.matmul %37, %0, %cst {dimension_numbers = #tpu.dot_dimension_numbers<[1], [0], [0], [1], [0, 0, 1, 1], [], []>} : vector<16x130xf32>, vector<130x32xf32>, vector<16x32xf32> -> vector<16x32xf32>
    %39 = vector.extract_strided_slice %0 {offsets = [110, 0], sizes = [1, 32], strides = [1, 1]} : vector<130x32xf32> to vector<1x32xf32>
    %40 = vector.extract_strided_slice %0 {offsets = [111, 0], sizes = [1, 32], strides = [1, 1]} : vector<130x32xf32> to vector<1x32xf32>
    %cst_7 = arith.constant dense<0.000000e+00> : vector<16xf32>
    %41 = vector.multi_reduction <add>, %38, %cst_7 [1] : vector<16x32xf32> to vector<16xf32>
    %42 = vector.shape_cast %41 : vector<16xf32> to vector<16x1xf32>
    %cst_8 = arith.constant 3.200000e+01 : f32
    %43 = vector.broadcast %cst_8 : f32 to vector<16x1xf32>
    %44 = arith.divf %42, %43 : vector<16x1xf32>
    %45 = vector.broadcast %44 : vector<16x1xf32> to vector<16x32xf32>
    %46 = arith.subf %38, %45 : vector<16x32xf32>
    %47 = arith.mulf %46, %46 : vector<16x32xf32>
    %cst_9 = arith.constant dense<0.000000e+00> : vector<16xf32>
    %48 = vector.multi_reduction <add>, %47, %cst_9 [1] : vector<16x32xf32> to vector<16xf32>
    %49 = vector.shape_cast %48 : vector<16xf32> to vector<16x1xf32>
    %cst_10 = arith.constant 3.200000e+01 : f32
    %50 = vector.broadcast %cst_10 : f32 to vector<16x1xf32>
    %51 = arith.divf %49, %50 : vector<16x1xf32>
    %cst_11 = arith.constant 9.99999996E-13 : f32
    %52 = vector.broadcast %cst_11 : f32 to vector<16x1xf32>
    %53 = arith.addf %51, %52 : vector<16x1xf32>
    %54 = math.rsqrt %53 : vector<16x1xf32>
    %55 = vector.broadcast %54 : vector<16x1xf32> to vector<16x32xf32>
    %56 = arith.mulf %46, %55 : vector<16x32xf32>
    %57 = vector.broadcast %39 : vector<1x32xf32> to vector<16x32xf32>
    %58 = arith.mulf %56, %57 : vector<16x32xf32>
    %59 = vector.broadcast %40 : vector<1x32xf32> to vector<16x32xf32>
    %60 = arith.addf %58, %59 : vector<16x32xf32>
    %c0_12 = arith.constant 0 : index
    %c0_13 = arith.constant 0 : index
    %61 = vector.load %arg1[%c0_12, %c0_13] : memref<32x32xf32, #tpu.memory_space<vmem>>, vector<32x32xf32>
    %62 = arith.truncf %60 : vector<16x32xf32> to vector<16x32xbf16>
    %c0_14 = arith.constant 0 : index
    %c0_15 = arith.constant 0 : index
    %c0_16 = arith.constant 0 : index
    %63 = vector.load %arg4[%c0_14, %c0_15, %c0_16] : memref<12x32x16xbf16, #tpu.memory_space<vmem>>, vector<1x32x16xbf16>
    %64 = vector.shape_cast %63 : vector<1x32x16xbf16> to vector<32x16xbf16>
    %cst_17 = arith.constant dense<0.000000e+00> : vector<16x16xf32>
    %65 = tpu.matmul %62, %64, %cst_17 {dimension_numbers = #tpu.dot_dimension_numbers<[1], [0], [0], [1], [0, 0, 1, 1], [], []>} : vector<16x32xbf16>, vector<32x16xbf16>, vector<16x16xf32> -> vector<16x16xf32>
    %c1 = arith.constant 1 : index
    %c0_18 = arith.constant 0 : index
    %c0_19 = arith.constant 0 : index
    %66 = vector.load %arg4[%c1, %c0_18, %c0_19] : memref<12x32x16xbf16, #tpu.memory_space<vmem>>, vector<1x32x16xbf16>
    %67 = vector.shape_cast %66 : vector<1x32x16xbf16> to vector<32x16xbf16>
    %cst_20 = arith.constant dense<0.000000e+00> : vector<16x16xf32>
    %68 = tpu.matmul %62, %67, %cst_20 {dimension_numbers = #tpu.dot_dimension_numbers<[1], [0], [0], [1], [0, 0, 1, 1], [], []>} : vector<16x32xbf16>, vector<32x16xbf16>, vector<16x16xf32> -> vector<16x16xf32>
    %69 = tpu.concatenate %65, %68 in 0 : vector<16x16xf32>, vector<16x16xf32> -> vector<32x16xf32>
    %c0_21 = arith.constant 0 : index
    %c0_22 = arith.constant 0 : index
    %c0_23 = arith.constant 0 : index
    %70 = vector.load %arg3[%c0_21, %c0_22, %c0_23] : memref<6x32x16xf32, #tpu.memory_space<vmem>>, vector<1x32x16xf32>
    %71 = vector.shape_cast %70 : vector<1x32x16xf32> to vector<32x16xf32>
    %72 = arith.addf %69, %71 : vector<32x16xf32>
    %c2 = arith.constant 2 : index
    %c0_24 = arith.constant 0 : index
    %c0_25 = arith.constant 0 : index
    %73 = vector.load %arg4[%c2, %c0_24, %c0_25] : memref<12x32x16xbf16, #tpu.memory_space<vmem>>, vector<1x32x16xbf16>
    %74 = vector.shape_cast %73 : vector<1x32x16xbf16> to vector<32x16xbf16>
    %cst_26 = arith.constant dense<0.000000e+00> : vector<16x16xf32>
    %75 = tpu.matmul %62, %74, %cst_26 {dimension_numbers = #tpu.dot_dimension_numbers<[1], [0], [0], [1], [0, 0, 1, 1], [], []>} : vector<16x32xbf16>, vector<32x16xbf16>, vector<16x16xf32> -> vector<16x16xf32>
    %c3 = arith.constant 3 : index
    %c0_27 = arith.constant 0 : index
    %c0_28 = arith.constant 0 : index
    %76 = vector.load %arg4[%c3, %c0_27, %c0_28] : memref<12x32x16xbf16, #tpu.memory_space<vmem>>, vector<1x32x16xbf16>
    %77 = vector.shape_cast %76 : vector<1x32x16xbf16> to vector<32x16xbf16>
    %cst_29 = arith.constant dense<0.000000e+00> : vector<16x16xf32>
    %78 = tpu.matmul %62, %77, %cst_29 {dimension_numbers = #tpu.dot_dimension_numbers<[1], [0], [0], [1], [0, 0, 1, 1], [], []>} : vector<16x32xbf16>, vector<32x16xbf16>, vector<16x16xf32> -> vector<16x16xf32>
    %79 = tpu.concatenate %75, %78 in 0 : vector<16x16xf32>, vector<16x16xf32> -> vector<32x16xf32>
    %c1_30 = arith.constant 1 : index
    %c0_31 = arith.constant 0 : index
    %c0_32 = arith.constant 0 : index
    %80 = vector.load %arg3[%c1_30, %c0_31, %c0_32] : memref<6x32x16xf32, #tpu.memory_space<vmem>>, vector<1x32x16xf32>
    %81 = vector.shape_cast %80 : vector<1x32x16xf32> to vector<32x16xf32>
    %82 = arith.addf %79, %81 : vector<32x16xf32>
    %c4 = arith.constant 4 : index
    %c0_33 = arith.constant 0 : index
    %c0_34 = arith.constant 0 : index
    %83 = vector.load %arg4[%c4, %c0_33, %c0_34] : memref<12x32x16xbf16, #tpu.memory_space<vmem>>, vector<1x32x16xbf16>
    %84 = vector.shape_cast %83 : vector<1x32x16xbf16> to vector<32x16xbf16>
    %cst_35 = arith.constant dense<0.000000e+00> : vector<16x16xf32>
    %85 = tpu.matmul %62, %84, %cst_35 {dimension_numbers = #tpu.dot_dimension_numbers<[1], [0], [0], [1], [0, 0, 1, 1], [], []>} : vector<16x32xbf16>, vector<32x16xbf16>, vector<16x16xf32> -> vector<16x16xf32>
    %c5 = arith.constant 5 : index
    %c0_36 = arith.constant 0 : index
    %c0_37 = arith.constant 0 : index
    %86 = vector.load %arg4[%c5, %c0_36, %c0_37] : memref<12x32x16xbf16, #tpu.memory_space<vmem>>, vector<1x32x16xbf16>
    %87 = vector.shape_cast %86 : vector<1x32x16xbf16> to vector<32x16xbf16>
    %cst_38 = arith.constant dense<0.000000e+00> : vector<16x16xf32>
    %88 = tpu.matmul %62, %87, %cst_38 {dimension_numbers = #tpu.dot_dimension_numbers<[1], [0], [0], [1], [0, 0, 1, 1], [], []>} : vector<16x32xbf16>, vector<32x16xbf16>, vector<16x16xf32> -> vector<16x16xf32>
    %89 = tpu.concatenate %85, %88 in 0 : vector<16x16xf32>, vector<16x16xf32> -> vector<32x16xf32>
    %c2_39 = arith.constant 2 : index
    %c0_40 = arith.constant 0 : index
    %c0_41 = arith.constant 0 : index
    %90 = vector.load %arg3[%c2_39, %c0_40, %c0_41] : memref<6x32x16xf32, #tpu.memory_space<vmem>>, vector<1x32x16xf32>
    %91 = vector.shape_cast %90 : vector<1x32x16xf32> to vector<32x16xf32>
    %92 = arith.addf %89, %91 : vector<32x16xf32>
    %93 = arith.truncf %72 : vector<32x16xf32> to vector<32x16xbf16>
    %94 = arith.truncf %82 : vector<32x16xf32> to vector<32x16xbf16>
    "tpu.trace_start"() <{level = 10 : i32, message = "qd,kd->qk"}> : () -> ()
    %cst_42 = arith.constant dense<0.000000e+00> : vector<32x32xf32>
    %95 = tpu.matmul %93, %94, %cst_42 {dimension_numbers = #tpu.dot_dimension_numbers<[1], [1], [0], [0], [0, 0, 1, 0], [], []>} : vector<32x16xbf16>, vector<32x16xbf16>, vector<32x32xf32> -> vector<32x32xf32>
    "tpu.trace_stop"() : () -> ()
    %cst_43 = arith.constant 2.500000e-01 : f32
    %96 = vector.broadcast %cst_43 : f32 to vector<32x32xf32>
    %97 = arith.mulf %95, %96 : vector<32x32xf32>
    %98 = arith.addf %97, %61 : vector<32x32xf32>
    %cst_44 = arith.constant dense<0xFF800000> : vector<32xf32>
    %99 = vector.multi_reduction <maximumf>, %98, %cst_44 [1] : vector<32x32xf32> to vector<32xf32>
    %100 = vector.shape_cast %99 : vector<32xf32> to vector<32x1xf32>
    %101 = vector.broadcast %100 : vector<32x1xf32> to vector<32x32xf32>
    %102 = arith.subf %98, %101 : vector<32x32xf32>
    %103 = math.exp %102 : vector<32x32xf32>
    %cst_45 = arith.constant dense<0.000000e+00> : vector<32xf32>
    %104 = vector.multi_reduction <add>, %103, %cst_45 [1] : vector<32x32xf32> to vector<32xf32>
    %105 = vector.shape_cast %104 : vector<32xf32> to vector<32x1xf32>
    %106 = vector.broadcast %105 : vector<32x1xf32> to vector<32x32xf32>
    %107 = arith.divf %103, %106 : vector<32x32xf32>
    %108 = arith.truncf %107 : vector<32x32xf32> to vector<32x32xbf16>
    %109 = arith.truncf %92 : vector<32x16xf32> to vector<32x16xbf16>
    %cst_46 = arith.constant dense<0.000000e+00> : vector<32x16xf32>
    %110 = tpu.matmul %108, %109, %cst_46 {dimension_numbers = #tpu.dot_dimension_numbers<[1], [0], [0], [1], [0, 0, 1, 1], [], []>} : vector<32x32xbf16>, vector<32x16xbf16>, vector<32x16xf32> -> vector<32x16xf32>
    %111 = vector.extract_strided_slice %110 {offsets = [0, 0], sizes = [16, 16], strides = [1, 1]} : vector<32x16xf32> to vector<16x16xf32>
    %112 = arith.truncf %111 : vector<16x16xf32> to vector<16x16xbf16>
    %c0_47 = arith.constant 0 : index
    %c0_48 = arith.constant 0 : index
    %c0_49 = arith.constant 0 : index
    %113 = vector.load %arg5[%c0_47, %c0_48, %c0_49] : memref<4x16x32xbf16, #tpu.memory_space<vmem>>, vector<1x16x32xbf16>
    %114 = vector.shape_cast %113 : vector<1x16x32xbf16> to vector<16x32xbf16>
    %cst_50 = arith.constant dense<0.000000e+00> : vector<16x32xf32>
    %115 = tpu.matmul %112, %114, %cst_50 {dimension_numbers = #tpu.dot_dimension_numbers<[1], [0], [0], [1], [0, 0, 1, 1], [], []>} : vector<16x16xbf16>, vector<16x32xbf16>, vector<16x32xf32> -> vector<16x32xf32>
    %116 = vector.extract_strided_slice %110 {offsets = [16, 0], sizes = [16, 16], strides = [1, 1]} : vector<32x16xf32> to vector<16x16xf32>
    %117 = arith.truncf %116 : vector<16x16xf32> to vector<16x16xbf16>
    %c1_51 = arith.constant 1 : index
    %c0_52 = arith.constant 0 : index
    %c0_53 = arith.constant 0 : index
    %118 = vector.load %arg5[%c1_51, %c0_52, %c0_53] : memref<4x16x32xbf16, #tpu.memory_space<vmem>>, vector<1x16x32xbf16>
    %119 = vector.shape_cast %118 : vector<1x16x32xbf16> to vector<16x32xbf16>
    %cst_54 = arith.constant dense<0.000000e+00> : vector<16x32xf32>
    %120 = tpu.matmul %117, %119, %cst_54 {dimension_numbers = #tpu.dot_dimension_numbers<[1], [0], [0], [1], [0, 0, 1, 1], [], []>} : vector<16x16xbf16>, vector<16x32xbf16>, vector<16x32xf32> -> vector<16x32xf32>
    %121 = arith.addf %115, %120 : vector<16x32xf32>
    %122 = vector.extract_strided_slice %0 {offsets = [112, 0], sizes = [1, 32], strides = [1, 1]} : vector<130x32xf32> to vector<1x32xf32>
    %123 = vector.broadcast %122 : vector<1x32xf32> to vector<16x32xf32>
    %124 = arith.addf %121, %123 : vector<16x32xf32>
    %125 = arith.addf %60, %124 : vector<16x32xf32>
    %126 = vector.extract_strided_slice %0 {offsets = [113, 0], sizes = [1, 32], strides = [1, 1]} : vector<130x32xf32> to vector<1x32xf32>
    %127 = vector.extract_strided_slice %0 {offsets = [114, 0], sizes = [1, 32], strides = [1, 1]} : vector<130x32xf32> to vector<1x32xf32>
    %cst_55 = arith.constant dense<0.000000e+00> : vector<16xf32>
    %128 = vector.multi_reduction <add>, %125, %cst_55 [1] : vector<16x32xf32> to vector<16xf32>
    %129 = vector.shape_cast %128 : vector<16xf32> to vector<16x1xf32>
    %cst_56 = arith.constant 3.200000e+01 : f32
    %130 = vector.broadcast %cst_56 : f32 to vector<16x1xf32>
    %131 = arith.divf %129, %130 : vector<16x1xf32>
    %132 = vector.broadcast %131 : vector<16x1xf32> to vector<16x32xf32>
    %133 = arith.subf %125, %132 : vector<16x32xf32>
    %134 = arith.mulf %133, %133 : vector<16x32xf32>
    %cst_57 = arith.constant dense<0.000000e+00> : vector<16xf32>
    %135 = vector.multi_reduction <add>, %134, %cst_57 [1] : vector<16x32xf32> to vector<16xf32>
    %136 = vector.shape_cast %135 : vector<16xf32> to vector<16x1xf32>
    %cst_58 = arith.constant 3.200000e+01 : f32
    %137 = vector.broadcast %cst_58 : f32 to vector<16x1xf32>
    %138 = arith.divf %136, %137 : vector<16x1xf32>
    %cst_59 = arith.constant 9.99999996E-13 : f32
    %139 = vector.broadcast %cst_59 : f32 to vector<16x1xf32>
    %140 = arith.addf %138, %139 : vector<16x1xf32>
    %141 = math.rsqrt %140 : vector<16x1xf32>
    %142 = vector.broadcast %141 : vector<16x1xf32> to vector<16x32xf32>
    %143 = arith.mulf %133, %142 : vector<16x32xf32>
    %144 = vector.broadcast %126 : vector<1x32xf32> to vector<16x32xf32>
    %145 = arith.mulf %143, %144 : vector<16x32xf32>
    %146 = vector.broadcast %127 : vector<1x32xf32> to vector<16x32xf32>
    %147 = arith.addf %145, %146 : vector<16x32xf32>
    %148 = vector.extract_strided_slice %0 {offsets = [115, 0], sizes = [1, 32], strides = [1, 1]} : vector<130x32xf32> to vector<1x32xf32>
    %149 = vector.extract_strided_slice %0 {offsets = [116, 0], sizes = [1, 32], strides = [1, 1]} : vector<130x32xf32> to vector<1x32xf32>
    %150 = tpu.concatenate %148, %149 in 1 : vector<1x32xf32>, vector<1x32xf32> -> vector<1x64xf32>
    %151 = arith.truncf %147 : vector<16x32xf32> to vector<16x32xbf16>
    %c0_60 = arith.constant 0 : index
    %c0_61 = arith.constant 0 : index
    %c0_62 = arith.constant 0 : index
    %152 = vector.load %arg6[%c0_60, %c0_61, %c0_62] : memref<2x32x64xbf16, #tpu.memory_space<vmem>>, vector<1x32x64xbf16>
    %153 = vector.shape_cast %152 : vector<1x32x64xbf16> to vector<32x64xbf16>
    %cst_63 = arith.constant dense<0.000000e+00> : vector<16x64xf32>
    %154 = tpu.matmul %151, %153, %cst_63 {dimension_numbers = #tpu.dot_dimension_numbers<[1], [0], [0], [1], [0, 0, 1, 1], [], []>} : vector<16x32xbf16>, vector<32x64xbf16>, vector<16x64xf32> -> vector<16x64xf32>
    %155 = vector.broadcast %150 : vector<1x64xf32> to vector<16x64xf32>
    %156 = arith.addf %154, %155 : vector<16x64xf32>
    %cst_64 = arith.constant 5.000000e-01 : f32
    %157 = vector.broadcast %cst_64 : f32 to vector<16x64xf32>
    %158 = arith.mulf %157, %156 : vector<16x64xf32>
    %cst_65 = arith.constant 4.471500e-02 : f32
    %159 = vector.broadcast %cst_65 : f32 to vector<16x64xf32>
    %160 = arith.mulf %159, %156 : vector<16x64xf32>
    %161 = arith.mulf %160, %156 : vector<16x64xf32>
    %162 = arith.mulf %161, %156 : vector<16x64xf32>
    %163 = arith.addf %156, %162 : vector<16x64xf32>
    %cst_66 = arith.constant 0.797884583 : f32
    %164 = vector.broadcast %cst_66 : f32 to vector<16x64xf32>
    %165 = arith.mulf %164, %163 : vector<16x64xf32>
    %166 = math.tanh %165 : vector<16x64xf32>
    %cst_67 = arith.constant 1.000000e+00 : f32
    %167 = vector.broadcast %cst_67 : f32 to vector<16x64xf32>
    %168 = arith.addf %167, %166 : vector<16x64xf32>
    %169 = arith.mulf %158, %168 : vector<16x64xf32>
    %170 = arith.truncf %169 : vector<16x64xf32> to vector<16x64xbf16>
    %c0_68 = arith.constant 0 : index
    %c0_69 = arith.constant 0 : index
    %c0_70 = arith.constant 0 : index
    %171 = vector.load %arg7[%c0_68, %c0_69, %c0_70] : memref<2x64x32xbf16, #tpu.memory_space<vmem>>, vector<1x64x32xbf16>
    %172 = vector.shape_cast %171 : vector<1x64x32xbf16> to vector<64x32xbf16>
    %cst_71 = arith.constant dense<0.000000e+00> : vector<16x32xf32>
    %173 = tpu.matmul %170, %172, %cst_71 {dimension_numbers = #tpu.dot_dimension_numbers<[1], [0], [0], [1], [0, 0, 1, 1], [], []>} : vector<16x64xbf16>, vector<64x32xbf16>, vector<16x32xf32> -> vector<16x32xf32>
    %174 = vector.extract_strided_slice %0 {offsets = [117, 0], sizes = [1, 32], strides = [1, 1]} : vector<130x32xf32> to vector<1x32xf32>
    %175 = vector.broadcast %174 : vector<1x32xf32> to vector<16x32xf32>
    %176 = arith.addf %173, %175 : vector<16x32xf32>
    %177 = arith.addf %147, %176 : vector<16x32xf32>
    %178 = vector.extract_strided_slice %0 {offsets = [118, 0], sizes = [1, 32], strides = [1, 1]} : vector<130x32xf32> to vector<1x32xf32>
    %179 = vector.extract_strided_slice %0 {offsets = [119, 0], sizes = [1, 32], strides = [1, 1]} : vector<130x32xf32> to vector<1x32xf32>
    %cst_72 = arith.constant dense<0.000000e+00> : vector<16xf32>
    %180 = vector.multi_reduction <add>, %177, %cst_72 [1] : vector<16x32xf32> to vector<16xf32>
    %181 = vector.shape_cast %180 : vector<16xf32> to vector<16x1xf32>
    %cst_73 = arith.constant 3.200000e+01 : f32
    %182 = vector.broadcast %cst_73 : f32 to vector<16x1xf32>
    %183 = arith.divf %181, %182 : vector<16x1xf32>
    %184 = vector.broadcast %183 : vector<16x1xf32> to vector<16x32xf32>
    %185 = arith.subf %177, %184 : vector<16x32xf32>
    %186 = arith.mulf %185, %185 : vector<16x32xf32>
    %cst_74 = arith.constant dense<0.000000e+00> : vector<16xf32>
    %187 = vector.multi_reduction <add>, %186, %cst_74 [1] : vector<16x32xf32> to vector<16xf32>
    %188 = vector.shape_cast %187 : vector<16xf32> to vector<16x1xf32>
    %cst_75 = arith.constant 3.200000e+01 : f32
    %189 = vector.broadcast %cst_75 : f32 to vector<16x1xf32>
    %190 = arith.divf %188, %189 : vector<16x1xf32>
    %cst_76 = arith.constant 9.99999996E-13 : f32
    %191 = vector.broadcast %cst_76 : f32 to vector<16x1xf32>
    %192 = arith.addf %190, %191 : vector<16x1xf32>
    %193 = math.rsqrt %192 : vector<16x1xf32>
    %194 = vector.broadcast %193 : vector<16x1xf32> to vector<16x32xf32>
    %195 = arith.mulf %185, %194 : vector<16x32xf32>
    %196 = vector.broadcast %178 : vector<1x32xf32> to vector<16x32xf32>
    %197 = arith.mulf %195, %196 : vector<16x32xf32>
    %198 = vector.broadcast %179 : vector<1x32xf32> to vector<16x32xf32>
    %199 = arith.addf %197, %198 : vector<16x32xf32>
    %200 = arith.truncf %199 : vector<16x32xf32> to vector<16x32xbf16>
    %c6 = arith.constant 6 : index
    %c0_77 = arith.constant 0 : index
    %c0_78 = arith.constant 0 : index
    %201 = vector.load %arg4[%c6, %c0_77, %c0_78] : memref<12x32x16xbf16, #tpu.memory_space<vmem>>, vector<1x32x16xbf16>
    %202 = vector.shape_cast %201 : vector<1x32x16xbf16> to vector<32x16xbf16>
    %cst_79 = arith.constant dense<0.000000e+00> : vector<16x16xf32>
    %203 = tpu.matmul %200, %202, %cst_79 {dimension_numbers = #tpu.dot_dimension_numbers<[1], [0], [0], [1], [0, 0, 1, 1], [], []>} : vector<16x32xbf16>, vector<32x16xbf16>, vector<16x16xf32> -> vector<16x16xf32>
    %c7 = arith.constant 7 : index
    %c0_80 = arith.constant 0 : index
    %c0_81 = arith.constant 0 : index
    %204 = vector.load %arg4[%c7, %c0_80, %c0_81] : memref<12x32x16xbf16, #tpu.memory_space<vmem>>, vector<1x32x16xbf16>
    %205 = vector.shape_cast %204 : vector<1x32x16xbf16> to vector<32x16xbf16>
    %cst_82 = arith.constant dense<0.000000e+00> : vector<16x16xf32>
    %206 = tpu.matmul %200, %205, %cst_82 {dimension_numbers = #tpu.dot_dimension_numbers<[1], [0], [0], [1], [0, 0, 1, 1], [], []>} : vector<16x32xbf16>, vector<32x16xbf16>, vector<16x16xf32> -> vector<16x16xf32>
    %207 = tpu.concatenate %203, %206 in 0 : vector<16x16xf32>, vector<16x16xf32> -> vector<32x16xf32>
    %c3_83 = arith.constant 3 : index
    %c0_84 = arith.constant 0 : index
    %c0_85 = arith.constant 0 : index
    %208 = vector.load %arg3[%c3_83, %c0_84, %c0_85] : memref<6x32x16xf32, #tpu.memory_space<vmem>>, vector<1x32x16xf32>
    %209 = vector.shape_cast %208 : vector<1x32x16xf32> to vector<32x16xf32>
    %210 = arith.addf %207, %209 : vector<32x16xf32>
    %c8 = arith.constant 8 : index
    %c0_86 = arith.constant 0 : index
    %c0_87 = arith.constant 0 : index
    %211 = vector.load %arg4[%c8, %c0_86, %c0_87] : memref<12x32x16xbf16, #tpu.memory_space<vmem>>, vector<1x32x16xbf16>
    %212 = vector.shape_cast %211 : vector<1x32x16xbf16> to vector<32x16xbf16>
    %cst_88 = arith.constant dense<0.000000e+00> : vector<16x16xf32>
    %213 = tpu.matmul %200, %212, %cst_88 {dimension_numbers = #tpu.dot_dimension_numbers<[1], [0], [0], [1], [0, 0, 1, 1], [], []>} : vector<16x32xbf16>, vector<32x16xbf16>, vector<16x16xf32> -> vector<16x16xf32>
    %c9 = arith.constant 9 : index
    %c0_89 = arith.constant 0 : index
    %c0_90 = arith.constant 0 : index
    %214 = vector.load %arg4[%c9, %c0_89, %c0_90] : memref<12x32x16xbf16, #tpu.memory_space<vmem>>, vector<1x32x16xbf16>
    %215 = vector.shape_cast %214 : vector<1x32x16xbf16> to vector<32x16xbf16>
    %cst_91 = arith.constant dense<0.000000e+00> : vector<16x16xf32>
    %216 = tpu.matmul %200, %215, %cst_91 {dimension_numbers = #tpu.dot_dimension_numbers<[1], [0], [0], [1], [0, 0, 1, 1], [], []>} : vector<16x32xbf16>, vector<32x16xbf16>, vector<16x16xf32> -> vector<16x16xf32>
    %217 = tpu.concatenate %213, %216 in 0 : vector<16x16xf32>, vector<16x16xf32> -> vector<32x16xf32>
    %c4_92 = arith.constant 4 : index
    %c0_93 = arith.constant 0 : index
    %c0_94 = arith.constant 0 : index
    %218 = vector.load %arg3[%c4_92, %c0_93, %c0_94] : memref<6x32x16xf32, #tpu.memory_space<vmem>>, vector<1x32x16xf32>
    %219 = vector.shape_cast %218 : vector<1x32x16xf32> to vector<32x16xf32>
    %220 = arith.addf %217, %219 : vector<32x16xf32>
    %c10 = arith.constant 10 : index
    %c0_95 = arith.constant 0 : index
    %c0_96 = arith.constant 0 : index
    %221 = vector.load %arg4[%c10, %c0_95, %c0_96] : memref<12x32x16xbf16, #tpu.memory_space<vmem>>, vector<1x32x16xbf16>
    %222 = vector.shape_cast %221 : vector<1x32x16xbf16> to vector<32x16xbf16>
    %cst_97 = arith.constant dense<0.000000e+00> : vector<16x16xf32>
    %223 = tpu.matmul %200, %222, %cst_97 {dimension_numbers = #tpu.dot_dimension_numbers<[1], [0], [0], [1], [0, 0, 1, 1], [], []>} : vector<16x32xbf16>, vector<32x16xbf16>, vector<16x16xf32> -> vector<16x16xf32>
    %c11 = arith.constant 11 : index
    %c0_98 = arith.constant 0 : index
    %c0_99 = arith.constant 0 : index
    %224 = vector.load %arg4[%c11, %c0_98, %c0_99] : memref<12x32x16xbf16, #tpu.memory_space<vmem>>, vector<1x32x16xbf16>
    %225 = vector.shape_cast %224 : vector<1x32x16xbf16> to vector<32x16xbf16>
    %cst_100 = arith.constant dense<0.000000e+00> : vector<16x16xf32>
    %226 = tpu.matmul %200, %225, %cst_100 {dimension_numbers = #tpu.dot_dimension_numbers<[1], [0], [0], [1], [0, 0, 1, 1], [], []>} : vector<16x32xbf16>, vector<32x16xbf16>, vector<16x16xf32> -> vector<16x16xf32>
    %227 = tpu.concatenate %223, %226 in 0 : vector<16x16xf32>, vector<16x16xf32> -> vector<32x16xf32>
    %c5_101 = arith.constant 5 : index
    %c0_102 = arith.constant 0 : index
    %c0_103 = arith.constant 0 : index
    %228 = vector.load %arg3[%c5_101, %c0_102, %c0_103] : memref<6x32x16xf32, #tpu.memory_space<vmem>>, vector<1x32x16xf32>
    %229 = vector.shape_cast %228 : vector<1x32x16xf32> to vector<32x16xf32>
    %230 = arith.addf %227, %229 : vector<32x16xf32>
    %231 = arith.truncf %210 : vector<32x16xf32> to vector<32x16xbf16>
    %232 = arith.truncf %220 : vector<32x16xf32> to vector<32x16xbf16>
    "tpu.trace_start"() <{level = 10 : i32, message = "qd,kd->qk"}> : () -> ()
    %cst_104 = arith.constant dense<0.000000e+00> : vector<32x32xf32>
    %233 = tpu.matmul %231, %232, %cst_104 {dimension_numbers = #tpu.dot_dimension_numbers<[1], [1], [0], [0], [0, 0, 1, 0], [], []>} : vector<32x16xbf16>, vector<32x16xbf16>, vector<32x32xf32> -> vector<32x32xf32>
    "tpu.trace_stop"() : () -> ()
    %cst_105 = arith.constant 2.500000e-01 : f32
    %234 = vector.broadcast %cst_105 : f32 to vector<32x32xf32>
    %235 = arith.mulf %233, %234 : vector<32x32xf32>
    %236 = arith.addf %235, %61 : vector<32x32xf32>
    %cst_106 = arith.constant dense<0xFF800000> : vector<32xf32>
    %237 = vector.multi_reduction <maximumf>, %236, %cst_106 [1] : vector<32x32xf32> to vector<32xf32>
    %238 = vector.shape_cast %237 : vector<32xf32> to vector<32x1xf32>
    %239 = vector.broadcast %238 : vector<32x1xf32> to vector<32x32xf32>
    %240 = arith.subf %236, %239 : vector<32x32xf32>
    %241 = math.exp %240 : vector<32x32xf32>
    %cst_107 = arith.constant dense<0.000000e+00> : vector<32xf32>
    %242 = vector.multi_reduction <add>, %241, %cst_107 [1] : vector<32x32xf32> to vector<32xf32>
    %243 = vector.shape_cast %242 : vector<32xf32> to vector<32x1xf32>
    %244 = vector.broadcast %243 : vector<32x1xf32> to vector<32x32xf32>
    %245 = arith.divf %241, %244 : vector<32x32xf32>
    %246 = arith.truncf %245 : vector<32x32xf32> to vector<32x32xbf16>
    %247 = arith.truncf %230 : vector<32x16xf32> to vector<32x16xbf16>
    %cst_108 = arith.constant dense<0.000000e+00> : vector<32x16xf32>
    %248 = tpu.matmul %246, %247, %cst_108 {dimension_numbers = #tpu.dot_dimension_numbers<[1], [0], [0], [1], [0, 0, 1, 1], [], []>} : vector<32x32xbf16>, vector<32x16xbf16>, vector<32x16xf32> -> vector<32x16xf32>
    %249 = vector.extract_strided_slice %248 {offsets = [0, 0], sizes = [16, 16], strides = [1, 1]} : vector<32x16xf32> to vector<16x16xf32>
    %250 = arith.truncf %249 : vector<16x16xf32> to vector<16x16xbf16>
    %c2_109 = arith.constant 2 : index
    %c0_110 = arith.constant 0 : index
    %c0_111 = arith.constant 0 : index
    %251 = vector.load %arg5[%c2_109, %c0_110, %c0_111] : memref<4x16x32xbf16, #tpu.memory_space<vmem>>, vector<1x16x32xbf16>
    %252 = vector.shape_cast %251 : vector<1x16x32xbf16> to vector<16x32xbf16>
    %cst_112 = arith.constant dense<0.000000e+00> : vector<16x32xf32>
    %253 = tpu.matmul %250, %252, %cst_112 {dimension_numbers = #tpu.dot_dimension_numbers<[1], [0], [0], [1], [0, 0, 1, 1], [], []>} : vector<16x16xbf16>, vector<16x32xbf16>, vector<16x32xf32> -> vector<16x32xf32>
    %254 = vector.extract_strided_slice %248 {offsets = [16, 0], sizes = [16, 16], strides = [1, 1]} : vector<32x16xf32> to vector<16x16xf32>
    %255 = arith.truncf %254 : vector<16x16xf32> to vector<16x16xbf16>
    %c3_113 = arith.constant 3 : index
    %c0_114 = arith.constant 0 : index
    %c0_115 = arith.constant 0 : index
    %256 = vector.load %arg5[%c3_113, %c0_114, %c0_115] : memref<4x16x32xbf16, #tpu.memory_space<vmem>>, vector<1x16x32xbf16>
    %257 = vector.shape_cast %256 : vector<1x16x32xbf16> to vector<16x32xbf16>
    %cst_116 = arith.constant dense<0.000000e+00> : vector<16x32xf32>
    %258 = tpu.matmul %255, %257, %cst_116 {dimension_numbers = #tpu.dot_dimension_numbers<[1], [0], [0], [1], [0, 0, 1, 1], [], []>} : vector<16x16xbf16>, vector<16x32xbf16>, vector<16x32xf32> -> vector<16x32xf32>
    %259 = arith.addf %253, %258 : vector<16x32xf32>
    %260 = vector.extract_strided_slice %0 {offsets = [120, 0], sizes = [1, 32], strides = [1, 1]} : vector<130x32xf32> to vector<1x32xf32>
    %261 = vector.broadcast %260 : vector<1x32xf32> to vector<16x32xf32>
    %262 = arith.addf %259, %261 : vector<16x32xf32>
    %263 = arith.addf %199, %262 : vector<16x32xf32>
    %264 = vector.extract_strided_slice %0 {offsets = [121, 0], sizes = [1, 32], strides = [1, 1]} : vector<130x32xf32> to vector<1x32xf32>
    %265 = vector.extract_strided_slice %0 {offsets = [122, 0], sizes = [1, 32], strides = [1, 1]} : vector<130x32xf32> to vector<1x32xf32>
    %cst_117 = arith.constant dense<0.000000e+00> : vector<16xf32>
    %266 = vector.multi_reduction <add>, %263, %cst_117 [1] : vector<16x32xf32> to vector<16xf32>
    %267 = vector.shape_cast %266 : vector<16xf32> to vector<16x1xf32>
    %cst_118 = arith.constant 3.200000e+01 : f32
    %268 = vector.broadcast %cst_118 : f32 to vector<16x1xf32>
    %269 = arith.divf %267, %268 : vector<16x1xf32>
    %270 = vector.broadcast %269 : vector<16x1xf32> to vector<16x32xf32>
    %271 = arith.subf %263, %270 : vector<16x32xf32>
    %272 = arith.mulf %271, %271 : vector<16x32xf32>
    %cst_119 = arith.constant dense<0.000000e+00> : vector<16xf32>
    %273 = vector.multi_reduction <add>, %272, %cst_119 [1] : vector<16x32xf32> to vector<16xf32>
    %274 = vector.shape_cast %273 : vector<16xf32> to vector<16x1xf32>
    %cst_120 = arith.constant 3.200000e+01 : f32
    %275 = vector.broadcast %cst_120 : f32 to vector<16x1xf32>
    %276 = arith.divf %274, %275 : vector<16x1xf32>
    %cst_121 = arith.constant 9.99999996E-13 : f32
    %277 = vector.broadcast %cst_121 : f32 to vector<16x1xf32>
    %278 = arith.addf %276, %277 : vector<16x1xf32>
    %279 = math.rsqrt %278 : vector<16x1xf32>
    %280 = vector.broadcast %279 : vector<16x1xf32> to vector<16x32xf32>
    %281 = arith.mulf %271, %280 : vector<16x32xf32>
    %282 = vector.broadcast %264 : vector<1x32xf32> to vector<16x32xf32>
    %283 = arith.mulf %281, %282 : vector<16x32xf32>
    %284 = vector.broadcast %265 : vector<1x32xf32> to vector<16x32xf32>
    %285 = arith.addf %283, %284 : vector<16x32xf32>
    %286 = vector.extract_strided_slice %0 {offsets = [123, 0], sizes = [1, 32], strides = [1, 1]} : vector<130x32xf32> to vector<1x32xf32>
    %287 = vector.extract_strided_slice %0 {offsets = [124, 0], sizes = [1, 32], strides = [1, 1]} : vector<130x32xf32> to vector<1x32xf32>
    %288 = tpu.concatenate %286, %287 in 1 : vector<1x32xf32>, vector<1x32xf32> -> vector<1x64xf32>
    %289 = arith.truncf %285 : vector<16x32xf32> to vector<16x32xbf16>
    %c1_122 = arith.constant 1 : index
    %c0_123 = arith.constant 0 : index
    %c0_124 = arith.constant 0 : index
    %290 = vector.load %arg6[%c1_122, %c0_123, %c0_124] : memref<2x32x64xbf16, #tpu.memory_space<vmem>>, vector<1x32x64xbf16>
    %291 = vector.shape_cast %290 : vector<1x32x64xbf16> to vector<32x64xbf16>
    %cst_125 = arith.constant dense<0.000000e+00> : vector<16x64xf32>
    %292 = tpu.matmul %289, %291, %cst_125 {dimension_numbers = #tpu.dot_dimension_numbers<[1], [0], [0], [1], [0, 0, 1, 1], [], []>} : vector<16x32xbf16>, vector<32x64xbf16>, vector<16x64xf32> -> vector<16x64xf32>
    %293 = vector.broadcast %288 : vector<1x64xf32> to vector<16x64xf32>
    %294 = arith.addf %292, %293 : vector<16x64xf32>
    %cst_126 = arith.constant 5.000000e-01 : f32
    %295 = vector.broadcast %cst_126 : f32 to vector<16x64xf32>
    %296 = arith.mulf %295, %294 : vector<16x64xf32>
    %cst_127 = arith.constant 4.471500e-02 : f32
    %297 = vector.broadcast %cst_127 : f32 to vector<16x64xf32>
    %298 = arith.mulf %297, %294 : vector<16x64xf32>
    %299 = arith.mulf %298, %294 : vector<16x64xf32>
    %300 = arith.mulf %299, %294 : vector<16x64xf32>
    %301 = arith.addf %294, %300 : vector<16x64xf32>
    %cst_128 = arith.constant 0.797884583 : f32
    %302 = vector.broadcast %cst_128 : f32 to vector<16x64xf32>
    %303 = arith.mulf %302, %301 : vector<16x64xf32>
    %304 = math.tanh %303 : vector<16x64xf32>
    %cst_129 = arith.constant 1.000000e+00 : f32
    %305 = vector.broadcast %cst_129 : f32 to vector<16x64xf32>
    %306 = arith.addf %305, %304 : vector<16x64xf32>
    %307 = arith.mulf %296, %306 : vector<16x64xf32>
    %308 = arith.truncf %307 : vector<16x64xf32> to vector<16x64xbf16>
    %c1_130 = arith.constant 1 : index
    %c0_131 = arith.constant 0 : index
    %c0_132 = arith.constant 0 : index
    %309 = vector.load %arg7[%c1_130, %c0_131, %c0_132] : memref<2x64x32xbf16, #tpu.memory_space<vmem>>, vector<1x64x32xbf16>
    %310 = vector.shape_cast %309 : vector<1x64x32xbf16> to vector<64x32xbf16>
    %cst_133 = arith.constant dense<0.000000e+00> : vector<16x32xf32>
    %311 = tpu.matmul %308, %310, %cst_133 {dimension_numbers = #tpu.dot_dimension_numbers<[1], [0], [0], [1], [0, 0, 1, 1], [], []>} : vector<16x64xbf16>, vector<64x32xbf16>, vector<16x32xf32> -> vector<16x32xf32>
    %312 = vector.extract_strided_slice %0 {offsets = [125, 0], sizes = [1, 32], strides = [1, 1]} : vector<130x32xf32> to vector<1x32xf32>
    %313 = vector.broadcast %312 : vector<1x32xf32> to vector<16x32xf32>
    %314 = arith.addf %311, %313 : vector<16x32xf32>
    %315 = arith.addf %285, %314 : vector<16x32xf32>
    %316 = vector.extract_strided_slice %0 {offsets = [126, 0], sizes = [1, 32], strides = [1, 1]} : vector<130x32xf32> to vector<1x32xf32>
    %317 = vector.extract_strided_slice %0 {offsets = [127, 0], sizes = [1, 32], strides = [1, 1]} : vector<130x32xf32> to vector<1x32xf32>
    %cst_134 = arith.constant dense<0.000000e+00> : vector<16xf32>
    %318 = vector.multi_reduction <add>, %315, %cst_134 [1] : vector<16x32xf32> to vector<16xf32>
    %319 = vector.shape_cast %318 : vector<16xf32> to vector<16x1xf32>
    %cst_135 = arith.constant 3.200000e+01 : f32
    %320 = vector.broadcast %cst_135 : f32 to vector<16x1xf32>
    %321 = arith.divf %319, %320 : vector<16x1xf32>
    %322 = vector.broadcast %321 : vector<16x1xf32> to vector<16x32xf32>
    %323 = arith.subf %315, %322 : vector<16x32xf32>
    %324 = arith.mulf %323, %323 : vector<16x32xf32>
    %cst_136 = arith.constant dense<0.000000e+00> : vector<16xf32>
    %325 = vector.multi_reduction <add>, %324, %cst_136 [1] : vector<16x32xf32> to vector<16xf32>
    %326 = vector.shape_cast %325 : vector<16xf32> to vector<16x1xf32>
    %cst_137 = arith.constant 3.200000e+01 : f32
    %327 = vector.broadcast %cst_137 : f32 to vector<16x1xf32>
    %328 = arith.divf %326, %327 : vector<16x1xf32>
    %cst_138 = arith.constant 9.99999996E-13 : f32
    %329 = vector.broadcast %cst_138 : f32 to vector<16x1xf32>
    %330 = arith.addf %328, %329 : vector<16x1xf32>
    %331 = math.rsqrt %330 : vector<16x1xf32>
    %332 = vector.broadcast %331 : vector<16x1xf32> to vector<16x32xf32>
    %333 = arith.mulf %323, %332 : vector<16x32xf32>
    %334 = vector.broadcast %316 : vector<1x32xf32> to vector<16x32xf32>
    %335 = arith.mulf %333, %334 : vector<16x32xf32>
    %336 = vector.broadcast %317 : vector<1x32xf32> to vector<16x32xf32>
    %337 = arith.addf %335, %336 : vector<16x32xf32>
    %338 = tpu.iota {dimensions = array<i32: 0>} : vector<2x16xi32>
    %339 = tpu.iota {dimensions = array<i32: 1>} : vector<2x16xi32>
    %c8_i32_139 = arith.constant 8 : i32
    %340 = vector.broadcast %c8_i32_139 : i32 to vector<2x16xi32>
    %341 = arith.muli %338, %340 : vector<2x16xi32>
    %342 = arith.cmpi eq, %339, %341 : vector<2x16xi32>
    %343 = arith.extui %342 : vector<2x16xi1> to vector<2x16xi32>
    %344 = arith.sitofp %343 : vector<2x16xi32> to vector<2x16xf32>
    %cst_140 = arith.constant dense<0.000000e+00> : vector<2x32xf32>
    %345 = tpu.matmul %344, %337, %cst_140 {dimension_numbers = #tpu.dot_dimension_numbers<[1], [0], [0], [1], [0, 0, 1, 1], [], []>} : vector<2x16xf32>, vector<16x32xf32>, vector<2x32xf32> -> vector<2x32xf32>
    %c0_141 = arith.constant 0 : index
    %c0_142 = arith.constant 0 : index
    %346 = vector.load %arg8[%c0_141, %c0_142] : memref<64x32xbf16, #tpu.memory_space<vmem>>, vector<32x32xbf16>
    %c32 = arith.constant 32 : index
    %c0_143 = arith.constant 0 : index
    %347 = vector.load %arg8[%c32, %c0_143] : memref<64x32xbf16, #tpu.memory_space<vmem>>, vector<32x32xbf16>
    %348 = arith.truncf %345 : vector<2x32xf32> to vector<2x32xbf16>
    %cst_144 = arith.constant dense<0.000000e+00> : vector<2x32xf32>
    %349 = tpu.matmul %348, %346, %cst_144 {dimension_numbers = #tpu.dot_dimension_numbers<[1], [0], [0], [1], [0, 0, 1, 1], [], []>} : vector<2x32xbf16>, vector<32x32xbf16>, vector<2x32xf32> -> vector<2x32xf32>
    %350 = vector.extract_strided_slice %0 {offsets = [128, 0], sizes = [1, 32], strides = [1, 1]} : vector<130x32xf32> to vector<1x32xf32>
    %351 = vector.broadcast %350 : vector<1x32xf32> to vector<2x32xf32>
    %352 = arith.addf %349, %351 : vector<2x32xf32>
    %353 = math.tanh %352 : vector<2x32xf32>
    %354 = arith.truncf %353 : vector<2x32xf32> to vector<2x32xbf16>
    %cst_145 = arith.constant dense<0.000000e+00> : vector<2x32xf32>
    %355 = tpu.matmul %354, %347, %cst_145 {dimension_numbers = #tpu.dot_dimension_numbers<[1], [0], [0], [1], [0, 0, 1, 1], [], []>} : vector<2x32xbf16>, vector<32x32xbf16>, vector<2x32xf32> -> vector<2x32xf32>
    %356 = vector.extract_strided_slice %0 {offsets = [129, 0], sizes = [1, 32], strides = [1, 1]} : vector<130x32xf32> to vector<1x32xf32>
    %357 = vector.broadcast %356 : vector<1x32xf32> to vector<2x32xf32>
    %358 = arith.addf %355, %357 : vector<2x32xf32>
    %359 = vector.extract_strided_slice %358 {offsets = [0, 0], sizes = [2, 2], strides = [1, 1]} : vector<2x32xf32> to vector<2x2xf32>
    %c0_146 = arith.constant 0 : index
    %c0_147 = arith.constant 0 : index
    %360 = vector.load %arg9[%c0_146, %c0_147] : memref<2x2xf32, #tpu.memory_space<vmem>>, vector<2x2xf32>
    tpu.vector_store %arg9[%c0_146, %c0_147], %359 {strides = array<i32>} : memref<2x2xf32, #tpu.memory_space<vmem>>, vector<2x2xf32>,
    %361 = arith.mulf %345, %345 : vector<2x32xf32>
    %cst_148 = arith.constant dense<0.000000e+00> : vector<2xf32>
    %362 = vector.multi_reduction <add>, %361, %cst_148 [1] : vector<2x32xf32> to vector<2xf32>
    %363 = vector.shape_cast %362 : vector<2xf32> to vector<2x1xf32>
    %cst_149 = arith.constant 1.000000e-16 : f32
    %364 = vector.broadcast %cst_149 : f32 to vector<2x1xf32>
    %365 = arith.addf %363, %364 : vector<2x1xf32>
    %366 = math.rsqrt %365 : vector<2x1xf32>
    %367 = vector.broadcast %366 : vector<2x1xf32> to vector<2x32xf32>
    %368 = arith.mulf %345, %367 : vector<2x32xf32>
    "tpu.trace_start"() <{level = 10 : i32, message = "id,jd->ij"}> : () -> ()
    %cst_150 = arith.constant dense<0.000000e+00> : vector<2x2xf32>
    %369 = tpu.matmul %368, %368, %cst_150 {dimension_numbers = #tpu.dot_dimension_numbers<[1], [1], [0], [0], [0, 0, 1, 0], [], []>} : vector<2x32xf32>, vector<2x32xf32>, vector<2x2xf32> -> vector<2x2xf32>
    "tpu.trace_stop"() : () -> ()
    %370 = tpu.iota {dimensions = array<i32: 0>} : vector<2x2xi32>
    %371 = tpu.iota {dimensions = array<i32: 1>} : vector<2x2xi32>
    %372 = arith.cmpi eq, %370, %371 : vector<2x2xi32>
    %cst_151 = arith.constant 9.99999995E+11 : f32
    %373 = vector.broadcast %cst_151 : f32 to vector<2x2xf32>
    %374 = arith.subf %369, %373 : vector<2x2xf32>
    %375 = arith.select %372, %374, %369 : vector<2x2xi1>, vector<2x2xf32>
    %cst_152 = arith.constant 5.000000e-02 : f32
    %376 = vector.broadcast %cst_152 : f32 to vector<2x2xf32>
    %377 = arith.divf %375, %376 : vector<2x2xf32>
    %c1_i32_153 = arith.constant 1 : i32
    %378 = vector.broadcast %c1_i32_153 : i32 to vector<2x2xi32>
    %379 = arith.addi %370, %378 : vector<2x2xi32>
    %c2_i32 = arith.constant 2 : i32
    %c0_i32_154 = arith.constant 0 : i32
    %380 = arith.cmpi eq, %c2_i32, %c0_i32_154 : i32
    %c1_i32_155 = arith.constant 1 : i32
    %381 = arith.select %380, %c1_i32_155, %c2_i32 : i32
    %382 = vector.broadcast %381 : i32 to vector<2x2xi32>
    %383 = arith.remsi %370, %382 : vector<2x2xi32>
    %c0_i32_156 = arith.constant 0 : i32
    %384 = vector.broadcast %c0_i32_156 : i32 to vector<2x2xi32>
    %385 = arith.cmpi ne, %383, %384 : vector<2x2xi32>
    %c0_i32_157 = arith.constant 0 : i32
    %386 = vector.broadcast %c0_i32_157 : i32 to vector<2x2xi32>
    %387 = arith.cmpi slt, %383, %386 : vector<2x2xi32>
    %c0_i32_158 = arith.constant 0 : i32
    %388 = arith.cmpi slt, %381, %c0_i32_158 : i32
    %389 = vector.broadcast %388 : i1 to vector<2x2xi1>
    %390 = vector.broadcast %389 : vector<2x2xi1> to vector<2x2xi1>
    %391 = arith.xori %387, %390 : vector<2x2xi1>
    %392 = arith.andi %391, %385 : vector<2x2xi1>
    %393 = vector.broadcast %381 : i32 to vector<2x2xi32>
    %394 = arith.addi %383, %393 : vector<2x2xi32>
    %395 = arith.select %392, %394, %383 : vector<2x2xi1>, vector<2x2xi32>
    %c2_i32_159 = arith.constant 2 : i32
    %396 = vector.broadcast %c2_i32_159 : i32 to vector<2x2xi32>
    %397 = arith.muli %396, %395 : vector<2x2xi32>
    %398 = arith.subi %379, %397 : vector<2x2xi32>
    %399 = arith.cmpi eq, %371, %398 : vector<2x2xi32>
    %400 = arith.extui %399 : vector<2x2xi1> to vector<2x2xi32>
    %401 = arith.sitofp %400 : vector<2x2xi32> to vector<2x2xf32>
    %cst_160 = arith.constant dense<0xFF800000> : vector<2xf32>
    %402 = vector.multi_reduction <maximumf>, %377, %cst_160 [1] : vector<2x2xf32> to vector<2xf32>
    %403 = vector.shape_cast %402 : vector<2xf32> to vector<2x1xf32>
    %404 = vector.broadcast %403 : vector<2x1xf32> to vector<2x2xf32>
    %405 = arith.subf %377, %404 : vector<2x2xf32>
    %406 = math.exp %405 : vector<2x2xf32>
    %cst_161 = arith.constant dense<0.000000e+00> : vector<2xf32>
    %407 = vector.multi_reduction <add>, %406, %cst_161 [1] : vector<2x2xf32> to vector<2xf32>
    %408 = vector.shape_cast %407 : vector<2xf32> to vector<2x1xf32>
    %409 = math.log %408 : vector<2x1xf32>
    %410 = arith.addf %409, %403 : vector<2x1xf32>
    %411 = vector.broadcast %410 : vector<2x1xf32> to vector<2x2xf32>
    %412 = arith.subf %377, %411 : vector<2x2xf32>
    %413 = arith.mulf %401, %412 : vector<2x2xf32>
    %cst_162 = arith.constant dense<0.000000e+00> : vector<2xf32>
    %414 = vector.multi_reduction <add>, %413, %cst_162 [1] : vector<2x2xf32> to vector<2xf32>
    %415 = vector.shape_cast %414 : vector<2xf32> to vector<2x1xf32>
    %cst_163 = arith.constant 0.000000e+00 : f32
    %416 = vector.broadcast %cst_163 : f32 to vector<2x1xf32>
    %417 = arith.subf %416, %415 : vector<2x1xf32>
    %418 = tpu.iota {dimensions = array<i32: 1>} : vector<16x2xi32>
    %419 = vector.broadcast %4 : vector<16x1xi32> to vector<16x2xi32>
    %420 = arith.cmpi eq, %418, %419 : vector<16x2xi32>
    %421 = arith.extui %420 : vector<16x2xi1> to vector<16x2xi32>
    %422 = arith.sitofp %421 : vector<16x2xi32> to vector<16x2xf32>
    %cst_164 = arith.constant dense<0.000000e+00> : vector<2x2xf32>
    %423 = tpu.matmul %344, %422, %cst_164 {dimension_numbers = #tpu.dot_dimension_numbers<[1], [0], [0], [1], [0, 0, 1, 1], [], []>} : vector<2x16xf32>, vector<16x2xf32>, vector<2x2xf32> -> vector<2x2xf32>
    %cst_165 = arith.constant dense<0xFF800000> : vector<2xf32>
    %424 = vector.multi_reduction <maximumf>, %359, %cst_165 [1] : vector<2x2xf32> to vector<2xf32>
    %425 = vector.shape_cast %424 : vector<2xf32> to vector<2x1xf32>
    %426 = vector.broadcast %425 : vector<2x1xf32> to vector<2x2xf32>
    %427 = arith.subf %359, %426 : vector<2x2xf32>
    %428 = math.exp %427 : vector<2x2xf32>
    %cst_166 = arith.constant dense<0.000000e+00> : vector<2xf32>
    %429 = vector.multi_reduction <add>, %428, %cst_166 [1] : vector<2x2xf32> to vector<2xf32>
    %430 = vector.shape_cast %429 : vector<2xf32> to vector<2x1xf32>
    %431 = math.log %430 : vector<2x1xf32>
    %432 = arith.addf %431, %425 : vector<2x1xf32>
    %433 = vector.broadcast %432 : vector<2x1xf32> to vector<2x2xf32>
    %434 = arith.subf %359, %433 : vector<2x2xf32>
    %435 = arith.mulf %423, %434 : vector<2x2xf32>
    %cst_167 = arith.constant dense<0.000000e+00> : vector<2xf32>
    %436 = vector.multi_reduction <add>, %435, %cst_167 [1] : vector<2x2xf32> to vector<2xf32>
    %437 = vector.shape_cast %436 : vector<2xf32> to vector<2x1xf32>
    %cst_168 = arith.constant 0.000000e+00 : f32
    %438 = vector.broadcast %cst_168 : f32 to vector<2x1xf32>
    %439 = arith.subf %438, %437 : vector<2x1xf32>
    %cst_169 = arith.constant dense<0.000000e+00> : vector<1xf32>
    %440 = vector.multi_reduction <add>, %439, %cst_169 [0] : vector<2x1xf32> to vector<1xf32>
    %441 = vector.shape_cast %440 : vector<1xf32> to vector<1x1xf32>
    %cst_170 = arith.constant dense<0.000000e+00> : vector<1xf32>
    %442 = vector.multi_reduction <add>, %417, %cst_170 [0] : vector<2x1xf32> to vector<1xf32>
    %443 = vector.shape_cast %442 : vector<1xf32> to vector<1x1xf32>
    %cst_171 = arith.constant 5.000000e-01 : f32
    %444 = vector.broadcast %cst_171 : f32 to vector<1x1xf32>
    %445 = arith.mulf %444, %443 : vector<1x1xf32>
    %446 = arith.addf %441, %445 : vector<1x1xf32>
    %cst_172 = arith.constant 5.000000e-01 : f32
    %447 = vector.broadcast %cst_172 : f32 to vector<1x1xf32>
    %448 = arith.mulf %446, %447 : vector<1x1xf32>
    %c0_173 = arith.constant 0 : index
    %c0_174 = arith.constant 0 : index
    %449 = vector.load %arg10[%c0_173, %c0_174] : memref<1x1xf32, #tpu.memory_space<vmem>>, vector<1x1xf32>
    tpu.vector_store %arg10[%c0_173, %c0_174], %448 {strides = array<i32>} : memref<1x1xf32, #tpu.memory_space<vmem>>, vector<1x1xf32>,
    return
  }
}

</mosaic_0001>

<llo_original>
// kernel: tpu_custom_call.1
$region0: #{tpu_custom_call.1}
  #allocation0 [shape = 'u32[]', space=smem, size = 0x4, offset = 0x4, fixed_abs, tag = 'smem constant byte address 0x4 - core index']
  #allocation1 [shape = 'u32[144,128]{1,0:T(1,128)}', space=vmem, size = 0x12000, scoped, tag = 'internal scratch']
  %s0 = inlined_call_operand.vmem [shape: s32[16,3], index: 0, kind: input, shape index: {}]
  %s1 = inlined_call_operand.vmem [shape: f32[32,32], index: 1, kind: input, shape index: {}]
  %s2 = inlined_call_operand.vmem [shape: f32[130,32], index: 2, kind: input, shape index: {}]
  %s3 = inlined_call_operand.vmem [shape: f32[6,32,16], index: 3, kind: input, shape index: {}]
  %s4 = inlined_call_operand.vmem [shape: bf16[12,32,16], index: 4, kind: input, shape index: {}]
  %s5 = inlined_call_operand.vmem [shape: bf16[4,16,32], index: 5, kind: input, shape index: {}]
  %s6 = inlined_call_operand.vmem [shape: bf16[2,32,64], index: 6, kind: input, shape index: {}]
  %s7 = inlined_call_operand.vmem [shape: bf16[2,64,32], index: 7, kind: input, shape index: {}]
  %s8 = inlined_call_operand.vmem [shape: bf16[64,32], index: 8, kind: input, shape index: {}]
  %s9 = inlined_call_operand.hbm [shape: f32[2,2], index: 9, kind: output, shape index: {0}]
  %s10 = inlined_call_operand.hbm [shape: f32[1,1], index: 10, kind: output, shape index: {1}]
  %11 = xla_tuple %s9, %s10
  %s12 = sld [smem:[#allocation0]]
  $region54: #{tpu_custom_call.1} parent=0
    _
  %s14 = ssub.s32 1, %s12
  %s15 = scalar_select 0, %s14, %s12
  $region1: #{tpu_custom_call.1} parent=0
    #allocation2 [shape = 'u8[1024]{0}', space=vmem, size = 0x400, scoped, tag = 'output window, operand 0, single buffered']
    #allocation3 [shape = 's32[1]{0}', space=sflag, size = 0x4, scoped, tag = 'scoped memory for tpu_custom_call.1']
    #allocation4 [shape = 'u8[512]{0}', space=vmem, size = 0x400, scoped, tag = 'output window, operand 1, single buffered']
    #allocation5 [shape = 's32[1]{0}', space=sflag, size = 0x4, scoped, tag = 'scoped memory for tpu_custom_call.1']
    %16 = vsyncpa [#allocation3], 0
    %17 = vsyncpa [#allocation5], 0
    // Predicated region
    $region2: #{tpu_custom_call.1} parent=1 // pred_check
      _
    $region3: #{tpu_custom_call.1} parent=1 // pred_check_branch
      %19 = sbr.rel (0) target = $region5
    $region4: #{tpu_custom_call.1} parent=1 // pred_region
      _
    $region5: #{tpu_custom_call.1} parent=1 // pred_fallthru
      _
    // Predicated region
    $region6: #{tpu_custom_call.1} parent=1 // pred_check
      _
    $region7: #{tpu_custom_call.1} parent=1 // pred_check_branch
      %21 = sbr.rel (0) target = $region9
    $region8: #{tpu_custom_call.1} parent=1 // pred_region
      _
    $region9: #{tpu_custom_call.1} parent=1 // pred_fallthru
      _
    // Predicated region
    $region10: #{tpu_custom_call.1} parent=1 // pred_check
      _
    $region11: #{tpu_custom_call.1} parent=1 // pred_check_branch
      %23 = sbr.rel (0) target = $region13
    $region12: #{tpu_custom_call.1} parent=1 // pred_region
      _
    $region13: #{tpu_custom_call.1} parent=1 // pred_fallthru
      _
    // Predicated region
    $region14: #{tpu_custom_call.1} parent=1 // pred_check
      _
    $region15: #{tpu_custom_call.1} parent=1 // pred_check_branch
      %25 = sbr.rel (0) target = $region17
    $region16: #{tpu_custom_call.1} parent=1 // pred_region
      _
    $region17: #{tpu_custom_call.1} parent=1 // pred_fallthru
      _
    // Predicated region
    $region18: #{tpu_custom_call.1} parent=1 // pred_check
      _
    $region19: #{tpu_custom_call.1} parent=1 // pred_check_branch
      %27 = sbr.rel (0) target = $region21
    $region20: #{tpu_custom_call.1} parent=1 // pred_region
      _
    $region21: #{tpu_custom_call.1} parent=1 // pred_fallthru
      _
    // Predicated region
    $region22: #{tpu_custom_call.1} parent=1 // pred_check
      _
    $region23: #{tpu_custom_call.1} parent=1 // pred_check_branch
      %29 = sbr.rel (0) target = $region25
    $region24: #{tpu_custom_call.1} parent=1 // pred_region
      _
    $region25: #{tpu_custom_call.1} parent=1 // pred_fallthru
      _
    // Predicated region
    $region26: #{tpu_custom_call.1} parent=1 // pred_check
      _
    $region27: #{tpu_custom_call.1} parent=1 // pred_check_branch
      %31 = sbr.rel (0) target = $region29
    $region28: #{tpu_custom_call.1} parent=1 // pred_region
      _
    $region29: #{tpu_custom_call.1} parent=1 // pred_fallthru
      _
    // Predicated region
    $region30: #{tpu_custom_call.1} parent=1 // pred_check
      _
    $region31: #{tpu_custom_call.1} parent=1 // pred_check_branch
      %33 = sbr.rel (0) target = $region33
    $region32: #{tpu_custom_call.1} parent=1 // pred_region
      _
    $region33: #{tpu_custom_call.1} parent=1 // pred_fallthru
      _
    // Predicated region
    $region34: #{tpu_custom_call.1} parent=1 // pred_check
      _
    $region35: #{tpu_custom_call.1} parent=1 // pred_check_branch
      %35 = sbr.rel (0) target = $region37
    $region36: #{tpu_custom_call.1} parent=1 // pred_region
      _
    $region37: #{tpu_custom_call.1} parent=1 // pred_fallthru
      _
    %v37 = vld [vmem:[%s2] sm:$0xff]
    %v38 = vld [vmem:[%s2 + $0x8] sm:$0xff]
    %v39 = vld [vmem:[%s2 + $0x10] sm:$0xff]
    %v40 = vld [vmem:[%s2 + $0x18] sm:$0xff]
    %v41 = vld [vmem:[%s2 + $0x20] sm:$0xff]
    %v42 = vld [vmem:[%s2 + $0x28] sm:$0xff]
    %v43 = vld [vmem:[%s2 + $0x30] sm:$0xff]
    %v44 = vld [vmem:[%s2 + $0x38] sm:$0xff]
    %v45 = vld [vmem:[%s2 + $0x40] sm:$0xff]
    %v46 = vld [vmem:[%s2 + $0x48] sm:$0xff]
    %v47 = vld [vmem:[%s2 + $0x50] sm:$0xff]
    %v48 = vld [vmem:[%s2 + $0x58] sm:$0xff]
    %v49 = vld [vmem:[%s2 + $0x60] sm:$0xff]
    %v50 = vld [vmem:[%s2 + $0x68] sm:$0xff]
    %v51 = vld [vmem:[%s2 + $0x70] sm:$0xff]
    %v52 = vld [vmem:[%s2 + $0x78] sm:$0xff]
    %v53 = vld [vmem:[%s2 + $0x80] sm:$0x3]
    %v54 = vld [vmem:[%s0] sm:$0xff]
    %v55 = vld [vmem:[%s0 + $0x8] sm:$0xff]
    %v56 = vlaneseq
    %v57 = vand.u32 %v56, 127
    %v58 = vadd.s32 %v57, 128
    %v59 = vlaneseq
    %v60 = vshrl.u32 %v59, 7
    %v61 = vadd.s32 %v60, 8
    %62 = vset.pattern.permute.xlu0 0
    %63 = vperm.xlu0 %62, %v54
    %v64 = vpop.permute.xlu0 %63
    %65 = vset.pattern.permute.xlu0 0
    %66 = vperm.xlu0 %65, %v55
    %v67 = vpop.permute.xlu0 %66
    %vm68 = vcmp.eq.s32.totalorder %v57, %v64
    %vm69 = vcmp.eq.s32.totalorder %v58, %v64
    %vm70 = vcmp.eq.s32.totalorder %v57, %v67
    %vm71 = vcmp.eq.s32.totalorder %v58, %v67
    %vm72 = vcmp.lt.s32.totalorder %v60, 0
    %v73 = vsub.s32 0, %v60
    %v74 = vsel %vm72, %v73, %v60
    %v75 = vshrl.u32 %v74, 3
    %v76 = vand.u32 %v74, 7
    %v77 = vsub.s32 0, %v76
    %v78 = vsel %vm72, %v77, %v76
    %vm79 = vcmp.lt.s32.totalorder %v61, 0
    %v80 = vsub.s32 0, %v61
    %v81 = vsel %vm79, %v80, %v61
    %v82 = vshrl.u32 %v81, 3
    %v83 = vand.u32 %v81, 7
    %v84 = vsub.s32 0, %v83
    %v85 = vsel %vm79, %v84, %v83
    %vm86 = vcmp.ne.s32.totalorder %v78, 0
    %vm87 = vcmp.ne.s32.totalorder %v85, 0
    %vm88 = vcmp.lt.s32.totalorder %v78, 0
    %vm89 = vcmp.lt.s32.totalorder %v85, 0
    %vm90 = vmand %vm88, %vm86
    %vm91 = vmand %vm89, %vm87
    %v92 = vadd.s32 %v78, 8
    %v93 = vadd.s32 %v85, 8
    %v94 = vsel %vm90, %v92, %v78
    %v95 = vsel %vm91, %v93, %v85
    %v96 = vadd.s32 %v94, 100
    %v97 = vadd.s32 %v95, 100
    %vm98 = vcmp.eq.s32.totalorder %v57, %v96
    %vm99 = vcmp.eq.s32.totalorder %v58, %v96
    %vm100 = vcmp.eq.s32.totalorder %v57, %v97
    %vm101 = vcmp.eq.s32.totalorder %v58, %v97
    %vm102 = vmor %vm68, %vm98
    %vm103 = vmor %vm69, %vm99
    %vm104 = vmor %vm70, %vm100
    %vm105 = vmor %vm71, %vm101
    %v106 = vadd.s32 %v54, 108
    %v107 = vadd.s32 %v55, 108
    %108 = vset.pattern.permute.xlu0 1
    %109 = vperm.xlu0 %108, %v106
    %v110 = vpop.permute.xlu0 %109
    %111 = vset.pattern.permute.xlu0 1
    %112 = vperm.xlu0 %111, %v107
    %v113 = vpop.permute.xlu0 %112
    %vm114 = vcmp.eq.s32.totalorder %v57, %v110
    %vm115 = vcmp.eq.s32.totalorder %v58, %v110
    %vm116 = vcmp.eq.s32.totalorder %v57, %v113
    %vm117 = vcmp.eq.s32.totalorder %v58, %v113
    %vm118 = vmor %vm102, %vm114
    %vm119 = vmor %vm103, %vm115
    %vm120 = vmor %vm104, %vm116
    %vm121 = vmor %vm105, %vm117
    %v122 = vsel %vm118, 1, 0
    %v123 = vsel %vm119, 1, 0
    %v124 = vsel %vm120, 1, 0
    %v125 = vsel %vm121, 1, 0
    %v126 = vcvt.s32.f32 %v122
    %v127 = vcvt.s32.f32 %v123
    %v128 = vcvt.s32.f32 %v124
    %v129 = vcvt.s32.f32 %v125
    %vm130 = vcmask 15360
    %v132 = vsel %vm130, %v127, 0
    %v135 = vsel %vm130, %v129, 0
    %vm137 = vcmask 1041408
    %v139 = vsel %vm137, %v53, 0
    %141 = vmatprep.subr.mxu0 0.0
    %142 = vmatpush1.msra.mxu0 %v37
    %143 = vmatprep.subr.mxu0 0.0
    %144 = vmatpush1.msra.mxu0 %v38
    %145 = vmatprep.subr.mxu0 0.0
    %146 = vmatpush1.msra.mxu0 %v39
    %147 = vmatprep.subr.mxu0 0.0
    %148 = vmatpush1.msra.mxu0 %v40
    %149 = vmatprep.subr.mxu0 0.0
    %150 = vmatpush1.msra.mxu0 %v41
    %151 = vmatprep.subr.mxu0 0.0
    %152 = vmatpush1.msra.mxu0 %v42
    %153 = vmatprep.subr.mxu0 0.0
    %154 = vmatpush1.msra.mxu0 %v43
    %155 = vmatprep.subr.mxu0 0.0
    %156 = vmatpush1.msra.mxu0 %v44
    %157 = vmatprep.subr.mxu0 0.0
    %158 = vmatpush1.msra.mxu0 %v45
    %159 = vmatprep.subr.mxu0 0.0
    %160 = vmatpush1.msra.mxu0 %v46
    %161 = vmatprep.subr.mxu0 0.0
    %162 = vmatpush1.msra.mxu0 %v47
    %163 = vmatprep.subr.mxu0 0.0
    %164 = vmatpush1.msra.mxu0 %v48
    %165 = vmatprep.subr.mxu0 0.0
    %166 = vmatpush1.msra.mxu0 %v49
    %167 = vmatprep.subr.mxu0 0.0
    %168 = vmatpush1.msra.mxu0 %v50
    %169 = vmatprep.subr.mxu0 0.0
    %170 = vmatpush1.msra.mxu0 %v51
    %171 = vmatprep.subr.mxu0 0.0
    %172 = vmatpush1.msra.mxu0 %v52
    %173 = vmatprep.subr.mxu0 0.0
    %174 = vmatpush1.msra.mxu0 %v139
    %175 = vmatprep.subr.mxu0 0.0
    %176 = vmatpush1.msra.mxu0 0.0
    %177 = vmatprep.subr.mxu0 0.0
    %178 = vmatpush1.msra.mxu0 0.0
    %179 = vmatprep.subr.mxu0 0.0
    %180 = vmatpush1.msra.mxu0 0.0
    %181 = vmatprep.subr.mxu0 0.0
    %182 = vmatpush1.msra.mxu0 0.0
    %183 = vmatprep.subr.mxu0 0.0
    %184 = vmatpush1.msra.mxu0 0.0
    %185 = vmatprep.subr.mxu0 0.0
    %186 = vmatpush1.msra.mxu0 0.0
    %187 = vmatprep.subr.mxu0 0.0
    %188 = vmatpush1.msra.mxu0 0.0
    %189 = vmatprep.subr.mxu0 0.0
    %190 = vmatpush1.msra.mxu0 0.0
    %191 = vmatprep.subr.mxu0 0.0
    %192 = vmatpush1.msra.mxu0 0.0
    %193 = vmatprep.subr.mxu0 0.0
    %194 = vmatpush1.msra.mxu0 0.0
    %195 = vmatprep.subr.mxu0 0.0
    %196 = vmatpush1.msra.mxu0 0.0
    %197 = vmatprep.subr.mxu0 0.0
    %198 = vmatpush1.msra.mxu0 0.0
    %199 = vmatprep.subr.mxu0 0.0
    %200 = vmatpush1.msra.mxu0 0.0
    %201 = vmatprep.subr.mxu0 0.0
    %202 = vmatpush1.msra.mxu0 0.0
    %203 = vmatprep.subr.mxu0 0.0
    %204 = vmatpush1.msra.mxu0 0.0
    %205 = vmatprep.mubr.f32.mxu0 %v132
    %206 = vmatmul.mubr.f32.gmra.mrb[0].mxu0 %v126
    %v207 = vpop.f32.mrb[0].mxu0
    %v208 = vadd.f32 0.0, %v207
    %v209 = vpop.f32.mrb[0].mxu0
    %210 = vmatprep.mubr.f32.mxu0 %v135
    %211 = vmatmul.mubr.f32.gmra.mrb[0].mxu0 %v128
    %v212 = vpop.f32.mrb[0].mxu0
    %v213 = vadd.f32 0.0, %v212
    %v214 = vpop.f32.mrb[0].mxu0
    %215 = vdwg.mxu0
    %vm216 = vcmask 261120
    %v217 = vsel %vm216, %v208, 0.0
    %218 = vadd.xlane.f32.xlu0 %v217
    %v219 = vpop.xlane.xlu0 %218
    %v220 = vsel %vm216, %v213, 0.0
    %221 = vadd.xlane.f32.xlu0 %v220
    %v222 = vpop.xlane.xlu0 %221
    %v223 = vrcp.pop 32.0
    %v224 = vmul.f32 %v219, %v223
    %v225 = vmul.f32 %v222, %v223
    %v226 = vsub.f32 %v208, %v224
    %v227 = vsub.f32 %v213, %v225
    %v228 = vmul.f32 %v226, %v226
    %v229 = vmul.f32 %v227, %v227
    %v230 = vsel %vm216, %v228, 0.0
    %231 = vadd.xlane.f32.xlu0 %v230
    %v232 = vpop.xlane.xlu0 %231
    %v233 = vsel %vm216, %v229, 0.0
    %234 = vadd.xlane.f32.xlu0 %v233
    %v235 = vpop.xlane.xlu0 %234
    %v236 = vmul.f32 %v232, %v223
    %v237 = vmul.f32 %v235, %v223
    %v238 = vadd.f32 %v236, 1e-12
    %v239 = vadd.f32 %v237, 1e-12
    %v240 = vrsqrt.pop %v238
    %v241 = vrsqrt.pop %v239
    %v242 = vmul.f32 %v226, %v240
    %v243 = vmul.f32 %v227, %v241
    %v244 = vlaneseq
    %v245 = vshrl.u32 %v244, 7
    %v246 = vsub.s32 6, %v245
    %v247 = vrot.slane %v50, %v246
    %v248 = vmul.f32 %v242, %v247
    %v249 = vmul.f32 %v243, %v247
    %v250 = vlaneseq
    %v251 = vshrl.u32 %v250, 7
    %v252 = vsub.s32 7, %v251
    %v253 = vrot.slane %v50, %v252
    %v254 = vadd.f32 %v248, %v253
    %v255 = vadd.f32 %v249, %v253
    %v256 = vld [vmem:[%s1] sm:$0xff]
    %v257 = vld [vmem:[%s1 + $0x8] sm:$0xff]
    %v258 = vld [vmem:[%s1 + $0x10] sm:$0xff]
    %v259 = vld [vmem:[%s1 + $0x18] sm:$0xff]
    %v260 = vpack.c.bf16 %v255, %v254
    %v261 = vld [vmem:[%s4] sm:$0xf]
    %v262 = vld [vmem:[%s4 + $0x4] sm:$0xf]
    %v263 = vld [vmem:[%s4 + $0x8] sm:$0xf]
    %v264 = vld [vmem:[%s4 + $0xc] sm:$0xf]
    %v269 = vunpack.c.l.b16 %v261
    %v270 = vunpack.c.l.b16 %v262
    %v271 = vunpack.c.l.b16 %v263
    %v272 = vunpack.c.l.b16 %v264
    %v273 = vpack.c.b16 %v270, %v269
    %v274 = vpack.c.b16 %v272, %v271
    %v278 = vsel %vm216, %v260, 0
    %280 = vmatprep.subr.bf16.mxu0 0
    %281 = vmatpush1.bf16.msra.mxu0 %v273
    %282 = vmatprep.subr.bf16.mxu0 0
    %283 = vmatpush1.bf16.msra.mxu0 %v274
    %284 = vmatprep.subr.bf16.mxu0 0
    %285 = vmatpush1.bf16.msra.mxu0 0
    %286 = vmatprep.subr.bf16.mxu0 0
    %287 = vmatpush1.bf16.msra.mxu0 0
    %288 = vmatprep.subr.bf16.mxu0 0
    %289 = vmatpush1.bf16.msra.mxu0 0
    %290 = vmatprep.subr.bf16.mxu0 0
    %291 = vmatpush1.bf16.msra.mxu0 0
    %292 = vmatprep.subr.bf16.mxu0 0
    %293 = vmatpush1.bf16.msra.mxu0 0
    %294 = vmatprep.subr.bf16.mxu0 0
    %295 = vmatpush1.bf16.msra.mxu0 0
    %296 = vmatprep.subr.bf16.mxu0 0
    %297 = vmatpush1.bf16.msra.mxu0 0
    %298 = vmatprep.subr.bf16.mxu0 0
    %299 = vmatpush1.bf16.msra.mxu0 0
    %300 = vmatprep.subr.bf16.mxu0 0
    %301 = vmatpush1.bf16.msra.mxu0 0
    %302 = vmatprep.subr.bf16.mxu0 0
    %303 = vmatpush1.bf16.msra.mxu0 0
    %304 = vmatprep.subr.bf16.mxu0 0
    %305 = vmatpush1.bf16.msra.mxu0 0
    %306 = vmatprep.subr.bf16.mxu0 0
    %307 = vmatpush1.bf16.msra.mxu0 0
    %308 = vmatprep.subr.bf16.mxu0 0
    %309 = vmatpush1.bf16.msra.mxu0 0
    %310 = vmatprep.subr.bf16.mxu0 0
    %311 = vmatpush1.bf16.msra.mxu0 0
    %312 = vmatprep.mubr.bf16.mxu0 0
    %313 = vmatmul.mubr.bf16.gmra.mrb[0].mxu0 %v278
    %v314 = vpop.f32.mrb[0].mxu0
    %v315 = vadd.f32 0.0, %v314
    %v316 = vpop.f32.mrb[0].mxu0
    %v317 = vpop.f32.mrb[0].mxu0
    %v318 = vadd.f32 0.0, %v317
    %v319 = vpop.f32.mrb[0].mxu0
    %320 = vdwg.mxu0
    %s321 = scalar_lea.vmem %s4, 16
    %v322 = vld [vmem:[%s321] sm:$0xf]
    %v323 = vld [vmem:[%s321 + $0x4] sm:$0xf]
    %v324 = vld [vmem:[%s321 + $0x8] sm:$0xf]
    %v325 = vld [vmem:[%s321 + $0xc] sm:$0xf]
    %v330 = vunpack.c.l.b16 %v322
    %v331 = vunpack.c.l.b16 %v323
    %v332 = vunpack.c.l.b16 %v324
    %v333 = vunpack.c.l.b16 %v325
    %v334 = vpack.c.b16 %v331, %v330
    %v335 = vpack.c.b16 %v333, %v332
    %338 = vmatprep.subr.bf16.mxu0 0
    %339 = vmatpush1.bf16.msra.mxu0 %v334
    %340 = vmatprep.subr.bf16.mxu0 0
    %341 = vmatpush1.bf16.msra.mxu0 %v335
    %342 = vmatprep.subr.bf16.mxu0 0
    %343 = vmatpush1.bf16.msra.mxu0 0
    %344 = vmatprep.subr.bf16.mxu0 0
    %345 = vmatpush1.bf16.msra.mxu0 0
    %346 = vmatprep.subr.bf16.mxu0 0
    %347 = vmatpush1.bf16.msra.mxu0 0
    %348 = vmatprep.subr.bf16.mxu0 0
    %349 = vmatpush1.bf16.msra.mxu0 0
    %350 = vmatprep.subr.bf16.mxu0 0
    %351 = vmatpush1.bf16.msra.mxu0 0
    %352 = vmatprep.subr.bf16.mxu0 0
    %353 = vmatpush1.bf16.msra.mxu0 0
    %354 = vmatprep.subr.bf16.mxu0 0
    %355 = vmatpush1.bf16.msra.mxu0 0
    %356 = vmatprep.subr.bf16.mxu0 0
    %357 = vmatpush1.bf16.msra.mxu0 0
    %358 = vmatprep.subr.bf16.mxu0 0
    %359 = vmatpush1.bf16.msra.mxu0 0
    %360 = vmatprep.subr.bf16.mxu0 0
    %361 = vmatpush1.bf16.msra.mxu0 0
    %362 = vmatprep.subr.bf16.mxu0 0
    %363 = vmatpush1.bf16.msra.mxu0 0
    %364 = vmatprep.subr.bf16.mxu0 0
    %365 = vmatpush1.bf16.msra.mxu0 0
    %366 = vmatprep.subr.bf16.mxu0 0
    %367 = vmatpush1.bf16.msra.mxu0 0
    %368 = vmatprep.subr.bf16.mxu0 0
    %369 = vmatpush1.bf16.msra.mxu0 0
    %370 = vmatprep.mubr.bf16.mxu0 0
    %371 = vmatmul.mubr.bf16.gmra.mrb[0].mxu0 %v278
    %v372 = vpop.f32.mrb[0].mxu0
    %v373 = vadd.f32 0.0, %v372
    %v374 = vpop.f32.mrb[0].mxu0
    %v375 = vpop.f32.mrb[0].mxu0
    %v376 = vadd.f32 0.0, %v375
    %v377 = vpop.f32.mrb[0].mxu0
    %378 = vdwg.mxu0
    %v379 = vld [vmem:[%s3] sm:$0xff]
    %v380 = vld [vmem:[%s3 + $0x8] sm:$0xff]
    %v381 = vld [vmem:[%s3 + $0x10] sm:$0xff]
    %v382 = vld [vmem:[%s3 + $0x18] sm:$0xff]
    %v383 = vadd.f32 %v315, %v379
    %v384 = vadd.f32 %v318, %v380
    %v385 = vadd.f32 %v373, %v381
    %v386 = vadd.f32 %v376, %v382
    %s387 = scalar_lea.vmem %s4, 32
    %v388 = vld [vmem:[%s387] sm:$0xf]
    %v389 = vld [vmem:[%s387 + $0x4] sm:$0xf]
    %v390 = vld [vmem:[%s387 + $0x8] sm:$0xf]
    %v391 = vld [vmem:[%s387 + $0xc] sm:$0xf]
    %v396 = vunpack.c.l.b16 %v388
    %v397 = vunpack.c.l.b16 %v389
    %v398 = vunpack.c.l.b16 %v390
    %v399 = vunpack.c.l.b16 %v391
    %v400 = vpack.c.b16 %v397, %v396
    %v401 = vpack.c.b16 %v399, %v398
    %404 = vmatprep.subr.bf16.mxu0 0
    %405 = vmatpush1.bf16.msra.mxu0 %v400
    %406 = vmatprep.subr.bf16.mxu0 0
    %407 = vmatpush1.bf16.msra.mxu0 %v401
    %408 = vmatprep.subr.bf16.mxu0 0
    %409 = vmatpush1.bf16.msra.mxu0 0
    %410 = vmatprep.subr.bf16.mxu0 0
    %411 = vmatpush1.bf16.msra.mxu0 0
    %412 = vmatprep.subr.bf16.mxu0 0
    %413 = vmatpush1.bf16.msra.mxu0 0
    %414 = vmatprep.subr.bf16.mxu0 0
    %415 = vmatpush1.bf16.msra.mxu0 0
    %416 = vmatprep.subr.bf16.mxu0 0
    %417 = vmatpush1.bf16.msra.mxu0 0
    %418 = vmatprep.subr.bf16.mxu0 0
    %419 = vmatpush1.bf16.msra.mxu0 0
    %420 = vmatprep.subr.bf16.mxu0 0
    %421 = vmatpush1.bf16.msra.mxu0 0
    %422 = vmatprep.subr.bf16.mxu0 0
    %423 = vmatpush1.bf16.msra.mxu0 0
    %424 = vmatprep.subr.bf16.mxu0 0
    %425 = vmatpush1.bf16.msra.mxu0 0
    %426 = vmatprep.subr.bf16.mxu0 0
    %427 = vmatpush1.bf16.msra.mxu0 0
    %428 = vmatprep.subr.bf16.mxu0 0
    %429 = vmatpush1.bf16.msra.mxu0 0
    %430 = vmatprep.subr.bf16.mxu0 0
    %431 = vmatpush1.bf16.msra.mxu0 0
    %432 = vmatprep.subr.bf16.mxu0 0
    %433 = vmatpush1.bf16.msra.mxu0 0
    %434 = vmatprep.subr.bf16.mxu0 0
    %435 = vmatpush1.bf16.msra.mxu0 0
    %436 = vmatprep.mubr.bf16.mxu0 0
    %437 = vmatmul.mubr.bf16.gmra.mrb[0].mxu0 %v278
    %v438 = vpop.f32.mrb[0].mxu0
    %v439 = vadd.f32 0.0, %v438
    %v440 = vpop.f32.mrb[0].mxu0
    %v441 = vpop.f32.mrb[0].mxu0
    %v442 = vadd.f32 0.0, %v441
    %v443 = vpop.f32.mrb[0].mxu0
    %444 = vdwg.mxu0
    %s445 = scalar_lea.vmem %s4, 48
    %v446 = vld [vmem:[%s445] sm:$0xf]
    %v447 = vld [vmem:[%s445 + $0x4] sm:$0xf]
    %v448 = vld [vmem:[%s445 + $0x8] sm:$0xf]
    %v449 = vld [vmem:[%s445 + $0xc] sm:$0xf]
    %v454 = vunpack.c.l.b16 %v446
    %v455 = vunpack.c.l.b16 %v447
    %v456 = vunpack.c.l.b16 %v448
    %v457 = vunpack.c.l.b16 %v449
    %v458 = vpack.c.b16 %v455, %v454
    %v459 = vpack.c.b16 %v457, %v456
    %462 = vmatprep.subr.bf16.mxu0 0
    %463 = vmatpush1.bf16.msra.mxu0 %v458
    %464 = vmatprep.subr.bf16.mxu0 0
    %465 = vmatpush1.bf16.msra.mxu0 %v459
    %466 = vmatprep.subr.bf16.mxu0 0
    %467 = vmatpush1.bf16.msra.mxu0 0
    %468 = vmatprep.subr.bf16.mxu0 0
    %469 = vmatpush1.bf16.msra.mxu0 0
    %470 = vmatprep.subr.bf16.mxu0 0
    %471 = vmatpush1.bf16.msra.mxu0 0
    %472 = vmatprep.subr.bf16.mxu0 0
    %473 = vmatpush1.bf16.msra.mxu0 0
    %474 = vmatprep.subr.bf16.mxu0 0
    %475 = vmatpush1.bf16.msra.mxu0 0
    %476 = vmatprep.subr.bf16.mxu0 0
    %477 = vmatpush1.bf16.msra.mxu0 0
    %478 = vmatprep.subr.bf16.mxu0 0
    %479 = vmatpush1.bf16.msra.mxu0 0
    %480 = vmatprep.subr.bf16.mxu0 0
    %481 = vmatpush1.bf16.msra.mxu0 0
    %482 = vmatprep.subr.bf16.mxu0 0
    %483 = vmatpush1.bf16.msra.mxu0 0
    %484 = vmatprep.subr.bf16.mxu0 0
    %485 = vmatpush1.bf16.msra.mxu0 0
    %486 = vmatprep.subr.bf16.mxu0 0
    %487 = vmatpush1.bf16.msra.mxu0 0
    %488 = vmatprep.subr.bf16.mxu0 0
    %489 = vmatpush1.bf16.msra.mxu0 0
    %490 = vmatprep.subr.bf16.mxu0 0
    %491 = vmatpush1.bf16.msra.mxu0 0
    %492 = vmatprep.subr.bf16.mxu0 0
    %493 = vmatpush1.bf16.msra.mxu0 0
    %494 = vmatprep.mubr.bf16.mxu0 0
    %495 = vmatmul.mubr.bf16.gmra.mrb[0].mxu0 %v278
    %v496 = vpop.f32.mrb[0].mxu0
    %v497 = vadd.f32 0.0, %v496
    %v498 = vpop.f32.mrb[0].mxu0
    %v499 = vpop.f32.mrb[0].mxu0
    %v500 = vadd.f32 0.0, %v499
    %v501 = vpop.f32.mrb[0].mxu0
    %502 = vdwg.mxu0
    %s503 = scalar_lea.vmem %s3, 32
    %v504 = vld [vmem:[%s503] sm:$0xff]
    %v505 = vld [vmem:[%s503 + $0x8] sm:$0xff]
    %v506 = vld [vmem:[%s503 + $0x10] sm:$0xff]
    %v507 = vld [vmem:[%s503 + $0x18] sm:$0xff]
    %v508 = vadd.f32 %v439, %v504
    %v509 = vadd.f32 %v442, %v505
    %v510 = vadd.f32 %v497, %v506
    %v511 = vadd.f32 %v500, %v507
    %s512 = scalar_lea.vmem %s4, 64
    %v513 = vld [vmem:[%s512] sm:$0xf]
    %v514 = vld [vmem:[%s512 + $0x4] sm:$0xf]
    %v515 = vld [vmem:[%s512 + $0x8] sm:$0xf]
    %v516 = vld [vmem:[%s512 + $0xc] sm:$0xf]
    %v521 = vunpack.c.l.b16 %v513
    %v522 = vunpack.c.l.b16 %v514
    %v523 = vunpack.c.l.b16 %v515
    %v524 = vunpack.c.l.b16 %v516
    %v525 = vpack.c.b16 %v522, %v521
    %v526 = vpack.c.b16 %v524, %v523
    %529 = vmatprep.subr.bf16.mxu0 0
    %530 = vmatpush1.bf16.msra.mxu0 %v525
    %531 = vmatprep.subr.bf16.mxu0 0
    %532 = vmatpush1.bf16.msra.mxu0 %v526
    %533 = vmatprep.subr.bf16.mxu0 0
    %534 = vmatpush1.bf16.msra.mxu0 0
    %535 = vmatprep.subr.bf16.mxu0 0
    %536 = vmatpush1.bf16.msra.mxu0 0
    %537 = vmatprep.subr.bf16.mxu0 0
    %538 = vmatpush1.bf16.msra.mxu0 0
    %539 = vmatprep.subr.bf16.mxu0 0
    %540 = vmatpush1.bf16.msra.mxu0 0
    %541 = vmatprep.subr.bf16.mxu0 0
    %542 = vmatpush1.bf16.msra.mxu0 0
    %543 = vmatprep.subr.bf16.mxu0 0
    %544 = vmatpush1.bf16.msra.mxu0 0
    %545 = vmatprep.subr.bf16.mxu0 0
    %546 = vmatpush1.bf16.msra.mxu0 0
    %547 = vmatprep.subr.bf16.mxu0 0
    %548 = vmatpush1.bf16.msra.mxu0 0
    %549 = vmatprep.subr.bf16.mxu0 0
    %550 = vmatpush1.bf16.msra.mxu0 0
    %551 = vmatprep.subr.bf16.mxu0 0
    %552 = vmatpush1.bf16.msra.mxu0 0
    %553 = vmatprep.subr.bf16.mxu0 0
    %554 = vmatpush1.bf16.msra.mxu0 0
    %555 = vmatprep.subr.bf16.mxu0 0
    %556 = vmatpush1.bf16.msra.mxu0 0
    %557 = vmatprep.subr.bf16.mxu0 0
    %558 = vmatpush1.bf16.msra.mxu0 0
    %559 = vmatprep.subr.bf16.mxu0 0
    %560 = vmatpush1.bf16.msra.mxu0 0
    %561 = vmatprep.mubr.bf16.mxu0 0
    %562 = vmatmul.mubr.bf16.gmra.mrb[0].mxu0 %v278
    %v563 = vpop.f32.mrb[0].mxu0
    %v564 = vadd.f32 0.0, %v563
    %v565 = vpop.f32.mrb[0].mxu0
    %v566 = vpop.f32.mrb[0].mxu0
    %v567 = vadd.f32 0.0, %v566
    %v568 = vpop.f32.mrb[0].mxu0
    %569 = vdwg.mxu0
    %s570 = scalar_lea.vmem %s4, 80
    %v571 = vld [vmem:[%s570] sm:$0xf]
    %v572 = vld [vmem:[%s570 + $0x4] sm:$0xf]
    %v573 = vld [vmem:[%s570 + $0x8] sm:$0xf]
    %v574 = vld [vmem:[%s570 + $0xc] sm:$0xf]
    %v579 = vunpack.c.l.b16 %v571
    %v580 = vunpack.c.l.b16 %v572
    %v581 = vunpack.c.l.b16 %v573
    %v582 = vunpack.c.l.b16 %v574
    %v583 = vpack.c.b16 %v580, %v579
    %v584 = vpack.c.b16 %v582, %v581
    %587 = vmatprep.subr.bf16.mxu0 0
    %588 = vmatpush1.bf16.msra.mxu0 %v583
    %589 = vmatprep.subr.bf16.mxu0 0
    %590 = vmatpush1.bf16.msra.mxu0 %v584
    %591 = vmatprep.subr.bf16.mxu0 0
    %592 = vmatpush1.bf16.msra.mxu0 0
    %593 = vmatprep.subr.bf16.mxu0 0
    %594 = vmatpush1.bf16.msra.mxu0 0
    %595 = vmatprep.subr.bf16.mxu0 0
    %596 = vmatpush1.bf16.msra.mxu0 0
    %597 = vmatprep.subr.bf16.mxu0 0
    %598 = vmatpush1.bf16.msra.mxu0 0
    %599 = vmatprep.subr.bf16.mxu0 0
    %600 = vmatpush1.bf16.msra.mxu0 0
    %601 = vmatprep.subr.bf16.mxu0 0
    %602 = vmatpush1.bf16.msra.mxu0 0
    %603 = vmatprep.subr.bf16.mxu0 0
    %604 = vmatpush1.bf16.msra.mxu0 0
    %605 = vmatprep.subr.bf16.mxu0 0
    %606 = vmatpush1.bf16.msra.mxu0 0
    %607 = vmatprep.subr.bf16.mxu0 0
    %608 = vmatpush1.bf16.msra.mxu0 0
    %609 = vmatprep.subr.bf16.mxu0 0
    %610 = vmatpush1.bf16.msra.mxu0 0
    %611 = vmatprep.subr.bf16.mxu0 0
    %612 = vmatpush1.bf16.msra.mxu0 0
    %613 = vmatprep.subr.bf16.mxu0 0
    %614 = vmatpush1.bf16.msra.mxu0 0
    %615 = vmatprep.subr.bf16.mxu0 0
    %616 = vmatpush1.bf16.msra.mxu0 0
    %617 = vmatprep.subr.bf16.mxu0 0
    %618 = vmatpush1.bf16.msra.mxu0 0
    %619 = vmatprep.mubr.bf16.mxu0 0
    %620 = vmatmul.mubr.bf16.gmra.mrb[0].mxu0 %v278
    %v621 = vpop.f32.mrb[0].mxu0
    %v622 = vadd.f32 0.0, %v621
    %v623 = vpop.f32.mrb[0].mxu0
    %v624 = vpop.f32.mrb[0].mxu0
    %v625 = vadd.f32 0.0, %v624
    %v626 = vpop.f32.mrb[0].mxu0
    %627 = vdwg.mxu0
    %s628 = scalar_lea.vmem %s3, 64
    %v629 = vld [vmem:[%s628] sm:$0xff]
    %v630 = vld [vmem:[%s628 + $0x8] sm:$0xff]
    %v631 = vld [vmem:[%s628 + $0x10] sm:$0xff]
    %v632 = vld [vmem:[%s628 + $0x18] sm:$0xff]
    %v633 = vadd.f32 %v564, %v629
    %v634 = vadd.f32 %v567, %v630
    %v635 = vadd.f32 %v622, %v631
    %v636 = vadd.f32 %v625, %v632
    %v637 = vpack.c.bf16 %v384, %v383
    %v638 = vpack.c.bf16 %v386, %v385
    %v639 = vpack.c.bf16 %v509, %v508
    %v640 = vpack.c.bf16 %v511, %v510
    %vm641 = vcmask 130048
    %v643 = vsel %vm641, %v637, 0
    %v646 = vsel %vm641, %v638, 0
    %v649 = vsel %vm641, %v639, 0
    %v652 = vsel %vm641, %v640, 0
    %654 = vmatprep.subr.bf16.mxu0 0
    %655 = vmatpush1.bf16.xpose.msra.mxu0 %v649
    %656 = vmatprep.subr.bf16.mxu0 0
    %657 = vmatpush1.bf16.xpose.msra.mxu0 %v652
    %658 = vmatprep.subr.bf16.mxu0 0
    %659 = vmatpush1.bf16.xpose.msra.mxu0 0
    %660 = vmatprep.subr.bf16.mxu0 0
    %661 = vmatpush1.bf16.xpose.msra.mxu0 0
    %662 = vmatprep.subr.bf16.mxu0 0
    %663 = vmatpush1.bf16.xpose.msra.mxu0 0
    %664 = vmatprep.subr.bf16.mxu0 0
    %665 = vmatpush1.bf16.xpose.msra.mxu0 0
    %666 = vmatprep.subr.bf16.mxu0 0
    %667 = vmatpush1.bf16.xpose.msra.mxu0 0
    %668 = vmatprep.subr.bf16.mxu0 0
    %669 = vmatpush1.bf16.xpose.msra.mxu0 0
    %670 = vmatprep.subr.bf16.mxu0 0
    %671 = vmatpush1.bf16.xpose.msra.mxu0 0
    %672 = vmatprep.subr.bf16.mxu0 0
    %673 = vmatpush1.bf16.xpose.msra.mxu0 0
    %674 = vmatprep.subr.bf16.mxu0 0
    %675 = vmatpush1.bf16.xpose.msra.mxu0 0
    %676 = vmatprep.subr.bf16.mxu0 0
    %677 = vmatpush1.bf16.xpose.msra.mxu0 0
    %678 = vmatprep.subr.bf16.mxu0 0
    %679 = vmatpush1.bf16.xpose.msra.mxu0 0
    %680 = vmatprep.subr.bf16.mxu0 0
    %681 = vmatpush1.bf16.xpose.msra.mxu0 0
    %682 = vmatprep.subr.bf16.mxu0 0
    %683 = vmatpush1.bf16.xpose.msra.mxu0 0
    %684 = vmatprep.subr.bf16.mxu0 0
    %685 = vmatpush1.bf16.xpose.msra.mxu0 0
    %686 = vmatprep.mubr.bf16.mxu0 0
    %687 = vmatmul.mubr.bf16.gmra.mrb[0].mxu0 %v643
    %v688 = vpop.f32.mrb[0].mxu0
    %v689 = vadd.f32 0.0, %v688
    %v690 = vpop.f32.mrb[0].mxu0
    %v691 = vpop.f32.mrb[0].mxu0
    %v692 = vadd.f32 0.0, %v691
    %v693 = vpop.f32.mrb[0].mxu0
    %694 = vmatprep.mubr.bf16.mxu0 0
    %695 = vmatmul.mubr.bf16.gmra.mrb[0].mxu0 %v646
    %v696 = vpop.f32.mrb[0].mxu0
    %v697 = vadd.f32 0.0, %v696
    %v698 = vpop.f32.mrb[0].mxu0
    %v699 = vpop.f32.mrb[0].mxu0
    %v700 = vadd.f32 0.0, %v699
    %v701 = vpop.f32.mrb[0].mxu0
    %702 = vdwg.mxu0
    %v703 = vmul.f32 %v689, 0.25
    %v704 = vmul.f32 %v692, 0.25
    %v705 = vmul.f32 %v697, 0.25
    %v706 = vmul.f32 %v700, 0.25
    %v707 = vadd.f32 %v703, %v256
    %v708 = vadd.f32 %v704, %v257
    %v709 = vadd.f32 %v705, %v258
    %v710 = vadd.f32 %v706, %v259
    %v711 = vsel %vm216, %v707, -inf
    %712 = vmax.xlane.f32.xlu0 %v711
    %v713 = vpop.xlane.xlu0 %712
    %v714 = vsel %vm216, %v708, -inf
    %715 = vmax.xlane.f32.xlu0 %v714
    %v716 = vpop.xlane.xlu0 %715
    %v717 = vsel %vm216, %v709, -inf
    %718 = vmax.xlane.f32.xlu0 %v717
    %v719 = vpop.xlane.xlu0 %718
    %v720 = vsel %vm216, %v710, -inf
    %721 = vmax.xlane.f32.xlu0 %v720
    %v722 = vpop.xlane.xlu0 %721
    %v723 = vsub.f32 %v707, %v713
    %v724 = vsub.f32 %v708, %v716
    %v725 = vsub.f32 %v709, %v719
    %v726 = vsub.f32 %v710, %v722
    %v727 = vmul.f32 %v723, 1.442695
    %v728 = vpow.pop %v727
    %v729 = vmul.f32 %v724, 1.442695
    %v730 = vpow.pop %v729
    %v731 = vmul.f32 %v725, 1.442695
    %v732 = vpow.pop %v731
    %v733 = vmul.f32 %v726, 1.442695
    %v734 = vpow.pop %v733
    %v735 = vsel %vm216, %v728, 0.0
    %736 = vadd.xlane.f32.xlu0 %v735
    %v737 = vpop.xlane.xlu0 %736
    %v738 = vsel %vm216, %v730, 0.0
    %739 = vadd.xlane.f32.xlu0 %v738
    %v740 = vpop.xlane.xlu0 %739
    %v741 = vsel %vm216, %v732, 0.0
    %742 = vadd.xlane.f32.xlu0 %v741
    %v743 = vpop.xlane.xlu0 %742
    %v744 = vsel %vm216, %v734, 0.0
    %745 = vadd.xlane.f32.xlu0 %v744
    %v746 = vpop.xlane.xlu0 %745
    %v747 = vrcp.pop %v737
    %v748 = vmul.f32 %v728, %v747
    %v749 = vrcp.pop %v740
    %v750 = vmul.f32 %v730, %v749
    %v751 = vrcp.pop %v743
    %v752 = vmul.f32 %v732, %v751
    %v753 = vrcp.pop %v746
    %v754 = vmul.f32 %v734, %v753
    %v755 = vpack.c.bf16 %v750, %v748
    %v756 = vpack.c.bf16 %v754, %v752
    %v757 = vpack.c.bf16 %v634, %v633
    %v758 = vpack.c.bf16 %v636, %v635
    %v760 = vsel %vm216, %v755, 0
    %v763 = vsel %vm216, %v756, 0
    %765 = vmatprep.subr.bf16.mxu0 0
    %766 = vmatpush1.bf16.msra.mxu0 %v757
    %767 = vmatprep.subr.bf16.mxu0 0
    %768 = vmatpush1.bf16.msra.mxu0 %v758
    %769 = vmatprep.subr.bf16.mxu0 0
    %770 = vmatpush1.bf16.msra.mxu0 0
    %771 = vmatprep.subr.bf16.mxu0 0
    %772 = vmatpush1.bf16.msra.mxu0 0
    %773 = vmatprep.subr.bf16.mxu0 0
    %774 = vmatpush1.bf16.msra.mxu0 0
    %775 = vmatprep.subr.bf16.mxu0 0
    %776 = vmatpush1.bf16.msra.mxu0 0
    %777 = vmatprep.subr.bf16.mxu0 0
    %778 = vmatpush1.bf16.msra.mxu0 0
    %779 = vmatprep.subr.bf16.mxu0 0
    %780 = vmatpush1.bf16.msra.mxu0 0
    %781 = vmatprep.subr.bf16.mxu0 0
    %782 = vmatpush1.bf16.msra.mxu0 0
    %783 = vmatprep.subr.bf16.mxu0 0
    %784 = vmatpush1.bf16.msra.mxu0 0
    %785 = vmatprep.subr.bf16.mxu0 0
    %786 = vmatpush1.bf16.msra.mxu0 0
    %787 = vmatprep.subr.bf16.mxu0 0
    %788 = vmatpush1.bf16.msra.mxu0 0
    %789 = vmatprep.subr.bf16.mxu0 0
    %790 = vmatpush1.bf16.msra.mxu0 0
    %791 = vmatprep.subr.bf16.mxu0 0
    %792 = vmatpush1.bf16.msra.mxu0 0
    %793 = vmatprep.subr.bf16.mxu0 0
    %794 = vmatpush1.bf16.msra.mxu0 0
    %795 = vmatprep.subr.bf16.mxu0 0
    %796 = vmatpush1.bf16.msra.mxu0 0
    %797 = vmatprep.mubr.bf16.mxu0 0
    %798 = vmatmul.mubr.bf16.gmra.mrb[0].mxu0 %v760
    %v799 = vpop.f32.mrb[0].mxu0
    %v800 = vadd.f32 0.0, %v799
    %v801 = vpop.f32.mrb[0].mxu0
    %v802 = vpop.f32.mrb[0].mxu0
    %v803 = vadd.f32 0.0, %v802
    %v804 = vpop.f32.mrb[0].mxu0
    %805 = vmatprep.mubr.bf16.mxu0 0
    %806 = vmatmul.mubr.bf16.gmra.mrb[0].mxu0 %v763
    %v807 = vpop.f32.mrb[0].mxu0
    %v808 = vadd.f32 0.0, %v807
    %v809 = vpop.f32.mrb[0].mxu0
    %v810 = vpop.f32.mrb[0].mxu0
    %v811 = vadd.f32 0.0, %v810
    %v812 = vpop.f32.mrb[0].mxu0
    %813 = vdwg.mxu0
    %v814 = vpack.c.bf16 %v803, %v800
    %v815 = vld [vmem:[%s5] sm:$0xf]
    %v816 = vld [vmem:[%s5 + $0x4] sm:$0xf]
    %v817 = vpack.c.bf16 %v811, %v808
    %s818 = scalar_lea.vmem %s5, 8
    %v819 = vld [vmem:[%s818] sm:$0xf]
    %v820 = vld [vmem:[%s818 + $0x4] sm:$0xf]
    %v823 = vunpack.c.l.b16 %v819
    %v824 = vunpack.c.l.b16 %v820
    %v825 = vpack.c.b16 %v824, %v823
    %v828 = vsel %vm641, %v817, 0
    %830 = vmatprep.subr.bf16.mxu0 0
    %831 = vmatpush1.bf16.msra.mxu0 %v825
    %832 = vmatprep.subr.bf16.mxu0 0
    %833 = vmatpush1.bf16.msra.mxu0 0
    %834 = vmatprep.subr.bf16.mxu0 0
    %835 = vmatpush1.bf16.msra.mxu0 0
    %836 = vmatprep.subr.bf16.mxu0 0
    %837 = vmatpush1.bf16.msra.mxu0 0
    %838 = vmatprep.subr.bf16.mxu0 0
    %839 = vmatpush1.bf16.msra.mxu0 0
    %840 = vmatprep.subr.bf16.mxu0 0
    %841 = vmatpush1.bf16.msra.mxu0 0
    %842 = vmatprep.subr.bf16.mxu0 0
    %843 = vmatpush1.bf16.msra.mxu0 0
    %844 = vmatprep.subr.bf16.mxu0 0
    %845 = vmatpush1.bf16.msra.mxu0 0
    %846 = vmatprep.subr.bf16.mxu0 0
    %847 = vmatpush1.bf16.msra.mxu0 0
    %848 = vmatprep.subr.bf16.mxu0 0
    %849 = vmatpush1.bf16.msra.mxu0 0
    %850 = vmatprep.subr.bf16.mxu0 0
    %851 = vmatpush1.bf16.msra.mxu0 0
    %852 = vmatprep.subr.bf16.mxu0 0
    %853 = vmatpush1.bf16.msra.mxu0 0
    %854 = vmatprep.subr.bf16.mxu0 0
    %855 = vmatpush1.bf16.msra.mxu0 0
    %856 = vmatprep.subr.bf16.mxu0 0
    %857 = vmatpush1.bf16.msra.mxu0 0
    %858 = vmatprep.subr.bf16.mxu0 0
    %859 = vmatpush1.bf16.msra.mxu0 0
    %860 = vmatprep.subr.bf16.mxu0 0
    %861 = vmatpush1.bf16.msra.mxu0 0
    %862 = vmatprep.mubr.bf16.mxu0 0
    %863 = vmatmul.mubr.bf16.gmra.mrb[0].mxu0 %v828
    %v864 = vpop.f32.mrb[0].mxu0
    %v865 = vadd.f32 0.0, %v864
    %v866 = vpop.f32.mrb[0].mxu0
    %v867 = vpop.f32.mrb[0].mxu0
    %v868 = vadd.f32 0.0, %v867
    %v869 = vpop.f32.mrb[0].mxu0
    %870 = vdwg.mxu0
    %v873 = vunpack.c.l.b16 %v815
    %v874 = vunpack.c.l.b16 %v816
    %v875 = vpack.c.b16 %v874, %v873
    %v878 = vsel %vm641, %v814, 0
    %880 = vmatprep.subr.bf16.mxu0 0
    %881 = vmatpush1.bf16.msra.mxu0 %v875
    %882 = vmatprep.subr.bf16.mxu0 0
    %883 = vmatpush1.bf16.msra.mxu0 0
    %884 = vmatprep.subr.bf16.mxu0 0
    %885 = vmatpush1.bf16.msra.mxu0 0
    %886 = vmatprep.subr.bf16.mxu0 0
    %887 = vmatpush1.bf16.msra.mxu0 0
    %888 = vmatprep.subr.bf16.mxu0 0
    %889 = vmatpush1.bf16.msra.mxu0 0
    %890 = vmatprep.subr.bf16.mxu0 0
    %891 = vmatpush1.bf16.msra.mxu0 0
    %892 = vmatprep.subr.bf16.mxu0 0
    %893 = vmatpush1.bf16.msra.mxu0 0
    %894 = vmatprep.subr.bf16.mxu0 0
    %895 = vmatpush1.bf16.msra.mxu0 0
    %896 = vmatprep.subr.bf16.mxu0 0
    %897 = vmatpush1.bf16.msra.mxu0 0
    %898 = vmatprep.subr.bf16.mxu0 0
    %899 = vmatpush1.bf16.msra.mxu0 0
    %900 = vmatprep.subr.bf16.mxu0 0
    %901 = vmatpush1.bf16.msra.mxu0 0
    %902 = vmatprep.subr.bf16.mxu0 0
    %903 = vmatpush1.bf16.msra.mxu0 0
    %904 = vmatprep.subr.bf16.mxu0 0
    %905 = vmatpush1.bf16.msra.mxu0 0
    %906 = vmatprep.subr.bf16.mxu0 0
    %907 = vmatpush1.bf16.msra.mxu0 0
    %908 = vmatprep.subr.bf16.mxu0 0
    %909 = vmatpush1.bf16.msra.mxu0 0
    %910 = vmatprep.subr.bf16.mxu0 0
    %911 = vmatpush1.bf16.msra.mxu0 0
    %912 = vmatprep.mubr.bf16.mxu0 0
    %913 = vmatmul.mubr.bf16.gmra.mrb[0].mxu0 %v878
    %v914 = vpop.f32.mrb[0].mxu0
    %v915 = vadd.f32 %v865, %v914
    %v916 = vpop.f32.mrb[0].mxu0
    %v917 = vpop.f32.mrb[0].mxu0
    %v918 = vadd.f32 %v868, %v917
    %v919 = vpop.f32.mrb[0].mxu0
    %920 = vdwg.mxu0
    %v921 = vlaneseq
    %v922 = vshrl.u32 %v921, 7
    %v923 = vsub.s32 0, %v922
    %v924 = vrot.slane %v51, %v923
    %v925 = vadd.f32 %v915, %v924
    %v926 = vadd.f32 %v918, %v924
    %v927 = vadd.f32 %v254, %v925
    %v928 = vadd.f32 %v255, %v926
    %v929 = vsel %vm216, %v927, 0.0
    %930 = vadd.xlane.f32.xlu0 %v929
    %v931 = vpop.xlane.xlu0 %930
    %v932 = vsel %vm216, %v928, 0.0
    %933 = vadd.xlane.f32.xlu0 %v932
    %v934 = vpop.xlane.xlu0 %933
    %v935 = vmul.f32 %v931, %v223
    %v936 = vmul.f32 %v934, %v223
    %v937 = vsub.f32 %v927, %v935
    %v938 = vsub.f32 %v928, %v936
    %v939 = vmul.f32 %v937, %v937
    %v940 = vmul.f32 %v938, %v938
    %v941 = vsel %vm216, %v939, 0.0
    %942 = vadd.xlane.f32.xlu0 %v941
    %v943 = vpop.xlane.xlu0 %942
    %v944 = vsel %vm216, %v940, 0.0
    %945 = vadd.xlane.f32.xlu0 %v944
    %v946 = vpop.xlane.xlu0 %945
    %v947 = vmul.f32 %v943, %v223
    %v948 = vmul.f32 %v946, %v223
    %v949 = vadd.f32 %v947, 1e-12
    %v950 = vadd.f32 %v948, 1e-12
    %v951 = vrsqrt.pop %v949
    %v952 = vrsqrt.pop %v950
    %v953 = vmul.f32 %v937, %v951
    %v954 = vmul.f32 %v938, %v952
    %v955 = vlaneseq
    %v956 = vshrl.u32 %v955, 7
    %v957 = vsub.s32 1, %v956
    %v958 = vrot.slane %v51, %v957
    %v959 = vmul.f32 %v953, %v958
    %v960 = vmul.f32 %v954, %v958
    %v961 = vlaneseq
    %v962 = vshrl.u32 %v961, 7
    %v963 = vsub.s32 2, %v962
    %v964 = vrot.slane %v51, %v963
    %v965 = vadd.f32 %v959, %v964
    %v966 = vadd.f32 %v960, %v964
    %v968 = vrot.slane %v51, 1
    %969 = vrot.lane.b32.xlu0 %v968, 32
    %v970 = vpop.permute.xlu0 %969
    %v972 = vsel %vm216, %v51, %v970
    %v973 = vpack.c.bf16 %v966, %v965
    %v974 = vld [vmem:[%s6] sm:$0xf]
    %v975 = vld [vmem:[%s6 + $0x4] sm:$0xf]
    %v976 = vld [vmem:[%s6 + $0x8] sm:$0xf]
    %v977 = vld [vmem:[%s6 + $0xc] sm:$0xf]
    %v978 = vlaneseq
    %v979 = vshrl.u32 %v978, 7
    %v980 = vsub.s32 3, %v979
    %v981 = vrot.slane %v972, %v980
    %v986 = vunpack.c.l.b16 %v974
    %v987 = vunpack.c.l.b16 %v975
    %v988 = vunpack.c.l.b16 %v976
    %v989 = vunpack.c.l.b16 %v977
    %v990 = vpack.c.b16 %v987, %v986
    %v991 = vpack.c.b16 %v989, %v988
    %v995 = vsel %vm216, %v973, 0
    %997 = vmatprep.subr.bf16.mxu0 0
    %998 = vmatpush1.bf16.msra.mxu0 %v990
    %999 = vmatprep.subr.bf16.mxu0 0
    %1000 = vmatpush1.bf16.msra.mxu0 %v991
    %1001 = vmatprep.subr.bf16.mxu0 0
    %1002 = vmatpush1.bf16.msra.mxu0 0
    %1003 = vmatprep.subr.bf16.mxu0 0
    %1004 = vmatpush1.bf16.msra.mxu0 0
    %1005 = vmatprep.subr.bf16.mxu0 0
    %1006 = vmatpush1.bf16.msra.mxu0 0
    %1007 = vmatprep.subr.bf16.mxu0 0
    %1008 = vmatpush1.bf16.msra.mxu0 0
    %1009 = vmatprep.subr.bf16.mxu0 0
    %1010 = vmatpush1.bf16.msra.mxu0 0
    %1011 = vmatprep.subr.bf16.mxu0 0
    %1012 = vmatpush1.bf16.msra.mxu0 0
    %1013 = vmatprep.subr.bf16.mxu0 0
    %1014 = vmatpush1.bf16.msra.mxu0 0
    %1015 = vmatprep.subr.bf16.mxu0 0
    %1016 = vmatpush1.bf16.msra.mxu0 0
    %1017 = vmatprep.subr.bf16.mxu0 0
    %1018 = vmatpush1.bf16.msra.mxu0 0
    %1019 = vmatprep.subr.bf16.mxu0 0
    %1020 = vmatpush1.bf16.msra.mxu0 0
    %1021 = vmatprep.subr.bf16.mxu0 0
    %1022 = vmatpush1.bf16.msra.mxu0 0
    %1023 = vmatprep.subr.bf16.mxu0 0
    %1024 = vmatpush1.bf16.msra.mxu0 0
    %1025 = vmatprep.subr.bf16.mxu0 0
    %1026 = vmatpush1.bf16.msra.mxu0 0
    %1027 = vmatprep.subr.bf16.mxu0 0
    %1028 = vmatpush1.bf16.msra.mxu0 0
    %1029 = vmatprep.mubr.bf16.mxu0 0
    %1030 = vmatmul.mubr.bf16.gmra.mrb[0].mxu0 %v995
    %v1031 = vpop.f32.mrb[0].mxu0
    %v1032 = vadd.f32 %v981, %v1031
    %v1033 = vpop.f32.mrb[0].mxu0
    %v1034 = vpop.f32.mrb[0].mxu0
    %v1035 = vadd.f32 %v981, %v1034
    %v1036 = vpop.f32.mrb[0].mxu0
    %1037 = vdwg.mxu0
    %v1038 = vmul.f32 %v1032, 0.5
    %v1039 = vmul.f32 %v1035, 0.5
    %v1040 = vmul.f32 %v1032, 0.044715
    %v1041 = vmul.f32 %v1035, 0.044715
    %v1042 = vmul.f32 %v1040, %v1032
    %v1043 = vmul.f32 %v1041, %v1035
    %v1044 = vmul.f32 %v1042, %v1032
    %v1045 = vmul.f32 %v1043, %v1035
    %v1046 = vadd.f32 %v1032, %v1044
    %v1047 = vadd.f32 %v1035, %v1045
    %v1048 = vmul.f32 %v1046, 0.7978846
    %v1049 = vmul.f32 %v1047, 0.7978846
    %v1050 = vtanh.pop %v1048
    %v1051 = vtanh.pop %v1049
    %v1052 = vadd.f32 %v1050, 1.0
    %v1053 = vadd.f32 %v1051, 1.0
    %v1054 = vmul.f32 %v1038, %v1052
    %v1055 = vmul.f32 %v1039, %v1053
    %v1056 = vpack.c.bf16 %v1055, %v1054
    %v1057 = vld [vmem:[%s7] sm:$0xf]
    %v1058 = vld [vmem:[%s7 + $0x4] sm:$0xf]
    %v1059 = vld [vmem:[%s7 + $0x8] sm:$0xf]
    %v1060 = vld [vmem:[%s7 + $0xc] sm:$0xf]
    %v1061 = vld [vmem:[%s7 + $0x10] sm:$0xf]
    %v1062 = vld [vmem:[%s7 + $0x14] sm:$0xf]
    %v1063 = vld [vmem:[%s7 + $0x18] sm:$0xf]
    %v1064 = vld [vmem:[%s7 + $0x1c] sm:$0xf]
    %v1065 = vlaneseq
    %v1066 = vshrl.u32 %v1065, 7
    %v1067 = vsub.s32 5, %v1066
    %v1068 = vrot.slane %v51, %v1067
    %v1077 = vunpack.c.l.b16 %v1057
    %v1078 = vunpack.c.l.b16 %v1058
    %v1079 = vunpack.c.l.b16 %v1059
    %v1080 = vunpack.c.l.b16 %v1060
    %v1081 = vunpack.c.l.b16 %v1061
    %v1082 = vunpack.c.l.b16 %v1062
    %v1083 = vunpack.c.l.b16 %v1063
    %v1084 = vunpack.c.l.b16 %v1064
    %v1085 = vpack.c.b16 %v1078, %v1077
    %v1086 = vpack.c.b16 %v1080, %v1079
    %v1087 = vpack.c.b16 %v1082, %v1081
    %v1088 = vpack.c.b16 %v1084, %v1083
    %vm1093 = vcmask 523264
    %v1095 = vsel %vm1093, %v1056, 0
    %1097 = vmatprep.subr.bf16.mxu0 0
    %1098 = vmatpush1.bf16.msra.mxu0 %v1085
    %1099 = vmatprep.subr.bf16.mxu0 0
    %1100 = vmatpush1.bf16.msra.mxu0 %v1086
    %1101 = vmatprep.subr.bf16.mxu0 0
    %1102 = vmatpush1.bf16.msra.mxu0 %v1087
    %1103 = vmatprep.subr.bf16.mxu0 0
    %1104 = vmatpush1.bf16.msra.mxu0 %v1088
    %1105 = vmatprep.subr.bf16.mxu0 0
    %1106 = vmatpush1.bf16.msra.mxu0 0
    %1107 = vmatprep.subr.bf16.mxu0 0
    %1108 = vmatpush1.bf16.msra.mxu0 0
    %1109 = vmatprep.subr.bf16.mxu0 0
    %1110 = vmatpush1.bf16.msra.mxu0 0
    %1111 = vmatprep.subr.bf16.mxu0 0
    %1112 = vmatpush1.bf16.msra.mxu0 0
    %1113 = vmatprep.subr.bf16.mxu0 0
    %1114 = vmatpush1.bf16.msra.mxu0 0
    %1115 = vmatprep.subr.bf16.mxu0 0
    %1116 = vmatpush1.bf16.msra.mxu0 0
    %1117 = vmatprep.subr.bf16.mxu0 0
    %1118 = vmatpush1.bf16.msra.mxu0 0
    %1119 = vmatprep.subr.bf16.mxu0 0
    %1120 = vmatpush1.bf16.msra.mxu0 0
    %1121 = vmatprep.subr.bf16.mxu0 0
    %1122 = vmatpush1.bf16.msra.mxu0 0
    %1123 = vmatprep.subr.bf16.mxu0 0
    %1124 = vmatpush1.bf16.msra.mxu0 0
    %1125 = vmatprep.subr.bf16.mxu0 0
    %1126 = vmatpush1.bf16.msra.mxu0 0
    %1127 = vmatprep.subr.bf16.mxu0 0
    %1128 = vmatpush1.bf16.msra.mxu0 0
    %1129 = vmatprep.mubr.bf16.mxu0 0
    %1130 = vmatmul.mubr.bf16.gmra.mrb[0].mxu0 %v1095
    %v1131 = vpop.f32.mrb[0].mxu0
    %v1132 = vadd.f32 %v1068, %v1131
    %v1133 = vpop.f32.mrb[0].mxu0
    %v1134 = vpop.f32.mrb[0].mxu0
    %v1135 = vadd.f32 %v1068, %v1134
    %v1136 = vpop.f32.mrb[0].mxu0
    %1137 = vdwg.mxu0
    %v1138 = vadd.f32 %v965, %v1132
    %v1139 = vadd.f32 %v966, %v1135
    %v1140 = vsel %vm216, %v1138, 0.0
    %1141 = vadd.xlane.f32.xlu0 %v1140
    %v1142 = vpop.xlane.xlu0 %1141
    %v1143 = vsel %vm216, %v1139, 0.0
    %1144 = vadd.xlane.f32.xlu0 %v1143
    %v1145 = vpop.xlane.xlu0 %1144
    %v1146 = vmul.f32 %v1142, %v223
    %v1147 = vmul.f32 %v1145, %v223
    %v1148 = vsub.f32 %v1138, %v1146
    %v1149 = vsub.f32 %v1139, %v1147
    %v1150 = vmul.f32 %v1148, %v1148
    %v1151 = vmul.f32 %v1149, %v1149
    %v1152 = vsel %vm216, %v1150, 0.0
    %1153 = vadd.xlane.f32.xlu0 %v1152
    %v1154 = vpop.xlane.xlu0 %1153
    %v1155 = vsel %vm216, %v1151, 0.0
    %1156 = vadd.xlane.f32.xlu0 %v1155
    %v1157 = vpop.xlane.xlu0 %1156
    %v1158 = vmul.f32 %v1154, %v223
    %v1159 = vmul.f32 %v1157, %v223
    %v1160 = vadd.f32 %v1158, 1e-12
    %v1161 = vadd.f32 %v1159, 1e-12
    %v1162 = vrsqrt.pop %v1160
    %v1163 = vrsqrt.pop %v1161
    %v1164 = vmul.f32 %v1148, %v1162
    %v1165 = vmul.f32 %v1149, %v1163
    %v1166 = vlaneseq
    %v1167 = vshrl.u32 %v1166, 7
    %v1168 = vsub.s32 6, %v1167
    %v1169 = vrot.slane %v51, %v1168
    %v1170 = vmul.f32 %v1164, %v1169
    %v1171 = vmul.f32 %v1165, %v1169
    %v1172 = vlaneseq
    %v1173 = vshrl.u32 %v1172, 7
    %v1174 = vsub.s32 7, %v1173
    %v1175 = vrot.slane %v51, %v1174
    %v1176 = vadd.f32 %v1170, %v1175
    %v1177 = vadd.f32 %v1171, %v1175
    %v1178 = vpack.c.bf16 %v1177, %v1176
    %s1179 = scalar_lea.vmem %s4, 96
    %v1180 = vld [vmem:[%s1179] sm:$0xf]
    %v1181 = vld [vmem:[%s1179 + $0x4] sm:$0xf]
    %v1182 = vld [vmem:[%s1179 + $0x8] sm:$0xf]
    %v1183 = vld [vmem:[%s1179 + $0xc] sm:$0xf]
    %v1188 = vunpack.c.l.b16 %v1180
    %v1189 = vunpack.c.l.b16 %v1181
    %v1190 = vunpack.c.l.b16 %v1182
    %v1191 = vunpack.c.l.b16 %v1183
    %v1192 = vpack.c.b16 %v1189, %v1188
    %v1193 = vpack.c.b16 %v1191, %v1190
    %v1197 = vsel %vm216, %v1178, 0
    %1199 = vmatprep.subr.bf16.mxu0 0
    %1200 = vmatpush1.bf16.msra.mxu0 %v1192
    %1201 = vmatprep.subr.bf16.mxu0 0
    %1202 = vmatpush1.bf16.msra.mxu0 %v1193
    %1203 = vmatprep.subr.bf16.mxu0 0
    %1204 = vmatpush1.bf16.msra.mxu0 0
    %1205 = vmatprep.subr.bf16.mxu0 0
    %1206 = vmatpush1.bf16.msra.mxu0 0
    %1207 = vmatprep.subr.bf16.mxu0 0
    %1208 = vmatpush1.bf16.msra.mxu0 0
    %1209 = vmatprep.subr.bf16.mxu0 0
    %1210 = vmatpush1.bf16.msra.mxu0 0
    %1211 = vmatprep.subr.bf16.mxu0 0
    %1212 = vmatpush1.bf16.msra.mxu0 0
    %1213 = vmatprep.subr.bf16.mxu0 0
    %1214 = vmatpush1.bf16.msra.mxu0 0
    %1215 = vmatprep.subr.bf16.mxu0 0
    %1216 = vmatpush1.bf16.msra.mxu0 0
    %1217 = vmatprep.subr.bf16.mxu0 0
    %1218 = vmatpush1.bf16.msra.mxu0 0
    %1219 = vmatprep.subr.bf16.mxu0 0
    %1220 = vmatpush1.bf16.msra.mxu0 0
    %1221 = vmatprep.subr.bf16.mxu0 0
    %1222 = vmatpush1.bf16.msra.mxu0 0
    %1223 = vmatprep.subr.bf16.mxu0 0
    %1224 = vmatpush1.bf16.msra.mxu0 0
    %1225 = vmatprep.subr.bf16.mxu0 0
    %1226 = vmatpush1.bf16.msra.mxu0 0
    %1227 = vmatprep.subr.bf16.mxu0 0
    %1228 = vmatpush1.bf16.msra.mxu0 0
    %1229 = vmatprep.subr.bf16.mxu0 0
    %1230 = vmatpush1.bf16.msra.mxu0 0
    %1231 = vmatprep.mubr.bf16.mxu0 0
    %1232 = vmatmul.mubr.bf16.gmra.mrb[0].mxu0 %v1197
    %v1233 = vpop.f32.mrb[0].mxu0
    %v1234 = vadd.f32 0.0, %v1233
    %v1235 = vpop.f32.mrb[0].mxu0
    %v1236 = vpop.f32.mrb[0].mxu0
    %v1237 = vadd.f32 0.0, %v1236
    %v1238 = vpop.f32.mrb[0].mxu0
    %1239 = vdwg.mxu0
    %s1240 = scalar_lea.vmem %s4, 112
    %v1241 = vld [vmem:[%s1240] sm:$0xf]
    %v1242 = vld [vmem:[%s1240 + $0x4] sm:$0xf]
    %v1243 = vld [vmem:[%s1240 + $0x8] sm:$0xf]
    %v1244 = vld [vmem:[%s1240 + $0xc] sm:$0xf]
    %v1249 = vunpack.c.l.b16 %v1241
    %v1250 = vunpack.c.l.b16 %v1242
    %v1251 = vunpack.c.l.b16 %v1243
    %v1252 = vunpack.c.l.b16 %v1244
    %v1253 = vpack.c.b16 %v1250, %v1249
    %v1254 = vpack.c.b16 %v1252, %v1251
    %1257 = vmatprep.subr.bf16.mxu0 0
    %1258 = vmatpush1.bf16.msra.mxu0 %v1253
    %1259 = vmatprep.subr.bf16.mxu0 0
    %1260 = vmatpush1.bf16.msra.mxu0 %v1254
    %1261 = vmatprep.subr.bf16.mxu0 0
    %1262 = vmatpush1.bf16.msra.mxu0 0
    %1263 = vmatprep.subr.bf16.mxu0 0
    %1264 = vmatpush1.bf16.msra.mxu0 0
    %1265 = vmatprep.subr.bf16.mxu0 0
    %1266 = vmatpush1.bf16.msra.mxu0 0
    %1267 = vmatprep.subr.bf16.mxu0 0
    %1268 = vmatpush1.bf16.msra.mxu0 0
    %1269 = vmatprep.subr.bf16.mxu0 0
    %1270 = vmatpush1.bf16.msra.mxu0 0
    %1271 = vmatprep.subr.bf16.mxu0 0
    %1272 = vmatpush1.bf16.msra.mxu0 0
    %1273 = vmatprep.subr.bf16.mxu0 0
    %1274 = vmatpush1.bf16.msra.mxu0 0
    %1275 = vmatprep.subr.bf16.mxu0 0
    %1276 = vmatpush1.bf16.msra.mxu0 0
    %1277 = vmatprep.subr.bf16.mxu0 0
    %1278 = vmatpush1.bf16.msra.mxu0 0
    %1279 = vmatprep.subr.bf16.mxu0 0
    %1280 = vmatpush1.bf16.msra.mxu0 0
    %1281 = vmatprep.subr.bf16.mxu0 0
    %1282 = vmatpush1.bf16.msra.mxu0 0
    %1283 = vmatprep.subr.bf16.mxu0 0
    %1284 = vmatpush1.bf16.msra.mxu0 0
    %1285 = vmatprep.subr.bf16.mxu0 0
    %1286 = vmatpush1.bf16.msra.mxu0 0
    %1287 = vmatprep.subr.bf16.mxu0 0
    %1288 = vmatpush1.bf16.msra.mxu0 0
    %1289 = vmatprep.mubr.bf16.mxu0 0
    %1290 = vmatmul.mubr.bf16.gmra.mrb[0].mxu0 %v1197
    %v1291 = vpop.f32.mrb[0].mxu0
    %v1292 = vadd.f32 0.0, %v1291
    %v1293 = vpop.f32.mrb[0].mxu0
    %v1294 = vpop.f32.mrb[0].mxu0
    %v1295 = vadd.f32 0.0, %v1294
    %v1296 = vpop.f32.mrb[0].mxu0
    %1297 = vdwg.mxu0
    %s1298 = scalar_lea.vmem %s3, 96
    %v1299 = vld [vmem:[%s1298] sm:$0xff]
    %v1300 = vld [vmem:[%s1298 + $0x8] sm:$0xff]
    %v1301 = vld [vmem:[%s1298 + $0x10] sm:$0xff]
    %v1302 = vld [vmem:[%s1298 + $0x18] sm:$0xff]
    %v1303 = vadd.f32 %v1234, %v1299
    %v1304 = vadd.f32 %v1237, %v1300
    %v1305 = vadd.f32 %v1292, %v1301
    %v1306 = vadd.f32 %v1295, %v1302
    %s1307 = scalar_lea.vmem %s4, 128
    %v1308 = vld [vmem:[%s1307] sm:$0xf]
    %v1309 = vld [vmem:[%s1307 + $0x4] sm:$0xf]
    %v1310 = vld [vmem:[%s1307 + $0x8] sm:$0xf]
    %v1311 = vld [vmem:[%s1307 + $0xc] sm:$0xf]
    %v1316 = vunpack.c.l.b16 %v1308
    %v1317 = vunpack.c.l.b16 %v1309
    %v1318 = vunpack.c.l.b16 %v1310
    %v1319 = vunpack.c.l.b16 %v1311
    %v1320 = vpack.c.b16 %v1317, %v1316
    %v1321 = vpack.c.b16 %v1319, %v1318
    %1324 = vmatprep.subr.bf16.mxu0 0
    %1325 = vmatpush1.bf16.msra.mxu0 %v1320
    %1326 = vmatprep.subr.bf16.mxu0 0
    %1327 = vmatpush1.bf16.msra.mxu0 %v1321
    %1328 = vmatprep.subr.bf16.mxu0 0
    %1329 = vmatpush1.bf16.msra.mxu0 0
    %1330 = vmatprep.subr.bf16.mxu0 0
    %1331 = vmatpush1.bf16.msra.mxu0 0
    %1332 = vmatprep.subr.bf16.mxu0 0
    %1333 = vmatpush1.bf16.msra.mxu0 0
    %1334 = vmatprep.subr.bf16.mxu0 0
    %1335 = vmatpush1.bf16.msra.mxu0 0
    %1336 = vmatprep.subr.bf16.mxu0 0
    %1337 = vmatpush1.bf16.msra.mxu0 0
    %1338 = vmatprep.subr.bf16.mxu0 0
    %1339 = vmatpush1.bf16.msra.mxu0 0
    %1340 = vmatprep.subr.bf16.mxu0 0
    %1341 = vmatpush1.bf16.msra.mxu0 0
    %1342 = vmatprep.subr.bf16.mxu0 0
    %1343 = vmatpush1.bf16.msra.mxu0 0
    %1344 = vmatprep.subr.bf16.mxu0 0
    %1345 = vmatpush1.bf16.msra.mxu0 0
    %1346 = vmatprep.subr.bf16.mxu0 0
    %1347 = vmatpush1.bf16.msra.mxu0 0
    %1348 = vmatprep.subr.bf16.mxu0 0
    %1349 = vmatpush1.bf16.msra.mxu0 0
    %1350 = vmatprep.subr.bf16.mxu0 0
    %1351 = vmatpush1.bf16.msra.mxu0 0
    %1352 = vmatprep.subr.bf16.mxu0 0
    %1353 = vmatpush1.bf16.msra.mxu0 0
    %1354 = vmatprep.subr.bf16.mxu0 0
    %1355 = vmatpush1.bf16.msra.mxu0 0
    %1356 = vmatprep.mubr.bf16.mxu0 0
    %1357 = vmatmul.mubr.bf16.gmra.mrb[0].mxu0 %v1197
    %v1358 = vpop.f32.mrb[0].mxu0
    %v1359 = vadd.f32 0.0, %v1358
    %v1360 = vpop.f32.mrb[0].mxu0
    %v1361 = vpop.f32.mrb[0].mxu0
    %v1362 = vadd.f32 0.0, %v1361
    %v1363 = vpop.f32.mrb[0].mxu0
    %1364 = vdwg.mxu0
    %s1365 = scalar_lea.vmem %s4, 144
    %v1366 = vld [vmem:[%s1365] sm:$0xf]
    %v1367 = vld [vmem:[%s1365 + $0x4] sm:$0xf]
    %v1368 = vld [vmem:[%s1365 + $0x8] sm:$0xf]
    %v1369 = vld [vmem:[%s1365 + $0xc] sm:$0xf]
    %v1374 = vunpack.c.l.b16 %v1366
    %v1375 = vunpack.c.l.b16 %v1367
    %v1376 = vunpack.c.l.b16 %v1368
    %v1377 = vunpack.c.l.b16 %v1369
    %v1378 = vpack.c.b16 %v1375, %v1374
    %v1379 = vpack.c.b16 %v1377, %v1376
    %1382 = vmatprep.subr.bf16.mxu0 0
    %1383 = vmatpush1.bf16.msra.mxu0 %v1378
    %1384 = vmatprep.subr.bf16.mxu0 0
    %1385 = vmatpush1.bf16.msra.mxu0 %v1379
    %1386 = vmatprep.subr.bf16.mxu0 0
    %1387 = vmatpush1.bf16.msra.mxu0 0
    %1388 = vmatprep.subr.bf16.mxu0 0
    %1389 = vmatpush1.bf16.msra.mxu0 0
    %1390 = vmatprep.subr.bf16.mxu0 0
    %1391 = vmatpush1.bf16.msra.mxu0 0
    %1392 = vmatprep.subr.bf16.mxu0 0
    %1393 = vmatpush1.bf16.msra.mxu0 0
    %1394 = vmatprep.subr.bf16.mxu0 0
    %1395 = vmatpush1.bf16.msra.mxu0 0
    %1396 = vmatprep.subr.bf16.mxu0 0
    %1397 = vmatpush1.bf16.msra.mxu0 0
    %1398 = vmatprep.subr.bf16.mxu0 0
    %1399 = vmatpush1.bf16.msra.mxu0 0
    %1400 = vmatprep.subr.bf16.mxu0 0
    %1401 = vmatpush1.bf16.msra.mxu0 0
    %1402 = vmatprep.subr.bf16.mxu0 0
    %1403 = vmatpush1.bf16.msra.mxu0 0
    %1404 = vmatprep.subr.bf16.mxu0 0
    %1405 = vmatpush1.bf16.msra.mxu0 0
    %1406 = vmatprep.subr.bf16.mxu0 0
    %1407 = vmatpush1.bf16.msra.mxu0 0
    %1408 = vmatprep.subr.bf16.mxu0 0
    %1409 = vmatpush1.bf16.msra.mxu0 0
    %1410 = vmatprep.subr.bf16.mxu0 0
    %1411 = vmatpush1.bf16.msra.mxu0 0
    %1412 = vmatprep.subr.bf16.mxu0 0
    %1413 = vmatpush1.bf16.msra.mxu0 0
    %1414 = vmatprep.mubr.bf16.mxu0 0
    %1415 = vmatmul.mubr.bf16.gmra.mrb[0].mxu0 %v1197
    %v1416 = vpop.f32.mrb[0].mxu0
    %v1417 = vadd.f32 0.0, %v1416
    %v1418 = vpop.f32.mrb[0].mxu0
    %v1419 = vpop.f32.mrb[0].mxu0
    %v1420 = vadd.f32 0.0, %v1419
    %v1421 = vpop.f32.mrb[0].mxu0
    %1422 = vdwg.mxu0
    %s1423 = scalar_lea.vmem %s3, 128
    %v1424 = vld [vmem:[%s1423] sm:$0xff]
    %v1425 = vld [vmem:[%s1423 + $0x8] sm:$0xff]
    %v1426 = vld [vmem:[%s1423 + $0x10] sm:$0xff]
    %v1427 = vld [vmem:[%s1423 + $0x18] sm:$0xff]
    %v1428 = vadd.f32 %v1359, %v1424
    %v1429 = vadd.f32 %v1362, %v1425
    %v1430 = vadd.f32 %v1417, %v1426
    %v1431 = vadd.f32 %v1420, %v1427
    %s1432 = scalar_lea.vmem %s4, 160
    %v1433 = vld [vmem:[%s1432] sm:$0xf]
    %v1434 = vld [vmem:[%s1432 + $0x4] sm:$0xf]
    %v1435 = vld [vmem:[%s1432 + $0x8] sm:$0xf]
    %v1436 = vld [vmem:[%s1432 + $0xc] sm:$0xf]
    %v1441 = vunpack.c.l.b16 %v1433
    %v1442 = vunpack.c.l.b16 %v1434
    %v1443 = vunpack.c.l.b16 %v1435
    %v1444 = vunpack.c.l.b16 %v1436
    %v1445 = vpack.c.b16 %v1442, %v1441
    %v1446 = vpack.c.b16 %v1444, %v1443
    %1449 = vmatprep.subr.bf16.mxu0 0
    %1450 = vmatpush1.bf16.msra.mxu0 %v1445
    %1451 = vmatprep.subr.bf16.mxu0 0
    %1452 = vmatpush1.bf16.msra.mxu0 %v1446
    %1453 = vmatprep.subr.bf16.mxu0 0
    %1454 = vmatpush1.bf16.msra.mxu0 0
    %1455 = vmatprep.subr.bf16.mxu0 0
    %1456 = vmatpush1.bf16.msra.mxu0 0
    %1457 = vmatprep.subr.bf16.mxu0 0
    %1458 = vmatpush1.bf16.msra.mxu0 0
    %1459 = vmatprep.subr.bf16.mxu0 0
    %1460 = vmatpush1.bf16.msra.mxu0 0
    %1461 = vmatprep.subr.bf16.mxu0 0
    %1462 = vmatpush1.bf16.msra.mxu0 0
    %1463 = vmatprep.subr.bf16.mxu0 0
    %1464 = vmatpush1.bf16.msra.mxu0 0
    %1465 = vmatprep.subr.bf16.mxu0 0
    %1466 = vmatpush1.bf16.msra.mxu0 0
    %1467 = vmatprep.subr.bf16.mxu0 0
    %1468 = vmatpush1.bf16.msra.mxu0 0
    %1469 = vmatprep.subr.bf16.mxu0 0
    %1470 = vmatpush1.bf16.msra.mxu0 0
    %1471 = vmatprep.subr.bf16.mxu0 0
    %1472 = vmatpush1.bf16.msra.mxu0 0
    %1473 = vmatprep.subr.bf16.mxu0 0
    %1474 = vmatpush1.bf16.msra.mxu0 0
    %1475 = vmatprep.subr.bf16.mxu0 0
    %1476 = vmatpush1.bf16.msra.mxu0 0
    %1477 = vmatprep.subr.bf16.mxu0 0
    %1478 = vmatpush1.bf16.msra.mxu0 0
    %1479 = vmatprep.subr.bf16.mxu0 0
    %1480 = vmatpush1.bf16.msra.mxu0 0
    %1481 = vmatprep.mubr.bf16.mxu0 0
    %1482 = vmatmul.mubr.bf16.gmra.mrb[0].mxu0 %v1197
    %v1483 = vpop.f32.mrb[0].mxu0
    %v1484 = vadd.f32 0.0, %v1483
    %v1485 = vpop.f32.mrb[0].mxu0
    %v1486 = vpop.f32.mrb[0].mxu0
    %v1487 = vadd.f32 0.0, %v1486
    %v1488 = vpop.f32.mrb[0].mxu0
    %1489 = vdwg.mxu0
    %s1490 = scalar_lea.vmem %s4, 176
    %v1491 = vld [vmem:[%s1490] sm:$0xf]
    %v1492 = vld [vmem:[%s1490 + $0x4] sm:$0xf]
    %v1493 = vld [vmem:[%s1490 + $0x8] sm:$0xf]
    %v1494 = vld [vmem:[%s1490 + $0xc] sm:$0xf]
    %v1499 = vunpack.c.l.b16 %v1491
    %v1500 = vunpack.c.l.b16 %v1492
    %v1501 = vunpack.c.l.b16 %v1493
    %v1502 = vunpack.c.l.b16 %v1494
    %v1503 = vpack.c.b16 %v1500, %v1499
    %v1504 = vpack.c.b16 %v1502, %v1501
    %1507 = vmatprep.subr.bf16.mxu0 0
    %1508 = vmatpush1.bf16.msra.mxu0 %v1503
    %1509 = vmatprep.subr.bf16.mxu0 0
    %1510 = vmatpush1.bf16.msra.mxu0 %v1504
    %1511 = vmatprep.subr.bf16.mxu0 0
    %1512 = vmatpush1.bf16.msra.mxu0 0
    %1513 = vmatprep.subr.bf16.mxu0 0
    %1514 = vmatpush1.bf16.msra.mxu0 0
    %1515 = vmatprep.subr.bf16.mxu0 0
    %1516 = vmatpush1.bf16.msra.mxu0 0
    %1517 = vmatprep.subr.bf16.mxu0 0
    %1518 = vmatpush1.bf16.msra.mxu0 0
    %1519 = vmatprep.subr.bf16.mxu0 0
    %1520 = vmatpush1.bf16.msra.mxu0 0
    %1521 = vmatprep.subr.bf16.mxu0 0
    %1522 = vmatpush1.bf16.msra.mxu0 0
    %1523 = vmatprep.subr.bf16.mxu0 0
    %1524 = vmatpush1.bf16.msra.mxu0 0
    %1525 = vmatprep.subr.bf16.mxu0 0
    %1526 = vmatpush1.bf16.msra.mxu0 0
    %1527 = vmatprep.subr.bf16.mxu0 0
    %1528 = vmatpush1.bf16.msra.mxu0 0
    %1529 = vmatprep.subr.bf16.mxu0 0
    %1530 = vmatpush1.bf16.msra.mxu0 0
    %1531 = vmatprep.subr.bf16.mxu0 0
    %1532 = vmatpush1.bf16.msra.mxu0 0
    %1533 = vmatprep.subr.bf16.mxu0 0
    %1534 = vmatpush1.bf16.msra.mxu0 0
    %1535 = vmatprep.subr.bf16.mxu0 0
    %1536 = vmatpush1.bf16.msra.mxu0 0
    %1537 = vmatprep.subr.bf16.mxu0 0
    %1538 = vmatpush1.bf16.msra.mxu0 0
    %1539 = vmatprep.mubr.bf16.mxu0 0
    %1540 = vmatmul.mubr.bf16.gmra.mrb[0].mxu0 %v1197
    %v1541 = vpop.f32.mrb[0].mxu0
    %v1542 = vadd.f32 0.0, %v1541
    %v1543 = vpop.f32.mrb[0].mxu0
    %v1544 = vpop.f32.mrb[0].mxu0
    %v1545 = vadd.f32 0.0, %v1544
    %v1546 = vpop.f32.mrb[0].mxu0
    %1547 = vdwg.mxu0
    %s1548 = scalar_lea.vmem %s3, 160
    %v1549 = vld [vmem:[%s1548] sm:$0xff]
    %v1550 = vld [vmem:[%s1548 + $0x8] sm:$0xff]
    %v1551 = vld [vmem:[%s1548 + $0x10] sm:$0xff]
    %v1552 = vld [vmem:[%s1548 + $0x18] sm:$0xff]
    %v1553 = vadd.f32 %v1484, %v1549
    %v1554 = vadd.f32 %v1487, %v1550
    %v1555 = vadd.f32 %v1542, %v1551
    %v1556 = vadd.f32 %v1545, %v1552
    %v1557 = vpack.c.bf16 %v1304, %v1303
    %v1558 = vpack.c.bf16 %v1306, %v1305
    %v1559 = vpack.c.bf16 %v1429, %v1428
    %v1560 = vpack.c.bf16 %v1431, %v1430
    %v1562 = vsel %vm641, %v1557, 0
    %v1565 = vsel %vm641, %v1558, 0
    %v1568 = vsel %vm641, %v1559, 0
    %v1571 = vsel %vm641, %v1560, 0
    %1573 = vmatprep.subr.bf16.mxu0 0
    %1574 = vmatpush1.bf16.xpose.msra.mxu0 %v1568
    %1575 = vmatprep.subr.bf16.mxu0 0
    %1576 = vmatpush1.bf16.xpose.msra.mxu0 %v1571
    %1577 = vmatprep.subr.bf16.mxu0 0
    %1578 = vmatpush1.bf16.xpose.msra.mxu0 0
    %1579 = vmatprep.subr.bf16.mxu0 0
    %1580 = vmatpush1.bf16.xpose.msra.mxu0 0
    %1581 = vmatprep.subr.bf16.mxu0 0
    %1582 = vmatpush1.bf16.xpose.msra.mxu0 0
    %1583 = vmatprep.subr.bf16.mxu0 0
    %1584 = vmatpush1.bf16.xpose.msra.mxu0 0
    %1585 = vmatprep.subr.bf16.mxu0 0
    %1586 = vmatpush1.bf16.xpose.msra.mxu0 0
    %1587 = vmatprep.subr.bf16.mxu0 0
    %1588 = vmatpush1.bf16.xpose.msra.mxu0 0
    %1589 = vmatprep.subr.bf16.mxu0 0
    %1590 = vmatpush1.bf16.xpose.msra.mxu0 0
    %1591 = vmatprep.subr.bf16.mxu0 0
    %1592 = vmatpush1.bf16.xpose.msra.mxu0 0
    %1593 = vmatprep.subr.bf16.mxu0 0
    %1594 = vmatpush1.bf16.xpose.msra.mxu0 0
    %1595 = vmatprep.subr.bf16.mxu0 0
    %1596 = vmatpush1.bf16.xpose.msra.mxu0 0
    %1597 = vmatprep.subr.bf16.mxu0 0
    %1598 = vmatpush1.bf16.xpose.msra.mxu0 0
    %1599 = vmatprep.subr.bf16.mxu0 0
    %1600 = vmatpush1.bf16.xpose.msra.mxu0 0
    %1601 = vmatprep.subr.bf16.mxu0 0
    %1602 = vmatpush1.bf16.xpose.msra.mxu0 0
    %1603 = vmatprep.subr.bf16.mxu0 0
    %1604 = vmatpush1.bf16.xpose.msra.mxu0 0
    %1605 = vmatprep.mubr.bf16.mxu0 0
    %1606 = vmatmul.mubr.bf16.gmra.mrb[0].mxu0 %v1562
    %v1607 = vpop.f32.mrb[0].mxu0
    %v1608 = vadd.f32 0.0, %v1607
    %v1609 = vpop.f32.mrb[0].mxu0
    %v1610 = vpop.f32.mrb[0].mxu0
    %v1611 = vadd.f32 0.0, %v1610
    %v1612 = vpop.f32.mrb[0].mxu0
    %1613 = vmatprep.mubr.bf16.mxu0 0
    %1614 = vmatmul.mubr.bf16.gmra.mrb[0].mxu0 %v1565
    %v1615 = vpop.f32.mrb[0].mxu0
    %v1616 = vadd.f32 0.0, %v1615
    %v1617 = vpop.f32.mrb[0].mxu0
    %v1618 = vpop.f32.mrb[0].mxu0
    %v1619 = vadd.f32 0.0, %v1618
    %v1620 = vpop.f32.mrb[0].mxu0
    %1621 = vdwg.mxu0
    %v1622 = vmul.f32 %v1608, 0.25
    %v1623 = vmul.f32 %v1611, 0.25
    %v1624 = vmul.f32 %v1616, 0.25
    %v1625 = vmul.f32 %v1619, 0.25
    %v1626 = vadd.f32 %v1622, %v256
    %v1627 = vadd.f32 %v1623, %v257
    %v1628 = vadd.f32 %v1624, %v258
    %v1629 = vadd.f32 %v1625, %v259
    %v1630 = vsel %vm216, %v1626, -inf
    %1631 = vmax.xlane.f32.xlu0 %v1630
    %v1632 = vpop.xlane.xlu0 %1631
    %v1633 = vsel %vm216, %v1627, -inf
    %1634 = vmax.xlane.f32.xlu0 %v1633
    %v1635 = vpop.xlane.xlu0 %1634
    %v1636 = vsel %vm216, %v1628, -inf
    %1637 = vmax.xlane.f32.xlu0 %v1636
    %v1638 = vpop.xlane.xlu0 %1637
    %v1639 = vsel %vm216, %v1629, -inf
    %1640 = vmax.xlane.f32.xlu0 %v1639
    %v1641 = vpop.xlane.xlu0 %1640
    %v1642 = vsub.f32 %v1626, %v1632
    %v1643 = vsub.f32 %v1627, %v1635
    %v1644 = vsub.f32 %v1628, %v1638
    %v1645 = vsub.f32 %v1629, %v1641
    %v1646 = vmul.f32 %v1642, 1.442695
    %v1647 = vpow.pop %v1646
    %v1648 = vmul.f32 %v1643, 1.442695
    %v1649 = vpow.pop %v1648
    %v1650 = vmul.f32 %v1644, 1.442695
    %v1651 = vpow.pop %v1650
    %v1652 = vmul.f32 %v1645, 1.442695
    %v1653 = vpow.pop %v1652
    %v1654 = vsel %vm216, %v1647, 0.0
    %1655 = vadd.xlane.f32.xlu0 %v1654
    %v1656 = vpop.xlane.xlu0 %1655
    %v1657 = vsel %vm216, %v1649, 0.0
    %1658 = vadd.xlane.f32.xlu0 %v1657
    %v1659 = vpop.xlane.xlu0 %1658
    %v1660 = vsel %vm216, %v1651, 0.0
    %1661 = vadd.xlane.f32.xlu0 %v1660
    %v1662 = vpop.xlane.xlu0 %1661
    %v1663 = vsel %vm216, %v1653, 0.0
    %1664 = vadd.xlane.f32.xlu0 %v1663
    %v1665 = vpop.xlane.xlu0 %1664
    %v1666 = vrcp.pop %v1656
    %v1667 = vmul.f32 %v1647, %v1666
    %v1668 = vrcp.pop %v1659
    %v1669 = vmul.f32 %v1649, %v1668
    %v1670 = vrcp.pop %v1662
    %v1671 = vmul.f32 %v1651, %v1670
    %v1672 = vrcp.pop %v1665
    %v1673 = vmul.f32 %v1653, %v1672
    %v1674 = vpack.c.bf16 %v1669, %v1667
    %v1675 = vpack.c.bf16 %v1673, %v1671
    %v1676 = vpack.c.bf16 %v1554, %v1553
    %v1677 = vpack.c.bf16 %v1556, %v1555
    %v1679 = vsel %vm216, %v1674, 0
    %v1682 = vsel %vm216, %v1675, 0
    %1684 = vmatprep.subr.bf16.mxu0 0
    %1685 = vmatpush1.bf16.msra.mxu0 %v1676
    %1686 = vmatprep.subr.bf16.mxu0 0
    %1687 = vmatpush1.bf16.msra.mxu0 %v1677
    %1688 = vmatprep.subr.bf16.mxu0 0
    %1689 = vmatpush1.bf16.msra.mxu0 0
    %1690 = vmatprep.subr.bf16.mxu0 0
    %1691 = vmatpush1.bf16.msra.mxu0 0
    %1692 = vmatprep.subr.bf16.mxu0 0
    %1693 = vmatpush1.bf16.msra.mxu0 0
    %1694 = vmatprep.subr.bf16.mxu0 0
    %1695 = vmatpush1.bf16.msra.mxu0 0
    %1696 = vmatprep.subr.bf16.mxu0 0
    %1697 = vmatpush1.bf16.msra.mxu0 0
    %1698 = vmatprep.subr.bf16.mxu0 0
    %1699 = vmatpush1.bf16.msra.mxu0 0
    %1700 = vmatprep.subr.bf16.mxu0 0
    %1701 = vmatpush1.bf16.msra.mxu0 0
    %1702 = vmatprep.subr.bf16.mxu0 0
    %1703 = vmatpush1.bf16.msra.mxu0 0
    %1704 = vmatprep.subr.bf16.mxu0 0
    %1705 = vmatpush1.bf16.msra.mxu0 0
    %1706 = vmatprep.subr.bf16.mxu0 0
    %1707 = vmatpush1.bf16.msra.mxu0 0
    %1708 = vmatprep.subr.bf16.mxu0 0
    %1709 = vmatpush1.bf16.msra.mxu0 0
    %1710 = vmatprep.subr.bf16.mxu0 0
    %1711 = vmatpush1.bf16.msra.mxu0 0
    %1712 = vmatprep.subr.bf16.mxu0 0
    %1713 = vmatpush1.bf16.msra.mxu0 0
    %1714 = vmatprep.subr.bf16.mxu0 0
    %1715 = vmatpush1.bf16.msra.mxu0 0
    %1716 = vmatprep.mubr.bf16.mxu0 0
    %1717 = vmatmul.mubr.bf16.gmra.mrb[0].mxu0 %v1679
    %v1718 = vpop.f32.mrb[0].mxu0
    %v1719 = vadd.f32 0.0, %v1718
    %v1720 = vpop.f32.mrb[0].mxu0
    %v1721 = vpop.f32.mrb[0].mxu0
    %v1722 = vadd.f32 0.0, %v1721
    %v1723 = vpop.f32.mrb[0].mxu0
    %1724 = vmatprep.mubr.bf16.mxu0 0
    %1725 = vmatmul.mubr.bf16.gmra.mrb[0].mxu0 %v1682
    %v1726 = vpop.f32.mrb[0].mxu0
    %v1727 = vadd.f32 0.0, %v1726
    %v1728 = vpop.f32.mrb[0].mxu0
    %v1729 = vpop.f32.mrb[0].mxu0
    %v1730 = vadd.f32 0.0, %v1729
    %v1731 = vpop.f32.mrb[0].mxu0
    %1732 = vdwg.mxu0
    %v1733 = vpack.c.bf16 %v1722, %v1719
    %s1734 = scalar_lea.vmem %s5, 16
    %v1735 = vld [vmem:[%s1734] sm:$0xf]
    %v1736 = vld [vmem:[%s1734 + $0x4] sm:$0xf]
    %v1737 = vpack.c.bf16 %v1730, %v1727
    %s1738 = scalar_lea.vmem %s5, 24
    %v1739 = vld [vmem:[%s1738] sm:$0xf]
    %v1740 = vld [vmem:[%s1738 + $0x4] sm:$0xf]
    %v1743 = vunpack.c.l.b16 %v1739
    %v1744 = vunpack.c.l.b16 %v1740
    %v1745 = vpack.c.b16 %v1744, %v1743
    %v1748 = vsel %vm641, %v1737, 0
    %1750 = vmatprep.subr.bf16.mxu0 0
    %1751 = vmatpush1.bf16.msra.mxu0 %v1745
    %1752 = vmatprep.subr.bf16.mxu0 0
    %1753 = vmatpush1.bf16.msra.mxu0 0
    %1754 = vmatprep.subr.bf16.mxu0 0
    %1755 = vmatpush1.bf16.msra.mxu0 0
    %1756 = vmatprep.subr.bf16.mxu0 0
    %1757 = vmatpush1.bf16.msra.mxu0 0
    %1758 = vmatprep.subr.bf16.mxu0 0
    %1759 = vmatpush1.bf16.msra.mxu0 0
    %1760 = vmatprep.subr.bf16.mxu0 0
    %1761 = vmatpush1.bf16.msra.mxu0 0
    %1762 = vmatprep.subr.bf16.mxu0 0
    %1763 = vmatpush1.bf16.msra.mxu0 0
    %1764 = vmatprep.subr.bf16.mxu0 0
    %1765 = vmatpush1.bf16.msra.mxu0 0
    %1766 = vmatprep.subr.bf16.mxu0 0
    %1767 = vmatpush1.bf16.msra.mxu0 0
    %1768 = vmatprep.subr.bf16.mxu0 0
    %1769 = vmatpush1.bf16.msra.mxu0 0
    %1770 = vmatprep.subr.bf16.mxu0 0
    %1771 = vmatpush1.bf16.msra.mxu0 0
    %1772 = vmatprep.subr.bf16.mxu0 0
    %1773 = vmatpush1.bf16.msra.mxu0 0
    %1774 = vmatprep.subr.bf16.mxu0 0
    %1775 = vmatpush1.bf16.msra.mxu0 0
    %1776 = vmatprep.subr.bf16.mxu0 0
    %1777 = vmatpush1.bf16.msra.mxu0 0
    %1778 = vmatprep.subr.bf16.mxu0 0
    %1779 = vmatpush1.bf16.msra.mxu0 0
    %1780 = vmatprep.subr.bf16.mxu0 0
    %1781 = vmatpush1.bf16.msra.mxu0 0
    %1782 = vmatprep.mubr.bf16.mxu0 0
    %1783 = vmatmul.mubr.bf16.gmra.mrb[0].mxu0 %v1748
    %v1784 = vpop.f32.mrb[0].mxu0
    %v1785 = vadd.f32 0.0, %v1784
    %v1786 = vpop.f32.mrb[0].mxu0
    %v1787 = vpop.f32.mrb[0].mxu0
    %v1788 = vadd.f32 0.0, %v1787
    %v1789 = vpop.f32.mrb[0].mxu0
    %1790 = vdwg.mxu0
    %v1793 = vunpack.c.l.b16 %v1735
    %v1794 = vunpack.c.l.b16 %v1736
    %v1795 = vpack.c.b16 %v1794, %v1793
    %v1798 = vsel %vm641, %v1733, 0
    %1800 = vmatprep.subr.bf16.mxu0 0
    %1801 = vmatpush1.bf16.msra.mxu0 %v1795
    %1802 = vmatprep.subr.bf16.mxu0 0
    %1803 = vmatpush1.bf16.msra.mxu0 0
    %1804 = vmatprep.subr.bf16.mxu0 0
    %1805 = vmatpush1.bf16.msra.mxu0 0
    %1806 = vmatprep.subr.bf16.mxu0 0
    %1807 = vmatpush1.bf16.msra.mxu0 0
    %1808 = vmatprep.subr.bf16.mxu0 0
    %1809 = vmatpush1.bf16.msra.mxu0 0
    %1810 = vmatprep.subr.bf16.mxu0 0
    %1811 = vmatpush1.bf16.msra.mxu0 0
    %1812 = vmatprep.subr.bf16.mxu0 0
    %1813 = vmatpush1.bf16.msra.mxu0 0
    %1814 = vmatprep.subr.bf16.mxu0 0
    %1815 = vmatpush1.bf16.msra.mxu0 0
    %1816 = vmatprep.subr.bf16.mxu0 0
    %1817 = vmatpush1.bf16.msra.mxu0 0
    %1818 = vmatprep.subr.bf16.mxu0 0
    %1819 = vmatpush1.bf16.msra.mxu0 0
    %1820 = vmatprep.subr.bf16.mxu0 0
    %1821 = vmatpush1.bf16.msra.mxu0 0
    %1822 = vmatprep.subr.bf16.mxu0 0
    %1823 = vmatpush1.bf16.msra.mxu0 0
    %1824 = vmatprep.subr.bf16.mxu0 0
    %1825 = vmatpush1.bf16.msra.mxu0 0
    %1826 = vmatprep.subr.bf16.mxu0 0
    %1827 = vmatpush1.bf16.msra.mxu0 0
    %1828 = vmatprep.subr.bf16.mxu0 0
    %1829 = vmatpush1.bf16.msra.mxu0 0
    %1830 = vmatprep.subr.bf16.mxu0 0
    %1831 = vmatpush1.bf16.msra.mxu0 0
    %1832 = vmatprep.mubr.bf16.mxu0 0
    %1833 = vmatmul.mubr.bf16.gmra.mrb[0].mxu0 %v1798
    %v1834 = vpop.f32.mrb[0].mxu0
    %v1835 = vadd.f32 %v1785, %v1834
    %v1836 = vpop.f32.mrb[0].mxu0
    %v1837 = vpop.f32.mrb[0].mxu0
    %v1838 = vadd.f32 %v1788, %v1837
    %v1839 = vpop.f32.mrb[0].mxu0
    %1840 = vdwg.mxu0
    %v1841 = vlaneseq
    %v1842 = vshrl.u32 %v1841, 7
    %v1843 = vsub.s32 0, %v1842
    %v1844 = vrot.slane %v52, %v1843
    %v1845 = vadd.f32 %v1835, %v1844
    %v1846 = vadd.f32 %v1838, %v1844
    %v1847 = vadd.f32 %v1176, %v1845
    %v1848 = vadd.f32 %v1177, %v1846
    %v1849 = vsel %vm216, %v1847, 0.0
    %1850 = vadd.xlane.f32.xlu0 %v1849
    %v1851 = vpop.xlane.xlu0 %1850
    %v1852 = vsel %vm216, %v1848, 0.0
    %1853 = vadd.xlane.f32.xlu0 %v1852
    %v1854 = vpop.xlane.xlu0 %1853
    %v1855 = vmul.f32 %v1851, %v223
    %v1856 = vmul.f32 %v1854, %v223
    %v1857 = vsub.f32 %v1847, %v1855
    %v1858 = vsub.f32 %v1848, %v1856
    %v1859 = vmul.f32 %v1857, %v1857
    %v1860 = vmul.f32 %v1858, %v1858
    %v1861 = vsel %vm216, %v1859, 0.0
    %1862 = vadd.xlane.f32.xlu0 %v1861
    %v1863 = vpop.xlane.xlu0 %1862
    %v1864 = vsel %vm216, %v1860, 0.0
    %1865 = vadd.xlane.f32.xlu0 %v1864
    %v1866 = vpop.xlane.xlu0 %1865
    %v1867 = vmul.f32 %v1863, %v223
    %v1868 = vmul.f32 %v1866, %v223
    %v1869 = vadd.f32 %v1867, 1e-12
    %v1870 = vadd.f32 %v1868, 1e-12
    %v1871 = vrsqrt.pop %v1869
    %v1872 = vrsqrt.pop %v1870
    %v1873 = vmul.f32 %v1857, %v1871
    %v1874 = vmul.f32 %v1858, %v1872
    %v1875 = vlaneseq
    %v1876 = vshrl.u32 %v1875, 7
    %v1877 = vsub.s32 1, %v1876
    %v1878 = vrot.slane %v52, %v1877
    %v1879 = vmul.f32 %v1873, %v1878
    %v1880 = vmul.f32 %v1874, %v1878
    %v1881 = vlaneseq
    %v1882 = vshrl.u32 %v1881, 7
    %v1883 = vsub.s32 2, %v1882
    %v1884 = vrot.slane %v52, %v1883
    %v1885 = vadd.f32 %v1879, %v1884
    %v1886 = vadd.f32 %v1880, %v1884
    %v1888 = vrot.slane %v52, 1
    %1889 = vrot.lane.b32.xlu0 %v1888, 32
    %v1890 = vpop.permute.xlu0 %1889
    %v1892 = vsel %vm216, %v52, %v1890
    %v1893 = vpack.c.bf16 %v1886, %v1885
    %s1894 = scalar_lea.vmem %s6, 16
    %v1895 = vld [vmem:[%s1894] sm:$0xf]
    %v1896 = vld [vmem:[%s1894 + $0x4] sm:$0xf]
    %v1897 = vld [vmem:[%s1894 + $0x8] sm:$0xf]
    %v1898 = vld [vmem:[%s1894 + $0xc] sm:$0xf]
    %v1899 = vlaneseq
    %v1900 = vshrl.u32 %v1899, 7
    %v1901 = vsub.s32 3, %v1900
    %v1902 = vrot.slane %v1892, %v1901
    %v1907 = vunpack.c.l.b16 %v1895
    %v1908 = vunpack.c.l.b16 %v1896
    %v1909 = vunpack.c.l.b16 %v1897
    %v1910 = vunpack.c.l.b16 %v1898
    %v1911 = vpack.c.b16 %v1908, %v1907
    %v1912 = vpack.c.b16 %v1910, %v1909
    %v1916 = vsel %vm216, %v1893, 0
    %1918 = vmatprep.subr.bf16.mxu0 0
    %1919 = vmatpush1.bf16.msra.mxu0 %v1911
    %1920 = vmatprep.subr.bf16.mxu0 0
    %1921 = vmatpush1.bf16.msra.mxu0 %v1912
    %1922 = vmatprep.subr.bf16.mxu0 0
    %1923 = vmatpush1.bf16.msra.mxu0 0
    %1924 = vmatprep.subr.bf16.mxu0 0
    %1925 = vmatpush1.bf16.msra.mxu0 0
    %1926 = vmatprep.subr.bf16.mxu0 0
    %1927 = vmatpush1.bf16.msra.mxu0 0
    %1928 = vmatprep.subr.bf16.mxu0 0
    %1929 = vmatpush1.bf16.msra.mxu0 0
    %1930 = vmatprep.subr.bf16.mxu0 0
    %1931 = vmatpush1.bf16.msra.mxu0 0
    %1932 = vmatprep.subr.bf16.mxu0 0
    %1933 = vmatpush1.bf16.msra.mxu0 0
    %1934 = vmatprep.subr.bf16.mxu0 0
    %1935 = vmatpush1.bf16.msra.mxu0 0
    %1936 = vmatprep.subr.bf16.mxu0 0
    %1937 = vmatpush1.bf16.msra.mxu0 0
    %1938 = vmatprep.subr.bf16.mxu0 0
    %1939 = vmatpush1.bf16.msra.mxu0 0
    %1940 = vmatprep.subr.bf16.mxu0 0
    %1941 = vmatpush1.bf16.msra.mxu0 0
    %1942 = vmatprep.subr.bf16.mxu0 0
    %1943 = vmatpush1.bf16.msra.mxu0 0
    %1944 = vmatprep.subr.bf16.mxu0 0
    %1945 = vmatpush1.bf16.msra.mxu0 0
    %1946 = vmatprep.subr.bf16.mxu0 0
    %1947 = vmatpush1.bf16.msra.mxu0 0
    %1948 = vmatprep.subr.bf16.mxu0 0
    %1949 = vmatpush1.bf16.msra.mxu0 0
    %1950 = vmatprep.mubr.bf16.mxu0 0
    %1951 = vmatmul.mubr.bf16.gmra.mrb[0].mxu0 %v1916
    %v1952 = vpop.f32.mrb[0].mxu0
    %v1953 = vadd.f32 %v1902, %v1952
    %v1954 = vpop.f32.mrb[0].mxu0
    %v1955 = vpop.f32.mrb[0].mxu0
    %v1956 = vadd.f32 %v1902, %v1955
    %v1957 = vpop.f32.mrb[0].mxu0
    %1958 = vdwg.mxu0
    %v1959 = vmul.f32 %v1953, 0.5
    %v1960 = vmul.f32 %v1956, 0.5
    %v1961 = vmul.f32 %v1953, 0.044715
    %v1962 = vmul.f32 %v1956, 0.044715
    %v1963 = vmul.f32 %v1961, %v1953
    %v1964 = vmul.f32 %v1962, %v1956
    %v1965 = vmul.f32 %v1963, %v1953
    %v1966 = vmul.f32 %v1964, %v1956
    %v1967 = vadd.f32 %v1953, %v1965
    %v1968 = vadd.f32 %v1956, %v1966
    %v1969 = vmul.f32 %v1967, 0.7978846
    %v1970 = vmul.f32 %v1968, 0.7978846
    %v1971 = vtanh.pop %v1969
    %v1972 = vtanh.pop %v1970
    %v1973 = vadd.f32 %v1971, 1.0
    %v1974 = vadd.f32 %v1972, 1.0
    %v1975 = vmul.f32 %v1959, %v1973
    %v1976 = vmul.f32 %v1960, %v1974
    %v1977 = vpack.c.bf16 %v1976, %v1975
    %s1978 = scalar_lea.vmem %s7, 32
    %v1979 = vld [vmem:[%s1978] sm:$0xf]
    %v1980 = vld [vmem:[%s1978 + $0x4] sm:$0xf]
    %v1981 = vld [vmem:[%s1978 + $0x8] sm:$0xf]
    %v1982 = vld [vmem:[%s1978 + $0xc] sm:$0xf]
    %v1983 = vld [vmem:[%s1978 + $0x10] sm:$0xf]
    %v1984 = vld [vmem:[%s1978 + $0x14] sm:$0xf]
    %v1985 = vld [vmem:[%s1978 + $0x18] sm:$0xf]
    %v1986 = vld [vmem:[%s1978 + $0x1c] sm:$0xf]
    %v1987 = vlaneseq
    %v1988 = vshrl.u32 %v1987, 7
    %v1989 = vsub.s32 5, %v1988
    %v1990 = vrot.slane %v52, %v1989
    %v1999 = vunpack.c.l.b16 %v1979
    %v2000 = vunpack.c.l.b16 %v1980
    %v2001 = vunpack.c.l.b16 %v1981
    %v2002 = vunpack.c.l.b16 %v1982
    %v2003 = vunpack.c.l.b16 %v1983
    %v2004 = vunpack.c.l.b16 %v1984
    %v2005 = vunpack.c.l.b16 %v1985
    %v2006 = vunpack.c.l.b16 %v1986
    %v2007 = vpack.c.b16 %v2000, %v1999
    %v2008 = vpack.c.b16 %v2002, %v2001
    %v2009 = vpack.c.b16 %v2004, %v2003
    %v2010 = vpack.c.b16 %v2006, %v2005
    %v2016 = vsel %vm1093, %v1977, 0
    %2018 = vmatprep.subr.bf16.mxu0 0
    %2019 = vmatpush1.bf16.msra.mxu0 %v2007
    %2020 = vmatprep.subr.bf16.mxu0 0
    %2021 = vmatpush1.bf16.msra.mxu0 %v2008
    %2022 = vmatprep.subr.bf16.mxu0 0
    %2023 = vmatpush1.bf16.msra.mxu0 %v2009
    %2024 = vmatprep.subr.bf16.mxu0 0
    %2025 = vmatpush1.bf16.msra.mxu0 %v2010
    %2026 = vmatprep.subr.bf16.mxu0 0
    %2027 = vmatpush1.bf16.msra.mxu0 0
    %2028 = vmatprep.subr.bf16.mxu0 0
    %2029 = vmatpush1.bf16.msra.mxu0 0
    %2030 = vmatprep.subr.bf16.mxu0 0
    %2031 = vmatpush1.bf16.msra.mxu0 0
    %2032 = vmatprep.subr.bf16.mxu0 0
    %2033 = vmatpush1.bf16.msra.mxu0 0
    %2034 = vmatprep.subr.bf16.mxu0 0
    %2035 = vmatpush1.bf16.msra.mxu0 0
    %2036 = vmatprep.subr.bf16.mxu0 0
    %2037 = vmatpush1.bf16.msra.mxu0 0
    %2038 = vmatprep.subr.bf16.mxu0 0
    %2039 = vmatpush1.bf16.msra.mxu0 0
    %2040 = vmatprep.subr.bf16.mxu0 0
    %2041 = vmatpush1.bf16.msra.mxu0 0
    %2042 = vmatprep.subr.bf16.mxu0 0
    %2043 = vmatpush1.bf16.msra.mxu0 0
    %2044 = vmatprep.subr.bf16.mxu0 0
    %2045 = vmatpush1.bf16.msra.mxu0 0
    %2046 = vmatprep.subr.bf16.mxu0 0
    %2047 = vmatpush1.bf16.msra.mxu0 0
    %2048 = vmatprep.subr.bf16.mxu0 0
    %2049 = vmatpush1.bf16.msra.mxu0 0
    %2050 = vmatprep.mubr.bf16.mxu0 0
    %2051 = vmatmul.mubr.bf16.gmra.mrb[0].mxu0 %v2016
    %v2052 = vpop.f32.mrb[0].mxu0
    %v2053 = vadd.f32 %v1990, %v2052
    %v2054 = vpop.f32.mrb[0].mxu0
    %v2055 = vpop.f32.mrb[0].mxu0
    %v2056 = vadd.f32 %v1990, %v2055
    %v2057 = vpop.f32.mrb[0].mxu0
    %2058 = vdwg.mxu0
    %v2059 = vadd.f32 %v1885, %v2053
    %v2060 = vadd.f32 %v1886, %v2056
    %v2061 = vsel %vm216, %v2059, 0.0
    %2062 = vadd.xlane.f32.xlu0 %v2061
    %v2063 = vpop.xlane.xlu0 %2062
    %v2064 = vsel %vm216, %v2060, 0.0
    %2065 = vadd.xlane.f32.xlu0 %v2064
    %v2066 = vpop.xlane.xlu0 %2065
    %v2067 = vmul.f32 %v2063, %v223
    %v2068 = vmul.f32 %v2066, %v223
    %v2069 = vsub.f32 %v2059, %v2067
    %v2070 = vsub.f32 %v2060, %v2068
    %v2071 = vmul.f32 %v2069, %v2069
    %v2072 = vmul.f32 %v2070, %v2070
    %v2073 = vsel %vm216, %v2071, 0.0
    %2074 = vadd.xlane.f32.xlu0 %v2073
    %v2075 = vpop.xlane.xlu0 %2074
    %v2076 = vsel %vm216, %v2072, 0.0
    %2077 = vadd.xlane.f32.xlu0 %v2076
    %v2078 = vpop.xlane.xlu0 %2077
    %v2079 = vmul.f32 %v2075, %v223
    %v2080 = vmul.f32 %v2078, %v223
    %v2081 = vadd.f32 %v2079, 1e-12
    %v2082 = vadd.f32 %v2080, 1e-12
    %v2083 = vrsqrt.pop %v2081
    %v2084 = vrsqrt.pop %v2082
    %v2085 = vmul.f32 %v2069, %v2083
    %v2086 = vmul.f32 %v2070, %v2084
    %v2087 = vlaneseq
    %v2088 = vshrl.u32 %v2087, 7
    %v2089 = vsub.s32 6, %v2088
    %v2090 = vrot.slane %v52, %v2089
    %v2091 = vmul.f32 %v2085, %v2090
    %v2092 = vmul.f32 %v2086, %v2090
    %v2093 = vlaneseq
    %v2094 = vshrl.u32 %v2093, 7
    %v2095 = vsub.s32 7, %v2094
    %v2096 = vrot.slane %v52, %v2095
    %v2097 = vadd.f32 %v2091, %v2096
    %v2098 = vadd.f32 %v2092, %v2096
    %v2099 = vmul.u32 %v60, 8
    %vm2100 = vcmp.eq.s32.totalorder %v57, %v2099
    %v2101 = vsel %vm2100, 1, 0
    %v2102 = vcvt.s32.f32 %v2101
    %v2104 = vsel %vm641, %v2102, 0
    %2106 = vmatprep.subr.mxu0 0.0
    %2107 = vmatpush1.msra.mxu0 %v2097
    %2108 = vmatprep.subr.mxu0 0.0
    %2109 = vmatpush1.msra.mxu0 %v2098
    %2110 = vmatprep.subr.mxu0 0.0
    %2111 = vmatpush1.msra.mxu0 0.0
    %2112 = vmatprep.subr.mxu0 0.0
    %2113 = vmatpush1.msra.mxu0 0.0
    %2114 = vmatprep.subr.mxu0 0.0
    %2115 = vmatpush1.msra.mxu0 0.0
    %2116 = vmatprep.subr.mxu0 0.0
    %2117 = vmatpush1.msra.mxu0 0.0
    %2118 = vmatprep.subr.mxu0 0.0
    %2119 = vmatpush1.msra.mxu0 0.0
    %2120 = vmatprep.subr.mxu0 0.0
    %2121 = vmatpush1.msra.mxu0 0.0
    %2122 = vmatprep.subr.mxu0 0.0
    %2123 = vmatpush1.msra.mxu0 0.0
    %2124 = vmatprep.subr.mxu0 0.0
    %2125 = vmatpush1.msra.mxu0 0.0
    %2126 = vmatprep.subr.mxu0 0.0
    %2127 = vmatpush1.msra.mxu0 0.0
    %2128 = vmatprep.subr.mxu0 0.0
    %2129 = vmatpush1.msra.mxu0 0.0
    %2130 = vmatprep.subr.mxu0 0.0
    %2131 = vmatpush1.msra.mxu0 0.0
    %2132 = vmatprep.subr.mxu0 0.0
    %2133 = vmatpush1.msra.mxu0 0.0
    %2134 = vmatprep.subr.mxu0 0.0
    %2135 = vmatpush1.msra.mxu0 0.0
    %2136 = vmatprep.subr.mxu0 0.0
    %2137 = vmatpush1.msra.mxu0 0.0
    %2138 = vmatprep.subr.mxu0 0.0
    %2139 = vmatpush1.msra.mxu0 0.0
    %2140 = vmatprep.subr.mxu0 0.0
    %2141 = vmatpush1.msra.mxu0 0.0
    %2142 = vmatprep.subr.mxu0 0.0
    %2143 = vmatpush1.msra.mxu0 0.0
    %2144 = vmatprep.subr.mxu0 0.0
    %2145 = vmatpush1.msra.mxu0 0.0
    %2146 = vmatprep.subr.mxu0 0.0
    %2147 = vmatpush1.msra.mxu0 0.0
    %2148 = vmatprep.subr.mxu0 0.0
    %2149 = vmatpush1.msra.mxu0 0.0
    %2150 = vmatprep.subr.mxu0 0.0
    %2151 = vmatpush1.msra.mxu0 0.0
    %2152 = vmatprep.subr.mxu0 0.0
    %2153 = vmatpush1.msra.mxu0 0.0
    %2154 = vmatprep.subr.mxu0 0.0
    %2155 = vmatpush1.msra.mxu0 0.0
    %2156 = vmatprep.subr.mxu0 0.0
    %2157 = vmatpush1.msra.mxu0 0.0
    %2158 = vmatprep.subr.mxu0 0.0
    %2159 = vmatpush1.msra.mxu0 0.0
    %2160 = vmatprep.subr.mxu0 0.0
    %2161 = vmatpush1.msra.mxu0 0.0
    %2162 = vmatprep.subr.mxu0 0.0
    %2163 = vmatpush1.msra.mxu0 0.0
    %2164 = vmatprep.subr.mxu0 0.0
    %2165 = vmatpush1.msra.mxu0 0.0
    %2166 = vmatprep.subr.mxu0 0.0
    %2167 = vmatpush1.msra.mxu0 0.0
    %2168 = vmatprep.subr.mxu0 0.0
    %2169 = vmatpush1.msra.mxu0 0.0
    %2170 = vmatprep.mubr.f32.mxu0 0.0
    %2171 = vmatmul.mubr.f32.gmra.mrb[0].mxu0 %v2104
    %v2172 = vpop.f32.mrb[0].mxu0
    %v2173 = vadd.f32 0.0, %v2172
    %v2174 = vpop.f32.mrb[0].mxu0
    %2175 = vdwg.mxu0
    %v2176 = vld [vmem:[%s8] sm:$0xf]
    %v2177 = vld [vmem:[%s8 + $0x4] sm:$0xf]
    %v2178 = vld [vmem:[%s8 + $0x8] sm:$0xf]
    %v2179 = vld [vmem:[%s8 + $0xc] sm:$0xf]
    %v2180 = vld [vmem:[%s8 + $0x10] sm:$0xf]
    %v2181 = vld [vmem:[%s8 + $0x14] sm:$0xf]
    %v2182 = vld [vmem:[%s8 + $0x18] sm:$0xf]
    %v2183 = vld [vmem:[%s8 + $0x1c] sm:$0xf]
    %v2184 = vpack.c.bf16 %v2173, %v2173
    %v2185 = vlaneseq
    %v2186 = vshrl.u32 %v2185, 7
    %v2187 = vsub.s32 0, %v2186
    %v2188 = vrot.slane %v53, %v2187
    %v2193 = vunpack.c.l.b16 %v2176
    %v2194 = vunpack.c.l.b16 %v2177
    %v2195 = vunpack.c.l.b16 %v2178
    %v2196 = vunpack.c.l.b16 %v2179
    %v2197 = vpack.c.b16 %v2194, %v2193
    %v2198 = vpack.c.b16 %v2196, %v2195
    %v2202 = vsel %vm216, %v2184, 0
    %2204 = vmatprep.subr.bf16.mxu0 0
    %2205 = vmatpush1.bf16.msra.mxu0 %v2197
    %2206 = vmatprep.subr.bf16.mxu0 0
    %2207 = vmatpush1.bf16.msra.mxu0 %v2198
    %2208 = vmatprep.subr.bf16.mxu0 0
    %2209 = vmatpush1.bf16.msra.mxu0 0
    %2210 = vmatprep.subr.bf16.mxu0 0
    %2211 = vmatpush1.bf16.msra.mxu0 0
    %2212 = vmatprep.subr.bf16.mxu0 0
    %2213 = vmatpush1.bf16.msra.mxu0 0
    %2214 = vmatprep.subr.bf16.mxu0 0
    %2215 = vmatpush1.bf16.msra.mxu0 0
    %2216 = vmatprep.subr.bf16.mxu0 0
    %2217 = vmatpush1.bf16.msra.mxu0 0
    %2218 = vmatprep.subr.bf16.mxu0 0
    %2219 = vmatpush1.bf16.msra.mxu0 0
    %2220 = vmatprep.subr.bf16.mxu0 0
    %2221 = vmatpush1.bf16.msra.mxu0 0
    %2222 = vmatprep.subr.bf16.mxu0 0
    %2223 = vmatpush1.bf16.msra.mxu0 0
    %2224 = vmatprep.subr.bf16.mxu0 0
    %2225 = vmatpush1.bf16.msra.mxu0 0
    %2226 = vmatprep.subr.bf16.mxu0 0
    %2227 = vmatpush1.bf16.msra.mxu0 0
    %2228 = vmatprep.subr.bf16.mxu0 0
    %2229 = vmatpush1.bf16.msra.mxu0 0
    %2230 = vmatprep.subr.bf16.mxu0 0
    %2231 = vmatpush1.bf16.msra.mxu0 0
    %2232 = vmatprep.subr.bf16.mxu0 0
    %2233 = vmatpush1.bf16.msra.mxu0 0
    %2234 = vmatprep.subr.bf16.mxu0 0
    %2235 = vmatpush1.bf16.msra.mxu0 0
    %2236 = vmatprep.mubr.bf16.mxu0 0
    %2237 = vmatmul.mubr.bf16.gmra.mrb[0].mxu0 %v2202
    %v2238 = vpop.f32.mrb[0].mxu0
    %v2239 = vadd.f32 %v2188, %v2238
    %v2240 = vpop.f32.mrb[0].mxu0
    %v2241 = vpop.f32.mrb[0].mxu0
    %v2242 = vpop.f32.mrb[0].mxu0
    %2243 = vdwg.mxu0
    %v2244 = vtanh.pop %v2239
    %v2245 = vpack.c.bf16 %v2244, %v2244
    %v2246 = vlaneseq
    %v2247 = vshrl.u32 %v2246, 7
    %v2248 = vsub.s32 1, %v2247
    %v2249 = vrot.slane %v53, %v2248
    %v2254 = vunpack.c.l.b16 %v2180
    %v2255 = vunpack.c.l.b16 %v2181
    %v2256 = vunpack.c.l.b16 %v2182
    %v2257 = vunpack.c.l.b16 %v2183
    %v2258 = vpack.c.b16 %v2255, %v2254
    %v2259 = vpack.c.b16 %v2257, %v2256
    %v2263 = vsel %vm216, %v2245, 0
    %2265 = vmatprep.subr.bf16.mxu0 0
    %2266 = vmatpush1.bf16.msra.mxu0 %v2258
    %2267 = vmatprep.subr.bf16.mxu0 0
    %2268 = vmatpush1.bf16.msra.mxu0 %v2259
    %2269 = vmatprep.subr.bf16.mxu0 0
    %2270 = vmatpush1.bf16.msra.mxu0 0
    %2271 = vmatprep.subr.bf16.mxu0 0
    %2272 = vmatpush1.bf16.msra.mxu0 0
    %2273 = vmatprep.subr.bf16.mxu0 0
    %2274 = vmatpush1.bf16.msra.mxu0 0
    %2275 = vmatprep.subr.bf16.mxu0 0
    %2276 = vmatpush1.bf16.msra.mxu0 0
    %2277 = vmatprep.subr.bf16.mxu0 0
    %2278 = vmatpush1.bf16.msra.mxu0 0
    %2279 = vmatprep.subr.bf16.mxu0 0
    %2280 = vmatpush1.bf16.msra.mxu0 0
    %2281 = vmatprep.subr.bf16.mxu0 0
    %2282 = vmatpush1.bf16.msra.mxu0 0
    %2283 = vmatprep.subr.bf16.mxu0 0
    %2284 = vmatpush1.bf16.msra.mxu0 0
    %2285 = vmatprep.subr.bf16.mxu0 0
    %2286 = vmatpush1.bf16.msra.mxu0 0
    %2287 = vmatprep.subr.bf16.mxu0 0
    %2288 = vmatpush1.bf16.msra.mxu0 0
    %2289 = vmatprep.subr.bf16.mxu0 0
    %2290 = vmatpush1.bf16.msra.mxu0 0
    %2291 = vmatprep.subr.bf16.mxu0 0
    %2292 = vmatpush1.bf16.msra.mxu0 0
    %2293 = vmatprep.subr.bf16.mxu0 0
    %2294 = vmatpush1.bf16.msra.mxu0 0
    %2295 = vmatprep.subr.bf16.mxu0 0
    %2296 = vmatpush1.bf16.msra.mxu0 0
    %2297 = vmatprep.mubr.bf16.mxu0 0
    %2298 = vmatmul.mubr.bf16.gmra.mrb[0].mxu0 %v2263
    %v2299 = vpop.f32.mrb[0].mxu0
    %v2300 = vadd.f32 %v2249, %v2299
    %v2301 = vpop.f32.mrb[0].mxu0
    %v2302 = vpop.f32.mrb[0].mxu0
    %v2303 = vpop.f32.mrb[0].mxu0
    %2304 = vdwg.mxu0
    %vm2305 = vcmask 9216
    %2306 = vst.msk [vmem:[#allocation2] sm:$0x3] %vm2305, %v2300
    %v2307 = vmul.f32 %v2173, %v2173
    %vm2308 = vcmask 254976
    %v2309 = vsel %vm2308, %v2307, 0.0
    %2310 = vadd.xlane.f32.xlu0 %v2309
    %v2311 = vpop.xlane.xlu0 %2310
    %v2312 = vadd.f32 %v2311, 1e-16
    %v2313 = vrsqrt.pop %v2312
    %v2314 = vmul.f32 %v2173, %v2313
    %v2316 = vsel %vm216, %v2314, 0
    %2318 = vmatprep.subr.mxu0 0.0
    %2319 = vmatpush1.xpose.msra.mxu0 %v2316
    %2320 = vmatprep.subr.mxu0 0.0
    %2321 = vmatpush1.xpose.msra.mxu0 0.0
    %2322 = vmatprep.subr.mxu0 0.0
    %2323 = vmatpush1.xpose.msra.mxu0 0.0
    %2324 = vmatprep.subr.mxu0 0.0
    %2325 = vmatpush1.xpose.msra.mxu0 0.0
    %2326 = vmatprep.subr.mxu0 0.0
    %2327 = vmatpush1.xpose.msra.mxu0 0.0
    %2328 = vmatprep.subr.mxu0 0.0
    %2329 = vmatpush1.xpose.msra.mxu0 0.0
    %2330 = vmatprep.subr.mxu0 0.0
    %2331 = vmatpush1.xpose.msra.mxu0 0.0
    %2332 = vmatprep.subr.mxu0 0.0
    %2333 = vmatpush1.xpose.msra.mxu0 0.0
    %2334 = vmatprep.subr.mxu0 0.0
    %2335 = vmatpush1.xpose.msra.mxu0 0.0
    %2336 = vmatprep.subr.mxu0 0.0
    %2337 = vmatpush1.xpose.msra.mxu0 0.0
    %2338 = vmatprep.subr.mxu0 0.0
    %2339 = vmatpush1.xpose.msra.mxu0 0.0
    %2340 = vmatprep.subr.mxu0 0.0
    %2341 = vmatpush1.xpose.msra.mxu0 0.0
    %2342 = vmatprep.subr.mxu0 0.0
    %2343 = vmatpush1.xpose.msra.mxu0 0.0
    %2344 = vmatprep.subr.mxu0 0.0
    %2345 = vmatpush1.xpose.msra.mxu0 0.0
    %2346 = vmatprep.subr.mxu0 0.0
    %2347 = vmatpush1.xpose.msra.mxu0 0.0
    %2348 = vmatprep.subr.mxu0 0.0
    %2349 = vmatpush1.xpose.msra.mxu0 0.0
    %2350 = vmatprep.subr.mxu0 0.0
    %2351 = vmatpush1.xpose.msra.mxu0 0.0
    %2352 = vmatprep.subr.mxu0 0.0
    %2353 = vmatpush1.xpose.msra.mxu0 0.0
    %2354 = vmatprep.subr.mxu0 0.0
    %2355 = vmatpush1.xpose.msra.mxu0 0.0
    %2356 = vmatprep.subr.mxu0 0.0
    %2357 = vmatpush1.xpose.msra.mxu0 0.0
    %2358 = vmatprep.subr.mxu0 0.0
    %2359 = vmatpush1.xpose.msra.mxu0 0.0
    %2360 = vmatprep.subr.mxu0 0.0
    %2361 = vmatpush1.xpose.msra.mxu0 0.0
    %2362 = vmatprep.subr.mxu0 0.0
    %2363 = vmatpush1.xpose.msra.mxu0 0.0
    %2364 = vmatprep.subr.mxu0 0.0
    %2365 = vmatpush1.xpose.msra.mxu0 0.0
    %2366 = vmatprep.subr.mxu0 0.0
    %2367 = vmatpush1.xpose.msra.mxu0 0.0
    %2368 = vmatprep.subr.mxu0 0.0
    %2369 = vmatpush1.xpose.msra.mxu0 0.0
    %2370 = vmatprep.subr.mxu0 0.0
    %2371 = vmatpush1.xpose.msra.mxu0 0.0
    %2372 = vmatprep.subr.mxu0 0.0
    %2373 = vmatpush1.xpose.msra.mxu0 0.0
    %2374 = vmatprep.subr.mxu0 0.0
    %2375 = vmatpush1.xpose.msra.mxu0 0.0
    %2376 = vmatprep.subr.mxu0 0.0
    %2377 = vmatpush1.xpose.msra.mxu0 0.0
    %2378 = vmatprep.subr.mxu0 0.0
    %2379 = vmatpush1.xpose.msra.mxu0 0.0
    %2380 = vmatprep.subr.mxu0 0.0
    %2381 = vmatpush1.xpose.msra.mxu0 0.0
    %2382 = vmatprep.mubr.f32.mxu0 0.0
    %2383 = vmatmul.mubr.f32.gmra.mrb[0].mxu0 %v2316
    %v2384 = vpop.f32.mrb[0].mxu0
    %v2385 = vadd.f32 0.0, %v2384
    %v2386 = vpop.f32.mrb[0].mxu0
    %2387 = vdwg.mxu0
    %vm2388 = vcmp.eq.s32.totalorder %v60, %v57
    %v2389 = vsub.f32 %v2385, 1e+12
    %v2390 = vsel %vm2388, %v2389, %v2385
    %v2391 = vrcp.pop 0.05
    %v2392 = vmul.f32 %v2390, %v2391
    %v2393 = vadd.s32 %v60, 1
    %vm2394 = vcmp.lt.s32.totalorder %v60, 0
    %v2395 = vsub.s32 0, %v60
    %v2396 = vsel %vm2394, %v2395, %v60
    %v2397 = vshrl.u32 %v2396, 1
    %v2398 = vand.u32 %v2396, 1
    %v2399 = vsub.s32 0, %v2398
    %v2400 = vsel %vm2394, %v2399, %v2398
    %vm2401 = vcmp.ne.s32.totalorder %v2400, 0
    %vm2402 = vcmp.lt.s32.totalorder %v2400, 0
    %vm2403 = vmand %vm2402, %vm2401
    %v2404 = vadd.s32 %v2400, 2
    %v2405 = vsel %vm2403, %v2404, %v2400
    %v2406 = vmul.u32 %v2405, 2
    %v2407 = vsub.s32 %v2393, %v2406
    %vm2408 = vcmp.eq.s32.totalorder %v57, %v2407
    %v2409 = vsel %vm2408, 1, 0
    %v2410 = vcvt.s32.f32 %v2409
    %v2411 = vsel %vm2305, %v2392, -inf
    %2412 = vmax.xlane.f32.xlu0 %v2411
    %v2413 = vpop.xlane.xlu0 %2412
    %v2414 = vsub.f32 %v2392, %v2413
    %v2415 = vmul.f32 %v2414, 1.442695
    %v2416 = vpow.pop %v2415
    %v2417 = vsel %vm2305, %v2416, 0.0
    %2418 = vadd.xlane.f32.xlu0 %v2417
    %v2419 = vpop.xlane.xlu0 %2418
    %v2420 = vlog2.pop %v2419
    %v2421 = vmul.f32 %v2420, 0.6931472
    %v2422 = vadd.f32 %v2421, %v2413
    %v2423 = vsub.f32 %v2392, %v2422
    %v2424 = vmul.f32 %v2410, %v2423
    %v2425 = vsel %vm2305, %v2424, 0.0
    %2426 = vadd.xlane.f32.xlu0 %v2425
    %v2427 = vpop.xlane.xlu0 %2426
    %v2428 = vsub.f32 0.0, %v2427
    %2429 = vset.pattern.permute.xlu0 2
    %2430 = vperm.xlu0 %2429, %v54
    %v2431 = vpop.permute.xlu0 %2430
    %2432 = vset.pattern.permute.xlu0 2
    %2433 = vperm.xlu0 %2432, %v55
    %v2434 = vpop.permute.xlu0 %2433
    %vm2435 = vcmp.eq.s32.totalorder %v57, %v2431
    %vm2436 = vcmp.eq.s32.totalorder %v57, %v2434
    %v2437 = vsel %vm2435, 1, 0
    %v2438 = vsel %vm2436, 1, 0
    %v2439 = vcvt.s32.f32 %v2437
    %v2440 = vcvt.s32.f32 %v2438
    %2441 = vmatprep.subr.mxu0 0.0
    %2442 = vmatpush1.msra.mxu0 %v2439
    %2443 = vmatprep.subr.mxu0 0.0
    %2444 = vmatpush1.msra.mxu0 %v2440
    %2445 = vmatprep.subr.mxu0 0.0
    %2446 = vmatpush1.msra.mxu0 0.0
    %2447 = vmatprep.subr.mxu0 0.0
    %2448 = vmatpush1.msra.mxu0 0.0
    %2449 = vmatprep.subr.mxu0 0.0
    %2450 = vmatpush1.msra.mxu0 0.0
    %2451 = vmatprep.subr.mxu0 0.0
    %2452 = vmatpush1.msra.mxu0 0.0
    %2453 = vmatprep.subr.mxu0 0.0
    %2454 = vmatpush1.msra.mxu0 0.0
    %2455 = vmatprep.subr.mxu0 0.0
    %2456 = vmatpush1.msra.mxu0 0.0
    %2457 = vmatprep.subr.mxu0 0.0
    %2458 = vmatpush1.msra.mxu0 0.0
    %2459 = vmatprep.subr.mxu0 0.0
    %2460 = vmatpush1.msra.mxu0 0.0
    %2461 = vmatprep.subr.mxu0 0.0
    %2462 = vmatpush1.msra.mxu0 0.0
    %2463 = vmatprep.subr.mxu0 0.0
    %2464 = vmatpush1.msra.mxu0 0.0
    %2465 = vmatprep.subr.mxu0 0.0
    %2466 = vmatpush1.msra.mxu0 0.0
    %2467 = vmatprep.subr.mxu0 0.0
    %2468 = vmatpush1.msra.mxu0 0.0
    %2469 = vmatprep.subr.mxu0 0.0
    %2470 = vmatpush1.msra.mxu0 0.0
    %2471 = vmatprep.subr.mxu0 0.0
    %2472 = vmatpush1.msra.mxu0 0.0
    %2473 = vmatprep.subr.mxu0 0.0
    %2474 = vmatpush1.msra.mxu0 0.0
    %2475 = vmatprep.subr.mxu0 0.0
    %2476 = vmatpush1.msra.mxu0 0.0
    %2477 = vmatprep.subr.mxu0 0.0
    %2478 = vmatpush1.msra.mxu0 0.0
    %2479 = vmatprep.subr.mxu0 0.0
    %2480 = vmatpush1.msra.mxu0 0.0
    %2481 = vmatprep.subr.mxu0 0.0
    %2482 = vmatpush1.msra.mxu0 0.0
    %2483 = vmatprep.subr.mxu0 0.0
    %2484 = vmatpush1.msra.mxu0 0.0
    %2485 = vmatprep.subr.mxu0 0.0
    %2486 = vmatpush1.msra.mxu0 0.0
    %2487 = vmatprep.subr.mxu0 0.0
    %2488 = vmatpush1.msra.mxu0 0.0
    %2489 = vmatprep.subr.mxu0 0.0
    %2490 = vmatpush1.msra.mxu0 0.0
    %2491 = vmatprep.subr.mxu0 0.0
    %2492 = vmatpush1.msra.mxu0 0.0
    %2493 = vmatprep.subr.mxu0 0.0
    %2494 = vmatpush1.msra.mxu0 0.0
    %2495 = vmatprep.subr.mxu0 0.0
    %2496 = vmatpush1.msra.mxu0 0.0
    %2497 = vmatprep.subr.mxu0 0.0
    %2498 = vmatpush1.msra.mxu0 0.0
    %2499 = vmatprep.subr.mxu0 0.0
    %2500 = vmatpush1.msra.mxu0 0.0
    %2501 = vmatprep.subr.mxu0 0.0
    %2502 = vmatpush1.msra.mxu0 0.0
    %2503 = vmatprep.subr.mxu0 0.0
    %2504 = vmatpush1.msra.mxu0 0.0
    %2505 = vmatprep.mubr.f32.mxu0 0.0
    %2506 = vmatmul.mubr.f32.gmra.mrb[0].mxu0 %v2104
    %v2507 = vpop.f32.mrb[0].mxu0
    %v2508 = vadd.f32 0.0, %v2507
    %v2509 = vpop.f32.mrb[0].mxu0
    %2510 = vdwg.mxu0
    %v2511 = vsel %vm2305, %v2300, -inf
    %2512 = vmax.xlane.f32.xlu0 %v2511
    %v2513 = vpop.xlane.xlu0 %2512
    %v2514 = vsub.f32 %v2300, %v2513
    %v2515 = vmul.f32 %v2514, 1.442695
    %v2516 = vpow.pop %v2515
    %v2517 = vsel %vm2305, %v2516, 0.0
    %2518 = vadd.xlane.f32.xlu0 %v2517
    %v2519 = vpop.xlane.xlu0 %2518
    %v2520 = vlog2.pop %v2519
    %v2521 = vmul.f32 %v2520, 0.6931472
    %v2522 = vadd.f32 %v2521, %v2513
    %v2523 = vsub.f32 %v2300, %v2522
    %v2524 = vmul.f32 %v2508, %v2523
    %v2525 = vsel %vm2305, %v2524, 0.0
    %2526 = vadd.xlane.f32.xlu0 %v2525
    %v2527 = vpop.xlane.xlu0 %2526
    %v2528 = vsub.f32 0.0, %v2527
    %v2529 = vsel %vm137, %v2528, 0.0
    %v2530 = vrot.slane %v2529, 4
    %v2531 = vadd.f32 %v2529, %v2530
    %v2532 = vrot.slane %v2531, 2
    %v2533 = vadd.f32 %v2531, %v2532
    %v2534 = vrot.slane %v2533, 1
    %v2535 = vadd.f32 %v2533, %v2534
    %v2536 = vsel %vm137, %v2428, 0.0
    %v2537 = vrot.slane %v2536, 4
    %v2538 = vadd.f32 %v2536, %v2537
    %v2539 = vrot.slane %v2538, 2
    %v2540 = vadd.f32 %v2538, %v2539
    %v2541 = vrot.slane %v2540, 1
    %v2542 = vadd.f32 %v2540, %v2541
    %v2543 = vmul.f32 %v2542, 0.5
    %v2544 = vadd.f32 %v2535, %v2543
    %v2545 = vmul.f32 %v2544, 0.5
    %vm2546 = vcmask 0
    %2547 = vst.msk [vmem:[#allocation4] sm:$0x1] %vm2546, %v2545
    // Predicated region
    $region38: #{tpu_custom_call.1} parent=1 // pred_check
      _
    $region39: #{tpu_custom_call.1} parent=1 // pred_check_branch
      %2549 = sbr.rel (0) target = $region41
    $region40: #{tpu_custom_call.1} parent=1 // pred_region
      %s2551 = ssub.s32 32, 32
      %2552 = vsyncadd [#allocation3], %s2551
      %s2554 = sshll.u32 [#allocation2], 4
      %s2555 = int_to_ptr.vmem [resolvable:$true] %s2554
      %2557 = dma.vmem_to_hbm [thread:$0]  %s2555, 32, %s9, [#allocation3]
    $region41: #{tpu_custom_call.1} parent=1 // pred_fallthru
      _
    // Predicated region
    $region42: #{tpu_custom_call.1} parent=1 // pred_check
      _
    $region43: #{tpu_custom_call.1} parent=1 // pred_check_branch
      %2559 = sbr.rel (0) target = $region45
    $region44: #{tpu_custom_call.1} parent=1 // pred_region
      %s2561 = ssub.s32 16, 16
      %2562 = vsyncadd [#allocation5], %s2561
      %s2564 = sshll.u32 [#allocation4], 4
      %s2565 = int_to_ptr.vmem [resolvable:$true] %s2564
      %2567 = dma.vmem_to_hbm [thread:$0]  %s2565, 16, %s10, [#allocation5]
    $region45: #{tpu_custom_call.1} parent=1 // pred_fallthru
      _
    // Predicated region
    $region46: #{tpu_custom_call.1} parent=1 // pred_check
      _
    $region47: #{tpu_custom_call.1} parent=1 // pred_check_branch
      %2569 = sbr.rel (0) target = $region49
    $region48: #{tpu_custom_call.1} parent=1 // pred_region
      %2570 = dma.done [#allocation3], 32
    $region49: #{tpu_custom_call.1} parent=1 // pred_fallthru
      _
    // Predicated region
    $region50: #{tpu_custom_call.1} parent=1 // pred_check
      _
    $region51: #{tpu_custom_call.1} parent=1 // pred_check_branch
      %2572 = sbr.rel (0) target = $region53
    $region52: #{tpu_custom_call.1} parent=1 // pred_region
      %2573 = dma.done [#allocation5], 16
    $region53: #{tpu_custom_call.1} parent=1 // pred_fallthru
      _
    %2574 = vsyncpa [#allocation3], 1
    %2575 = vsyncpa [#allocation5], 1

</llo_original>
